<compile_context>
chip_gen: v7x
topology: tpu7x:2x2x1
jax: 0.10.0
libtpu: 0.0.40
codegen_flags: <defaults>
</compile_context>

<pallas_src>
import functools

import jax
import jax.numpy as jnp
from jax.experimental import pallas as pl
from jax.experimental.pallas import tpu as pltpu


# ---------------------------------------------------------------------------
# Pallas kernel: two chained LSTMs + linear projection + log-softmax
# ---------------------------------------------------------------------------
def _run_lstm(pre_ref, whh_ref, h, c, T, B, GP):
    """T LSTM steps.

    pre_ref: VMEM scratch (T*B, 4*GP) = x@W_ih + b (precomputed, lane-padded
             gate blocks in i,f,g,o order) -- one (B, 4*GP) slice loaded/step.
    whh_ref: (GP, 4*GP) bf16 hidden->gates weight Ref (indexed per step).
    h, c:    (B, GP) f32 carried as loop values (vregs)."""
    for t in range(T):
        # Static, sublane-aligned slice load from VMEM (off-vreg storage).
        g_pre = pre_ref[t * B:(t + 1) * B, :]
        gates = g_pre + jnp.dot(h.astype(jnp.bfloat16), whh_ref[...],
                                preferred_element_type=jnp.float32)
        # Whole-vreg (128-lane-aligned) gate slices; activations in f32.
        i_g = jax.nn.sigmoid(gates[:, 0 * GP:1 * GP])
        f_g = jax.nn.sigmoid(gates[:, 1 * GP:2 * GP])
        g_g = jnp.tanh(gates[:, 2 * GP:3 * GP])
        o_g = jax.nn.sigmoid(gates[:, 3 * GP:4 * GP])
        c = f_g * c + i_g * g_g
        h = o_g * jnp.tanh(c)
    return h, c


def conditional_lstm_kernel(
    ctx_ref,      # (Tc*B, E)   bf16 context embeddings (time-major, flat)
    rsp_ref,      # (Tr*B, E)   bf16 response embeddings (time-major, flat)
    wih_c_ref,    # (E, 4*GP)   bf16 context  LSTM input->gates (gate-padded)
    whh_c_ref,    # (GP, 4*GP)  bf16 context  LSTM hidden->gates
    b_c_ref,      # (1, 4*GP)   f32  context  LSTM bias (b_ih + b_hh)
    wih_r_ref,    # (E, 4*GP)   bf16 response LSTM input->gates
    whh_r_ref,    # (GP, 4*GP)  bf16 response LSTM hidden->gates
    b_r_ref,      # (1, 4*GP)   f32  response LSTM bias
    wproj_ref,    # (GP, OP)    bf16 projection weight (row+col padded)
    bproj_ref,    # (1, OP)     f32  projection bias (-1e30 in padded lanes)
    out_ref,      # (B, OP)     f32  log-softmax output (lane-dense)
    pre_c_ref,    # VMEM scratch (Tc*B, 4*GP) f32
    pre_r_ref,    # VMEM scratch (Tr*B, 4*GP) f32
    *, Tc, Tr, B,
):
    GP = whh_c_ref.shape[0]   # lane-padded hidden width (multiple of 128)

    # Hoisted input projection for the context LSTM -> VMEM scratch (not a
    # live vreg value across the recurrence).
    pre_c_ref[...] = (jnp.dot(ctx_ref[...], wih_c_ref[...],
                              preferred_element_type=jnp.float32)
                      + b_c_ref[...])

    # init_hidden(): zeros, carried as values (vregs), not scratch.
    h = jnp.zeros((B, GP), jnp.float32)
    c = jnp.zeros((B, GP), jnp.float32)

    h, c = _run_lstm(pre_c_ref, whh_c_ref, h, c, Tc, B, GP)

    # Response projection computed only now (keeps its live range short).
    pre_r_ref[...] = (jnp.dot(rsp_ref[...], wih_r_ref[...],
                              preferred_element_type=jnp.float32)
                      + b_r_ref[...])

    h, c = _run_lstm(pre_r_ref, whh_r_ref, h, c, Tr, B, GP)

    # Dropout (eval-mode identity) -> Linear -> LogSoftmax(dim=1).
    # Padded logit lanes carry -1e30 bias -> exp underflows to 0 and they
    # never win the max, so they do not perturb the real lanes.
    logits = (jnp.dot(h.astype(jnp.bfloat16), wproj_ref[...],
                      preferred_element_type=jnp.float32)
              + bproj_ref[...])                               # (B, OP)
    m = jnp.max(logits, axis=1, keepdims=True)
    z = logits - m
    out_ref[...] = z - jnp.log(jnp.sum(jnp.exp(z), axis=1, keepdims=True))


# ---------------------------------------------------------------------------
# Parameter padding (one-time, hoisted off the forward path)
# ---------------------------------------------------------------------------
def _pad_gate_cols(w, H, GP):
    """(..., 4H) gate-stacked -> (..., 4*GP): each gate block starts at a
    128-lane-aligned offset, zero-padded to width GP."""
    blocks = []
    for k in range(4):
        blk = w[..., k * H:(k + 1) * H]
        pad = [(0, 0)] * (w.ndim - 1) + [(0, GP - H)]
        blocks.append(jnp.pad(blk, pad))
    return jnp.concatenate(blocks, axis=-1)


def prepare_padded_params(params):
    """Pad gate/hidden/output dims to 128-lane multiples, cast matmul
    operands to bf16 (biases stay f32). Call ONCE, outside the forward."""
    H = params["whh_c"].shape[0]
    O = params["w_proj"].shape[1]
    GP = ((H + 127) // 128) * 128
    OP = ((O + 127) // 128) * 128
    bf16 = jnp.bfloat16

    def pad_whh(w):
        return jnp.pad(_pad_gate_cols(w, H, GP), ((0, GP - H), (0, 0)))

    pp = {
        "wih_c": _pad_gate_cols(params["wih_c"], H, GP).astype(bf16),
        "whh_c": pad_whh(params["whh_c"]).astype(bf16),
        "b_c": _pad_gate_cols(params["b_c"], H, GP).astype(jnp.float32),
        "wih_r": _pad_gate_cols(params["wih_r"], H, GP).astype(bf16),
        "whh_r": pad_whh(params["whh_r"]).astype(bf16),
        "b_r": _pad_gate_cols(params["b_r"], H, GP).astype(jnp.float32),
        "w_proj": jnp.pad(params["w_proj"],
                          ((0, GP - H), (0, OP - O))).astype(bf16),
        # -1e30 in padded lanes -> padded logits drop out of log-softmax.
        "b_proj": jnp.pad(params["b_proj"], ((0, 0), (0, OP - O)),
                          constant_values=-1e30).astype(jnp.float32),
    }
    return pp


# ---------------------------------------------------------------------------
# Wrapper (jit'd; padded params are an argument, not recomputed per call)
# ---------------------------------------------------------------------------
@functools.partial(jax.jit, static_argnames=("out_dim",))
def conditional_lstm_forward(ctx_emb, rsp_emb, pp, out_dim):
    """ctx_emb: (Tc, B, E), rsp_emb: (Tr, B, E) float32 (time-major).
    pp: output of prepare_padded_params. Returns (B, out_dim) log-probs."""
    Tc, B, E = ctx_emb.shape
    Tr = rsp_emb.shape[0]
    GP = pp["whh_c"].shape[0]
    OP = pp["w_proj"].shape[1]
    assert B % 8 == 0, "batch must be a multiple of 8 (whole sublane tiles)"

    ctx_flat = ctx_emb.reshape(Tc * B, E).astype(jnp.bfloat16)
    rsp_flat = rsp_emb.reshape(Tr * B, E).astype(jnp.bfloat16)

    vmem = pl.BlockSpec(memory_space=pltpu.MemorySpace.VMEM)
    kernel = functools.partial(conditional_lstm_kernel, Tc=Tc, Tr=Tr, B=B)

    # Everything fits comfortably in VMEM at these shapes -> gridless,
    # whole-array VMEM blocks. pre_c/pre_r live in VMEM scratch so they are
    # never held as vreg values across the unrolled recurrence.
    out_padded = pl.pallas_call(
        kernel,
        out_shape=jax.ShapeDtypeStruct((B, OP), jnp.float32),
        in_specs=[vmem] * 10,
        out_specs=vmem,
        scratch_shapes=[
            pltpu.VMEM((Tc * B, 4 * GP), jnp.float32),   # pre_c
            pltpu.VMEM((Tr * B, 4 * GP), jnp.float32),   # pre_r
        ],
        compiler_params=pltpu.CompilerParams(
            vmem_limit_bytes=32 * 1024 * 1024),
    )(
        ctx_flat, rsp_flat,
        pp["wih_c"], pp["whh_c"], pp["b_c"],
        pp["wih_r"], pp["whh_r"], pp["b_r"],
        pp["w_proj"], pp["b_proj"],
    )
    return out_padded[:, :out_dim]


# ---------------------------------------------------------------------------
# Deterministic parameter construction + pure-JAX f32 reference
# ---------------------------------------------------------------------------
def init_params(key, vocab, E, H, O):
    ks = jax.random.split(key, 12)
    u = lambda k, shape, s: jax.random.uniform(k, shape, jnp.float32, -s, s)
    s_lstm = 1.0 / jnp.sqrt(H)
    return {
        "embed": u(ks[0], (vocab, E), 1.0),
        # LSTM weights stored pre-transposed: (in, 4H), gate order i,f,g,o
        "wih_c": u(ks[1], (E, 4 * H), s_lstm),
        "whh_c": u(ks[2], (H, 4 * H), s_lstm),
        "b_c": u(ks[3], (1, 4 * H), s_lstm) + u(ks[4], (1, 4 * H), s_lstm),
        "wih_r": u(ks[5], (E, 4 * H), s_lstm),
        "whh_r": u(ks[6], (H, 4 * H), s_lstm),
        "b_r": u(ks[7], (1, 4 * H), s_lstm) + u(ks[8], (1, 4 * H), s_lstm),
        "w_proj": u(ks[9], (H, O), 1.0 / jnp.sqrt(H)),
        "b_proj": u(ks[10], (1, O), 1.0 / jnp.sqrt(H)),
    }


def reference_forward(ctx_emb, rsp_emb, params):
    B = ctx_emb.shape[1]
    H = params["whh_c"].shape[0]
    h = jnp.zeros((B, H), jnp.float32)
    c = jnp.zeros((B, H), jnp.float32)

    def run(seq, wih, whh, b, h, c):
        for t in range(seq.shape[0]):
            g = seq[t] @ wih + h @ whh + b
            i = jax.nn.sigmoid(g[:, :H])
            f = jax.nn.sigmoid(g[:, H:2 * H])
            gg = jnp.tanh(g[:, 2 * H:3 * H])
            o = jax.nn.sigmoid(g[:, 3 * H:])
            c = f * c + i * gg
            h = o * jnp.tanh(c)
        return h, c

    h, c = run(ctx_emb, params["wih_c"], params["whh_c"], params["b_c"], h, c)
    h, c = run(rsp_emb, params["wih_r"], params["whh_r"], params["b_r"], h, c)
    logits = h @ params["w_proj"] + params["b_proj"]
    return jax.nn.log_softmax(logits, axis=1)


# ---------------------------------------------------------------------------
# Main
# ---------------------------------------------------------------------------
if __name__ == "__main__":
    vocab, E, H, O = 32, 16, 32, 8
    B, Tc, Tr = 8, 6, 8          # B multiple of 8 -> full sublane tiles

    key = jax.random.PRNGKey(0)
    k_par, k_ctx, k_rsp = jax.random.split(key, 3)
    params = init_params(k_par, vocab, E, H, O)

    # One-time padding/casting of weights (hoisted off the forward path).
    pp = prepare_padded_params(params)
    pp = jax.tree_util.tree_map(jax.block_until_ready, pp)

    # token ids (B, T)
    context = jax.random.randint(k_ctx, (B, Tc), 0, vocab)
    response = jax.random.randint(k_rsp, (B, Tr), 0, vocab)

    # embedding lookup (glue, plain JAX gather) + transpose(0, 1) -> (T, B, E)
    ctx_emb = jnp.transpose(params["embed"][context], (1, 0, 2)).astype(jnp.float32)
    rsp_emb = jnp.transpose(params["embed"][response], (1, 0, 2)).astype(jnp.float32)

    out = conditional_lstm_forward(ctx_emb, rsp_emb, pp, out_dim=O)
    out = jax.block_until_ready(out)

    ref = reference_forward(ctx_emb, rsp_emb, params)
    assert out.shape == (B, O)
    # bf16 matmul operands (per perf feedback) -> slightly looser tolerance
    # vs the pure-f32 reference.
    assert jnp.allclose(out, ref, atol=5e-2, rtol=1e-3), "mismatch vs reference"

    print("KERNEL_OK")
</pallas_src>

<mosaic_0001>
module attributes {stable_mosaic.version = 11 : i64} {
  func.func @conditional_lstm_kernel(%arg0: memref<48x16xbf16, #tpu.memory_space<vmem>>, %arg1: memref<64x16xbf16, #tpu.memory_space<vmem>>, %arg2: memref<16x512xbf16, #tpu.memory_space<vmem>>, %arg3: memref<128x512xbf16, #tpu.memory_space<vmem>>, %arg4: memref<1x512xf32, #tpu.memory_space<vmem>>, %arg5: memref<16x512xbf16, #tpu.memory_space<vmem>>, %arg6: memref<128x512xbf16, #tpu.memory_space<vmem>>, %arg7: memref<1x512xf32, #tpu.memory_space<vmem>>, %arg8: memref<128x128xbf16, #tpu.memory_space<vmem>>, %arg9: memref<1x128xf32, #tpu.memory_space<vmem>>, %arg10: memref<8x128xf32, #tpu.memory_space<vmem>>, %arg11: memref<48x512xf32, #tpu.memory_space<vmem>>, %arg12: memref<64x512xf32, #tpu.memory_space<vmem>>) attributes {dimension_semantics = [], scalar_prefetch = 0 : i64, scratch_operands = 2 : i64, tpu.core_type = #tpu.core_type<tc>} {
    %c0 = arith.constant 0 : index
    %c0_0 = arith.constant 0 : index
    %0 = vector.load %arg0[%c0, %c0_0] : memref<48x16xbf16, #tpu.memory_space<vmem>>, vector<48x16xbf16>
    %c0_1 = arith.constant 0 : index
    %c0_2 = arith.constant 0 : index
    %1 = vector.load %arg2[%c0_1, %c0_2] : memref<16x512xbf16, #tpu.memory_space<vmem>>, vector<16x512xbf16>
    %cst = arith.constant dense<0.000000e+00> : vector<48x512xf32>
    %2 = tpu.matmul %0, %1, %cst {dimension_numbers = #tpu.dot_dimension_numbers<[1], [0], [0], [1], [0, 0, 1, 1], [], []>} : vector<48x16xbf16>, vector<16x512xbf16>, vector<48x512xf32> -> vector<48x512xf32>
    %c0_3 = arith.constant 0 : index
    %c0_4 = arith.constant 0 : index
    %3 = vector.load %arg4[%c0_3, %c0_4] : memref<1x512xf32, #tpu.memory_space<vmem>>, vector<1x512xf32>
    %4 = vector.broadcast %3 : vector<1x512xf32> to vector<48x512xf32>
    %5 = arith.addf %2, %4 : vector<48x512xf32>
    %c0_5 = arith.constant 0 : index
    %c0_6 = arith.constant 0 : index
    %6 = vector.load %arg11[%c0_5, %c0_6] : memref<48x512xf32, #tpu.memory_space<vmem>>, vector<48x512xf32>
    tpu.vector_store %arg11[%c0_5, %c0_6], %5 {strides = array<i32>} : memref<48x512xf32, #tpu.memory_space<vmem>>, vector<48x512xf32>,
    %cst_7 = arith.constant 0.000000e+00 : f32
    %7 = vector.broadcast %cst_7 : f32 to vector<8x128xf32>
    %cst_8 = arith.constant 0.000000e+00 : f32
    %8 = vector.broadcast %cst_8 : f32 to vector<8x128xf32>
    %c0_9 = arith.constant 0 : index
    %c0_10 = arith.constant 0 : index
    %9 = vector.load %arg11[%c0_9, %c0_10] : memref<48x512xf32, #tpu.memory_space<vmem>>, vector<8x512xf32>
    %10 = arith.truncf %7 : vector<8x128xf32> to vector<8x128xbf16>
    %c0_11 = arith.constant 0 : index
    %c0_12 = arith.constant 0 : index
    %11 = vector.load %arg3[%c0_11, %c0_12] : memref<128x512xbf16, #tpu.memory_space<vmem>>, vector<128x512xbf16>
    %cst_13 = arith.constant dense<0.000000e+00> : vector<8x512xf32>
    %12 = tpu.matmul %10, %11, %cst_13 {dimension_numbers = #tpu.dot_dimension_numbers<[1], [0], [0], [1], [0, 0, 1, 1], [], []>} : vector<8x128xbf16>, vector<128x512xbf16>, vector<8x512xf32> -> vector<8x512xf32>
    %13 = arith.addf %9, %12 : vector<8x512xf32>
    %14 = vector.extract_strided_slice %13 {offsets = [0, 0], sizes = [8, 128], strides = [1, 1]} : vector<8x512xf32> to vector<8x128xf32>
    %15 = arith.negf %14 : vector<8x128xf32>
    %16 = math.exp %15 : vector<8x128xf32>
    %cst_14 = arith.constant 1.000000e+00 : f32
    %17 = vector.broadcast %cst_14 : f32 to vector<8x128xf32>
    %18 = arith.addf %17, %16 : vector<8x128xf32>
    %19 = arith.divf %17, %18 : vector<8x128xf32>
    %20 = vector.extract_strided_slice %13 {offsets = [0, 128], sizes = [8, 128], strides = [1, 1]} : vector<8x512xf32> to vector<8x128xf32>
    %21 = arith.negf %20 : vector<8x128xf32>
    %22 = math.exp %21 : vector<8x128xf32>
    %cst_15 = arith.constant 1.000000e+00 : f32
    %23 = vector.broadcast %cst_15 : f32 to vector<8x128xf32>
    %24 = arith.addf %23, %22 : vector<8x128xf32>
    %25 = arith.divf %23, %24 : vector<8x128xf32>
    %26 = vector.extract_strided_slice %13 {offsets = [0, 256], sizes = [8, 128], strides = [1, 1]} : vector<8x512xf32> to vector<8x128xf32>
    %27 = math.tanh %26 : vector<8x128xf32>
    %28 = vector.extract_strided_slice %13 {offsets = [0, 384], sizes = [8, 128], strides = [1, 1]} : vector<8x512xf32> to vector<8x128xf32>
    %29 = arith.negf %28 : vector<8x128xf32>
    %30 = math.exp %29 : vector<8x128xf32>
    %cst_16 = arith.constant 1.000000e+00 : f32
    %31 = vector.broadcast %cst_16 : f32 to vector<8x128xf32>
    %32 = arith.addf %31, %30 : vector<8x128xf32>
    %33 = arith.divf %31, %32 : vector<8x128xf32>
    %34 = arith.mulf %25, %8 : vector<8x128xf32>
    %35 = arith.mulf %19, %27 : vector<8x128xf32>
    %36 = arith.addf %34, %35 : vector<8x128xf32>
    %37 = math.tanh %36 : vector<8x128xf32>
    %38 = arith.mulf %33, %37 : vector<8x128xf32>
    %c8 = arith.constant 8 : index
    %c0_17 = arith.constant 0 : index
    %39 = vector.load %arg11[%c8, %c0_17] : memref<48x512xf32, #tpu.memory_space<vmem>>, vector<8x512xf32>
    %40 = arith.truncf %38 : vector<8x128xf32> to vector<8x128xbf16>
    %c0_18 = arith.constant 0 : index
    %c0_19 = arith.constant 0 : index
    %41 = vector.load %arg3[%c0_18, %c0_19] : memref<128x512xbf16, #tpu.memory_space<vmem>>, vector<128x512xbf16>
    %cst_20 = arith.constant dense<0.000000e+00> : vector<8x512xf32>
    %42 = tpu.matmul %40, %41, %cst_20 {dimension_numbers = #tpu.dot_dimension_numbers<[1], [0], [0], [1], [0, 0, 1, 1], [], []>} : vector<8x128xbf16>, vector<128x512xbf16>, vector<8x512xf32> -> vector<8x512xf32>
    %43 = arith.addf %39, %42 : vector<8x512xf32>
    %44 = vector.extract_strided_slice %43 {offsets = [0, 0], sizes = [8, 128], strides = [1, 1]} : vector<8x512xf32> to vector<8x128xf32>
    %45 = arith.negf %44 : vector<8x128xf32>
    %46 = math.exp %45 : vector<8x128xf32>
    %cst_21 = arith.constant 1.000000e+00 : f32
    %47 = vector.broadcast %cst_21 : f32 to vector<8x128xf32>
    %48 = arith.addf %47, %46 : vector<8x128xf32>
    %49 = arith.divf %47, %48 : vector<8x128xf32>
    %50 = vector.extract_strided_slice %43 {offsets = [0, 128], sizes = [8, 128], strides = [1, 1]} : vector<8x512xf32> to vector<8x128xf32>
    %51 = arith.negf %50 : vector<8x128xf32>
    %52 = math.exp %51 : vector<8x128xf32>
    %cst_22 = arith.constant 1.000000e+00 : f32
    %53 = vector.broadcast %cst_22 : f32 to vector<8x128xf32>
    %54 = arith.addf %53, %52 : vector<8x128xf32>
    %55 = arith.divf %53, %54 : vector<8x128xf32>
    %56 = vector.extract_strided_slice %43 {offsets = [0, 256], sizes = [8, 128], strides = [1, 1]} : vector<8x512xf32> to vector<8x128xf32>
    %57 = math.tanh %56 : vector<8x128xf32>
    %58 = vector.extract_strided_slice %43 {offsets = [0, 384], sizes = [8, 128], strides = [1, 1]} : vector<8x512xf32> to vector<8x128xf32>
    %59 = arith.negf %58 : vector<8x128xf32>
    %60 = math.exp %59 : vector<8x128xf32>
    %cst_23 = arith.constant 1.000000e+00 : f32
    %61 = vector.broadcast %cst_23 : f32 to vector<8x128xf32>
    %62 = arith.addf %61, %60 : vector<8x128xf32>
    %63 = arith.divf %61, %62 : vector<8x128xf32>
    %64 = arith.mulf %55, %36 : vector<8x128xf32>
    %65 = arith.mulf %49, %57 : vector<8x128xf32>
    %66 = arith.addf %64, %65 : vector<8x128xf32>
    %67 = math.tanh %66 : vector<8x128xf32>
    %68 = arith.mulf %63, %67 : vector<8x128xf32>
    %c16 = arith.constant 16 : index
    %c0_24 = arith.constant 0 : index
    %69 = vector.load %arg11[%c16, %c0_24] : memref<48x512xf32, #tpu.memory_space<vmem>>, vector<8x512xf32>
    %70 = arith.truncf %68 : vector<8x128xf32> to vector<8x128xbf16>
    %c0_25 = arith.constant 0 : index
    %c0_26 = arith.constant 0 : index
    %71 = vector.load %arg3[%c0_25, %c0_26] : memref<128x512xbf16, #tpu.memory_space<vmem>>, vector<128x512xbf16>
    %cst_27 = arith.constant dense<0.000000e+00> : vector<8x512xf32>
    %72 = tpu.matmul %70, %71, %cst_27 {dimension_numbers = #tpu.dot_dimension_numbers<[1], [0], [0], [1], [0, 0, 1, 1], [], []>} : vector<8x128xbf16>, vector<128x512xbf16>, vector<8x512xf32> -> vector<8x512xf32>
    %73 = arith.addf %69, %72 : vector<8x512xf32>
    %74 = vector.extract_strided_slice %73 {offsets = [0, 0], sizes = [8, 128], strides = [1, 1]} : vector<8x512xf32> to vector<8x128xf32>
    %75 = arith.negf %74 : vector<8x128xf32>
    %76 = math.exp %75 : vector<8x128xf32>
    %cst_28 = arith.constant 1.000000e+00 : f32
    %77 = vector.broadcast %cst_28 : f32 to vector<8x128xf32>
    %78 = arith.addf %77, %76 : vector<8x128xf32>
    %79 = arith.divf %77, %78 : vector<8x128xf32>
    %80 = vector.extract_strided_slice %73 {offsets = [0, 128], sizes = [8, 128], strides = [1, 1]} : vector<8x512xf32> to vector<8x128xf32>
    %81 = arith.negf %80 : vector<8x128xf32>
    %82 = math.exp %81 : vector<8x128xf32>
    %cst_29 = arith.constant 1.000000e+00 : f32
    %83 = vector.broadcast %cst_29 : f32 to vector<8x128xf32>
    %84 = arith.addf %83, %82 : vector<8x128xf32>
    %85 = arith.divf %83, %84 : vector<8x128xf32>
    %86 = vector.extract_strided_slice %73 {offsets = [0, 256], sizes = [8, 128], strides = [1, 1]} : vector<8x512xf32> to vector<8x128xf32>
    %87 = math.tanh %86 : vector<8x128xf32>
    %88 = vector.extract_strided_slice %73 {offsets = [0, 384], sizes = [8, 128], strides = [1, 1]} : vector<8x512xf32> to vector<8x128xf32>
    %89 = arith.negf %88 : vector<8x128xf32>
    %90 = math.exp %89 : vector<8x128xf32>
    %cst_30 = arith.constant 1.000000e+00 : f32
    %91 = vector.broadcast %cst_30 : f32 to vector<8x128xf32>
    %92 = arith.addf %91, %90 : vector<8x128xf32>
    %93 = arith.divf %91, %92 : vector<8x128xf32>
    %94 = arith.mulf %85, %66 : vector<8x128xf32>
    %95 = arith.mulf %79, %87 : vector<8x128xf32>
    %96 = arith.addf %94, %95 : vector<8x128xf32>
    %97 = math.tanh %96 : vector<8x128xf32>
    %98 = arith.mulf %93, %97 : vector<8x128xf32>
    %c24 = arith.constant 24 : index
    %c0_31 = arith.constant 0 : index
    %99 = vector.load %arg11[%c24, %c0_31] : memref<48x512xf32, #tpu.memory_space<vmem>>, vector<8x512xf32>
    %100 = arith.truncf %98 : vector<8x128xf32> to vector<8x128xbf16>
    %c0_32 = arith.constant 0 : index
    %c0_33 = arith.constant 0 : index
    %101 = vector.load %arg3[%c0_32, %c0_33] : memref<128x512xbf16, #tpu.memory_space<vmem>>, vector<128x512xbf16>
    %cst_34 = arith.constant dense<0.000000e+00> : vector<8x512xf32>
    %102 = tpu.matmul %100, %101, %cst_34 {dimension_numbers = #tpu.dot_dimension_numbers<[1], [0], [0], [1], [0, 0, 1, 1], [], []>} : vector<8x128xbf16>, vector<128x512xbf16>, vector<8x512xf32> -> vector<8x512xf32>
    %103 = arith.addf %99, %102 : vector<8x512xf32>
    %104 = vector.extract_strided_slice %103 {offsets = [0, 0], sizes = [8, 128], strides = [1, 1]} : vector<8x512xf32> to vector<8x128xf32>
    %105 = arith.negf %104 : vector<8x128xf32>
    %106 = math.exp %105 : vector<8x128xf32>
    %cst_35 = arith.constant 1.000000e+00 : f32
    %107 = vector.broadcast %cst_35 : f32 to vector<8x128xf32>
    %108 = arith.addf %107, %106 : vector<8x128xf32>
    %109 = arith.divf %107, %108 : vector<8x128xf32>
    %110 = vector.extract_strided_slice %103 {offsets = [0, 128], sizes = [8, 128], strides = [1, 1]} : vector<8x512xf32> to vector<8x128xf32>
    %111 = arith.negf %110 : vector<8x128xf32>
    %112 = math.exp %111 : vector<8x128xf32>
    %cst_36 = arith.constant 1.000000e+00 : f32
    %113 = vector.broadcast %cst_36 : f32 to vector<8x128xf32>
    %114 = arith.addf %113, %112 : vector<8x128xf32>
    %115 = arith.divf %113, %114 : vector<8x128xf32>
    %116 = vector.extract_strided_slice %103 {offsets = [0, 256], sizes = [8, 128], strides = [1, 1]} : vector<8x512xf32> to vector<8x128xf32>
    %117 = math.tanh %116 : vector<8x128xf32>
    %118 = vector.extract_strided_slice %103 {offsets = [0, 384], sizes = [8, 128], strides = [1, 1]} : vector<8x512xf32> to vector<8x128xf32>
    %119 = arith.negf %118 : vector<8x128xf32>
    %120 = math.exp %119 : vector<8x128xf32>
    %cst_37 = arith.constant 1.000000e+00 : f32
    %121 = vector.broadcast %cst_37 : f32 to vector<8x128xf32>
    %122 = arith.addf %121, %120 : vector<8x128xf32>
    %123 = arith.divf %121, %122 : vector<8x128xf32>
    %124 = arith.mulf %115, %96 : vector<8x128xf32>
    %125 = arith.mulf %109, %117 : vector<8x128xf32>
    %126 = arith.addf %124, %125 : vector<8x128xf32>
    %127 = math.tanh %126 : vector<8x128xf32>
    %128 = arith.mulf %123, %127 : vector<8x128xf32>
    %c32 = arith.constant 32 : index
    %c0_38 = arith.constant 0 : index
    %129 = vector.load %arg11[%c32, %c0_38] : memref<48x512xf32, #tpu.memory_space<vmem>>, vector<8x512xf32>
    %130 = arith.truncf %128 : vector<8x128xf32> to vector<8x128xbf16>
    %c0_39 = arith.constant 0 : index
    %c0_40 = arith.constant 0 : index
    %131 = vector.load %arg3[%c0_39, %c0_40] : memref<128x512xbf16, #tpu.memory_space<vmem>>, vector<128x512xbf16>
    %cst_41 = arith.constant dense<0.000000e+00> : vector<8x512xf32>
    %132 = tpu.matmul %130, %131, %cst_41 {dimension_numbers = #tpu.dot_dimension_numbers<[1], [0], [0], [1], [0, 0, 1, 1], [], []>} : vector<8x128xbf16>, vector<128x512xbf16>, vector<8x512xf32> -> vector<8x512xf32>
    %133 = arith.addf %129, %132 : vector<8x512xf32>
    %134 = vector.extract_strided_slice %133 {offsets = [0, 0], sizes = [8, 128], strides = [1, 1]} : vector<8x512xf32> to vector<8x128xf32>
    %135 = arith.negf %134 : vector<8x128xf32>
    %136 = math.exp %135 : vector<8x128xf32>
    %cst_42 = arith.constant 1.000000e+00 : f32
    %137 = vector.broadcast %cst_42 : f32 to vector<8x128xf32>
    %138 = arith.addf %137, %136 : vector<8x128xf32>
    %139 = arith.divf %137, %138 : vector<8x128xf32>
    %140 = vector.extract_strided_slice %133 {offsets = [0, 128], sizes = [8, 128], strides = [1, 1]} : vector<8x512xf32> to vector<8x128xf32>
    %141 = arith.negf %140 : vector<8x128xf32>
    %142 = math.exp %141 : vector<8x128xf32>
    %cst_43 = arith.constant 1.000000e+00 : f32
    %143 = vector.broadcast %cst_43 : f32 to vector<8x128xf32>
    %144 = arith.addf %143, %142 : vector<8x128xf32>
    %145 = arith.divf %143, %144 : vector<8x128xf32>
    %146 = vector.extract_strided_slice %133 {offsets = [0, 256], sizes = [8, 128], strides = [1, 1]} : vector<8x512xf32> to vector<8x128xf32>
    %147 = math.tanh %146 : vector<8x128xf32>
    %148 = vector.extract_strided_slice %133 {offsets = [0, 384], sizes = [8, 128], strides = [1, 1]} : vector<8x512xf32> to vector<8x128xf32>
    %149 = arith.negf %148 : vector<8x128xf32>
    %150 = math.exp %149 : vector<8x128xf32>
    %cst_44 = arith.constant 1.000000e+00 : f32
    %151 = vector.broadcast %cst_44 : f32 to vector<8x128xf32>
    %152 = arith.addf %151, %150 : vector<8x128xf32>
    %153 = arith.divf %151, %152 : vector<8x128xf32>
    %154 = arith.mulf %145, %126 : vector<8x128xf32>
    %155 = arith.mulf %139, %147 : vector<8x128xf32>
    %156 = arith.addf %154, %155 : vector<8x128xf32>
    %157 = math.tanh %156 : vector<8x128xf32>
    %158 = arith.mulf %153, %157 : vector<8x128xf32>
    %c40 = arith.constant 40 : index
    %c0_45 = arith.constant 0 : index
    %159 = vector.load %arg11[%c40, %c0_45] : memref<48x512xf32, #tpu.memory_space<vmem>>, vector<8x512xf32>
    %160 = arith.truncf %158 : vector<8x128xf32> to vector<8x128xbf16>
    %c0_46 = arith.constant 0 : index
    %c0_47 = arith.constant 0 : index
    %161 = vector.load %arg3[%c0_46, %c0_47] : memref<128x512xbf16, #tpu.memory_space<vmem>>, vector<128x512xbf16>
    %cst_48 = arith.constant dense<0.000000e+00> : vector<8x512xf32>
    %162 = tpu.matmul %160, %161, %cst_48 {dimension_numbers = #tpu.dot_dimension_numbers<[1], [0], [0], [1], [0, 0, 1, 1], [], []>} : vector<8x128xbf16>, vector<128x512xbf16>, vector<8x512xf32> -> vector<8x512xf32>
    %163 = arith.addf %159, %162 : vector<8x512xf32>
    %164 = vector.extract_strided_slice %163 {offsets = [0, 0], sizes = [8, 128], strides = [1, 1]} : vector<8x512xf32> to vector<8x128xf32>
    %165 = arith.negf %164 : vector<8x128xf32>
    %166 = math.exp %165 : vector<8x128xf32>
    %cst_49 = arith.constant 1.000000e+00 : f32
    %167 = vector.broadcast %cst_49 : f32 to vector<8x128xf32>
    %168 = arith.addf %167, %166 : vector<8x128xf32>
    %169 = arith.divf %167, %168 : vector<8x128xf32>
    %170 = vector.extract_strided_slice %163 {offsets = [0, 128], sizes = [8, 128], strides = [1, 1]} : vector<8x512xf32> to vector<8x128xf32>
    %171 = arith.negf %170 : vector<8x128xf32>
    %172 = math.exp %171 : vector<8x128xf32>
    %cst_50 = arith.constant 1.000000e+00 : f32
    %173 = vector.broadcast %cst_50 : f32 to vector<8x128xf32>
    %174 = arith.addf %173, %172 : vector<8x128xf32>
    %175 = arith.divf %173, %174 : vector<8x128xf32>
    %176 = vector.extract_strided_slice %163 {offsets = [0, 256], sizes = [8, 128], strides = [1, 1]} : vector<8x512xf32> to vector<8x128xf32>
    %177 = math.tanh %176 : vector<8x128xf32>
    %178 = vector.extract_strided_slice %163 {offsets = [0, 384], sizes = [8, 128], strides = [1, 1]} : vector<8x512xf32> to vector<8x128xf32>
    %179 = arith.negf %178 : vector<8x128xf32>
    %180 = math.exp %179 : vector<8x128xf32>
    %cst_51 = arith.constant 1.000000e+00 : f32
    %181 = vector.broadcast %cst_51 : f32 to vector<8x128xf32>
    %182 = arith.addf %181, %180 : vector<8x128xf32>
    %183 = arith.divf %181, %182 : vector<8x128xf32>
    %184 = arith.mulf %175, %156 : vector<8x128xf32>
    %185 = arith.mulf %169, %177 : vector<8x128xf32>
    %186 = arith.addf %184, %185 : vector<8x128xf32>
    %187 = math.tanh %186 : vector<8x128xf32>
    %188 = arith.mulf %183, %187 : vector<8x128xf32>
    %c0_52 = arith.constant 0 : index
    %c0_53 = arith.constant 0 : index
    %189 = vector.load %arg1[%c0_52, %c0_53] : memref<64x16xbf16, #tpu.memory_space<vmem>>, vector<64x16xbf16>
    %c0_54 = arith.constant 0 : index
    %c0_55 = arith.constant 0 : index
    %190 = vector.load %arg5[%c0_54, %c0_55] : memref<16x512xbf16, #tpu.memory_space<vmem>>, vector<16x512xbf16>
    %cst_56 = arith.constant dense<0.000000e+00> : vector<64x512xf32>
    %191 = tpu.matmul %189, %190, %cst_56 {dimension_numbers = #tpu.dot_dimension_numbers<[1], [0], [0], [1], [0, 0, 1, 1], [], []>} : vector<64x16xbf16>, vector<16x512xbf16>, vector<64x512xf32> -> vector<64x512xf32>
    %c0_57 = arith.constant 0 : index
    %c0_58 = arith.constant 0 : index
    %192 = vector.load %arg7[%c0_57, %c0_58] : memref<1x512xf32, #tpu.memory_space<vmem>>, vector<1x512xf32>
    %193 = vector.broadcast %192 : vector<1x512xf32> to vector<64x512xf32>
    %194 = arith.addf %191, %193 : vector<64x512xf32>
    %c0_59 = arith.constant 0 : index
    %c0_60 = arith.constant 0 : index
    %195 = vector.load %arg12[%c0_59, %c0_60] : memref<64x512xf32, #tpu.memory_space<vmem>>, vector<64x512xf32>
    tpu.vector_store %arg12[%c0_59, %c0_60], %194 {strides = array<i32>} : memref<64x512xf32, #tpu.memory_space<vmem>>, vector<64x512xf32>,
    %c0_61 = arith.constant 0 : index
    %c0_62 = arith.constant 0 : index
    %196 = vector.load %arg12[%c0_61, %c0_62] : memref<64x512xf32, #tpu.memory_space<vmem>>, vector<8x512xf32>
    %197 = arith.truncf %188 : vector<8x128xf32> to vector<8x128xbf16>
    %c0_63 = arith.constant 0 : index
    %c0_64 = arith.constant 0 : index
    %198 = vector.load %arg6[%c0_63, %c0_64] : memref<128x512xbf16, #tpu.memory_space<vmem>>, vector<128x512xbf16>
    %cst_65 = arith.constant dense<0.000000e+00> : vector<8x512xf32>
    %199 = tpu.matmul %197, %198, %cst_65 {dimension_numbers = #tpu.dot_dimension_numbers<[1], [0], [0], [1], [0, 0, 1, 1], [], []>} : vector<8x128xbf16>, vector<128x512xbf16>, vector<8x512xf32> -> vector<8x512xf32>
    %200 = arith.addf %196, %199 : vector<8x512xf32>
    %201 = vector.extract_strided_slice %200 {offsets = [0, 0], sizes = [8, 128], strides = [1, 1]} : vector<8x512xf32> to vector<8x128xf32>
    %202 = arith.negf %201 : vector<8x128xf32>
    %203 = math.exp %202 : vector<8x128xf32>
    %cst_66 = arith.constant 1.000000e+00 : f32
    %204 = vector.broadcast %cst_66 : f32 to vector<8x128xf32>
    %205 = arith.addf %204, %203 : vector<8x128xf32>
    %206 = arith.divf %204, %205 : vector<8x128xf32>
    %207 = vector.extract_strided_slice %200 {offsets = [0, 128], sizes = [8, 128], strides = [1, 1]} : vector<8x512xf32> to vector<8x128xf32>
    %208 = arith.negf %207 : vector<8x128xf32>
    %209 = math.exp %208 : vector<8x128xf32>
    %cst_67 = arith.constant 1.000000e+00 : f32
    %210 = vector.broadcast %cst_67 : f32 to vector<8x128xf32>
    %211 = arith.addf %210, %209 : vector<8x128xf32>
    %212 = arith.divf %210, %211 : vector<8x128xf32>
    %213 = vector.extract_strided_slice %200 {offsets = [0, 256], sizes = [8, 128], strides = [1, 1]} : vector<8x512xf32> to vector<8x128xf32>
    %214 = math.tanh %213 : vector<8x128xf32>
    %215 = vector.extract_strided_slice %200 {offsets = [0, 384], sizes = [8, 128], strides = [1, 1]} : vector<8x512xf32> to vector<8x128xf32>
    %216 = arith.negf %215 : vector<8x128xf32>
    %217 = math.exp %216 : vector<8x128xf32>
    %cst_68 = arith.constant 1.000000e+00 : f32
    %218 = vector.broadcast %cst_68 : f32 to vector<8x128xf32>
    %219 = arith.addf %218, %217 : vector<8x128xf32>
    %220 = arith.divf %218, %219 : vector<8x128xf32>
    %221 = arith.mulf %212, %186 : vector<8x128xf32>
    %222 = arith.mulf %206, %214 : vector<8x128xf32>
    %223 = arith.addf %221, %222 : vector<8x128xf32>
    %224 = math.tanh %223 : vector<8x128xf32>
    %225 = arith.mulf %220, %224 : vector<8x128xf32>
    %c8_69 = arith.constant 8 : index
    %c0_70 = arith.constant 0 : index
    %226 = vector.load %arg12[%c8_69, %c0_70] : memref<64x512xf32, #tpu.memory_space<vmem>>, vector<8x512xf32>
    %227 = arith.truncf %225 : vector<8x128xf32> to vector<8x128xbf16>
    %c0_71 = arith.constant 0 : index
    %c0_72 = arith.constant 0 : index
    %228 = vector.load %arg6[%c0_71, %c0_72] : memref<128x512xbf16, #tpu.memory_space<vmem>>, vector<128x512xbf16>
    %cst_73 = arith.constant dense<0.000000e+00> : vector<8x512xf32>
    %229 = tpu.matmul %227, %228, %cst_73 {dimension_numbers = #tpu.dot_dimension_numbers<[1], [0], [0], [1], [0, 0, 1, 1], [], []>} : vector<8x128xbf16>, vector<128x512xbf16>, vector<8x512xf32> -> vector<8x512xf32>
    %230 = arith.addf %226, %229 : vector<8x512xf32>
    %231 = vector.extract_strided_slice %230 {offsets = [0, 0], sizes = [8, 128], strides = [1, 1]} : vector<8x512xf32> to vector<8x128xf32>
    %232 = arith.negf %231 : vector<8x128xf32>
    %233 = math.exp %232 : vector<8x128xf32>
    %cst_74 = arith.constant 1.000000e+00 : f32
    %234 = vector.broadcast %cst_74 : f32 to vector<8x128xf32>
    %235 = arith.addf %234, %233 : vector<8x128xf32>
    %236 = arith.divf %234, %235 : vector<8x128xf32>
    %237 = vector.extract_strided_slice %230 {offsets = [0, 128], sizes = [8, 128], strides = [1, 1]} : vector<8x512xf32> to vector<8x128xf32>
    %238 = arith.negf %237 : vector<8x128xf32>
    %239 = math.exp %238 : vector<8x128xf32>
    %cst_75 = arith.constant 1.000000e+00 : f32
    %240 = vector.broadcast %cst_75 : f32 to vector<8x128xf32>
    %241 = arith.addf %240, %239 : vector<8x128xf32>
    %242 = arith.divf %240, %241 : vector<8x128xf32>
    %243 = vector.extract_strided_slice %230 {offsets = [0, 256], sizes = [8, 128], strides = [1, 1]} : vector<8x512xf32> to vector<8x128xf32>
    %244 = math.tanh %243 : vector<8x128xf32>
    %245 = vector.extract_strided_slice %230 {offsets = [0, 384], sizes = [8, 128], strides = [1, 1]} : vector<8x512xf32> to vector<8x128xf32>
    %246 = arith.negf %245 : vector<8x128xf32>
    %247 = math.exp %246 : vector<8x128xf32>
    %cst_76 = arith.constant 1.000000e+00 : f32
    %248 = vector.broadcast %cst_76 : f32 to vector<8x128xf32>
    %249 = arith.addf %248, %247 : vector<8x128xf32>
    %250 = arith.divf %248, %249 : vector<8x128xf32>
    %251 = arith.mulf %242, %223 : vector<8x128xf32>
    %252 = arith.mulf %236, %244 : vector<8x128xf32>
    %253 = arith.addf %251, %252 : vector<8x128xf32>
    %254 = math.tanh %253 : vector<8x128xf32>
    %255 = arith.mulf %250, %254 : vector<8x128xf32>
    %c16_77 = arith.constant 16 : index
    %c0_78 = arith.constant 0 : index
    %256 = vector.load %arg12[%c16_77, %c0_78] : memref<64x512xf32, #tpu.memory_space<vmem>>, vector<8x512xf32>
    %257 = arith.truncf %255 : vector<8x128xf32> to vector<8x128xbf16>
    %c0_79 = arith.constant 0 : index
    %c0_80 = arith.constant 0 : index
    %258 = vector.load %arg6[%c0_79, %c0_80] : memref<128x512xbf16, #tpu.memory_space<vmem>>, vector<128x512xbf16>
    %cst_81 = arith.constant dense<0.000000e+00> : vector<8x512xf32>
    %259 = tpu.matmul %257, %258, %cst_81 {dimension_numbers = #tpu.dot_dimension_numbers<[1], [0], [0], [1], [0, 0, 1, 1], [], []>} : vector<8x128xbf16>, vector<128x512xbf16>, vector<8x512xf32> -> vector<8x512xf32>
    %260 = arith.addf %256, %259 : vector<8x512xf32>
    %261 = vector.extract_strided_slice %260 {offsets = [0, 0], sizes = [8, 128], strides = [1, 1]} : vector<8x512xf32> to vector<8x128xf32>
    %262 = arith.negf %261 : vector<8x128xf32>
    %263 = math.exp %262 : vector<8x128xf32>
    %cst_82 = arith.constant 1.000000e+00 : f32
    %264 = vector.broadcast %cst_82 : f32 to vector<8x128xf32>
    %265 = arith.addf %264, %263 : vector<8x128xf32>
    %266 = arith.divf %264, %265 : vector<8x128xf32>
    %267 = vector.extract_strided_slice %260 {offsets = [0, 128], sizes = [8, 128], strides = [1, 1]} : vector<8x512xf32> to vector<8x128xf32>
    %268 = arith.negf %267 : vector<8x128xf32>
    %269 = math.exp %268 : vector<8x128xf32>
    %cst_83 = arith.constant 1.000000e+00 : f32
    %270 = vector.broadcast %cst_83 : f32 to vector<8x128xf32>
    %271 = arith.addf %270, %269 : vector<8x128xf32>
    %272 = arith.divf %270, %271 : vector<8x128xf32>
    %273 = vector.extract_strided_slice %260 {offsets = [0, 256], sizes = [8, 128], strides = [1, 1]} : vector<8x512xf32> to vector<8x128xf32>
    %274 = math.tanh %273 : vector<8x128xf32>
    %275 = vector.extract_strided_slice %260 {offsets = [0, 384], sizes = [8, 128], strides = [1, 1]} : vector<8x512xf32> to vector<8x128xf32>
    %276 = arith.negf %275 : vector<8x128xf32>
    %277 = math.exp %276 : vector<8x128xf32>
    %cst_84 = arith.constant 1.000000e+00 : f32
    %278 = vector.broadcast %cst_84 : f32 to vector<8x128xf32>
    %279 = arith.addf %278, %277 : vector<8x128xf32>
    %280 = arith.divf %278, %279 : vector<8x128xf32>
    %281 = arith.mulf %272, %253 : vector<8x128xf32>
    %282 = arith.mulf %266, %274 : vector<8x128xf32>
    %283 = arith.addf %281, %282 : vector<8x128xf32>
    %284 = math.tanh %283 : vector<8x128xf32>
    %285 = arith.mulf %280, %284 : vector<8x128xf32>
    %c24_85 = arith.constant 24 : index
    %c0_86 = arith.constant 0 : index
    %286 = vector.load %arg12[%c24_85, %c0_86] : memref<64x512xf32, #tpu.memory_space<vmem>>, vector<8x512xf32>
    %287 = arith.truncf %285 : vector<8x128xf32> to vector<8x128xbf16>
    %c0_87 = arith.constant 0 : index
    %c0_88 = arith.constant 0 : index
    %288 = vector.load %arg6[%c0_87, %c0_88] : memref<128x512xbf16, #tpu.memory_space<vmem>>, vector<128x512xbf16>
    %cst_89 = arith.constant dense<0.000000e+00> : vector<8x512xf32>
    %289 = tpu.matmul %287, %288, %cst_89 {dimension_numbers = #tpu.dot_dimension_numbers<[1], [0], [0], [1], [0, 0, 1, 1], [], []>} : vector<8x128xbf16>, vector<128x512xbf16>, vector<8x512xf32> -> vector<8x512xf32>
    %290 = arith.addf %286, %289 : vector<8x512xf32>
    %291 = vector.extract_strided_slice %290 {offsets = [0, 0], sizes = [8, 128], strides = [1, 1]} : vector<8x512xf32> to vector<8x128xf32>
    %292 = arith.negf %291 : vector<8x128xf32>
    %293 = math.exp %292 : vector<8x128xf32>
    %cst_90 = arith.constant 1.000000e+00 : f32
    %294 = vector.broadcast %cst_90 : f32 to vector<8x128xf32>
    %295 = arith.addf %294, %293 : vector<8x128xf32>
    %296 = arith.divf %294, %295 : vector<8x128xf32>
    %297 = vector.extract_strided_slice %290 {offsets = [0, 128], sizes = [8, 128], strides = [1, 1]} : vector<8x512xf32> to vector<8x128xf32>
    %298 = arith.negf %297 : vector<8x128xf32>
    %299 = math.exp %298 : vector<8x128xf32>
    %cst_91 = arith.constant 1.000000e+00 : f32
    %300 = vector.broadcast %cst_91 : f32 to vector<8x128xf32>
    %301 = arith.addf %300, %299 : vector<8x128xf32>
    %302 = arith.divf %300, %301 : vector<8x128xf32>
    %303 = vector.extract_strided_slice %290 {offsets = [0, 256], sizes = [8, 128], strides = [1, 1]} : vector<8x512xf32> to vector<8x128xf32>
    %304 = math.tanh %303 : vector<8x128xf32>
    %305 = vector.extract_strided_slice %290 {offsets = [0, 384], sizes = [8, 128], strides = [1, 1]} : vector<8x512xf32> to vector<8x128xf32>
    %306 = arith.negf %305 : vector<8x128xf32>
    %307 = math.exp %306 : vector<8x128xf32>
    %cst_92 = arith.constant 1.000000e+00 : f32
    %308 = vector.broadcast %cst_92 : f32 to vector<8x128xf32>
    %309 = arith.addf %308, %307 : vector<8x128xf32>
    %310 = arith.divf %308, %309 : vector<8x128xf32>
    %311 = arith.mulf %302, %283 : vector<8x128xf32>
    %312 = arith.mulf %296, %304 : vector<8x128xf32>
    %313 = arith.addf %311, %312 : vector<8x128xf32>
    %314 = math.tanh %313 : vector<8x128xf32>
    %315 = arith.mulf %310, %314 : vector<8x128xf32>
    %c32_93 = arith.constant 32 : index
    %c0_94 = arith.constant 0 : index
    %316 = vector.load %arg12[%c32_93, %c0_94] : memref<64x512xf32, #tpu.memory_space<vmem>>, vector<8x512xf32>
    %317 = arith.truncf %315 : vector<8x128xf32> to vector<8x128xbf16>
    %c0_95 = arith.constant 0 : index
    %c0_96 = arith.constant 0 : index
    %318 = vector.load %arg6[%c0_95, %c0_96] : memref<128x512xbf16, #tpu.memory_space<vmem>>, vector<128x512xbf16>
    %cst_97 = arith.constant dense<0.000000e+00> : vector<8x512xf32>
    %319 = tpu.matmul %317, %318, %cst_97 {dimension_numbers = #tpu.dot_dimension_numbers<[1], [0], [0], [1], [0, 0, 1, 1], [], []>} : vector<8x128xbf16>, vector<128x512xbf16>, vector<8x512xf32> -> vector<8x512xf32>
    %320 = arith.addf %316, %319 : vector<8x512xf32>
    %321 = vector.extract_strided_slice %320 {offsets = [0, 0], sizes = [8, 128], strides = [1, 1]} : vector<8x512xf32> to vector<8x128xf32>
    %322 = arith.negf %321 : vector<8x128xf32>
    %323 = math.exp %322 : vector<8x128xf32>
    %cst_98 = arith.constant 1.000000e+00 : f32
    %324 = vector.broadcast %cst_98 : f32 to vector<8x128xf32>
    %325 = arith.addf %324, %323 : vector<8x128xf32>
    %326 = arith.divf %324, %325 : vector<8x128xf32>
    %327 = vector.extract_strided_slice %320 {offsets = [0, 128], sizes = [8, 128], strides = [1, 1]} : vector<8x512xf32> to vector<8x128xf32>
    %328 = arith.negf %327 : vector<8x128xf32>
    %329 = math.exp %328 : vector<8x128xf32>
    %cst_99 = arith.constant 1.000000e+00 : f32
    %330 = vector.broadcast %cst_99 : f32 to vector<8x128xf32>
    %331 = arith.addf %330, %329 : vector<8x128xf32>
    %332 = arith.divf %330, %331 : vector<8x128xf32>
    %333 = vector.extract_strided_slice %320 {offsets = [0, 256], sizes = [8, 128], strides = [1, 1]} : vector<8x512xf32> to vector<8x128xf32>
    %334 = math.tanh %333 : vector<8x128xf32>
    %335 = vector.extract_strided_slice %320 {offsets = [0, 384], sizes = [8, 128], strides = [1, 1]} : vector<8x512xf32> to vector<8x128xf32>
    %336 = arith.negf %335 : vector<8x128xf32>
    %337 = math.exp %336 : vector<8x128xf32>
    %cst_100 = arith.constant 1.000000e+00 : f32
    %338 = vector.broadcast %cst_100 : f32 to vector<8x128xf32>
    %339 = arith.addf %338, %337 : vector<8x128xf32>
    %340 = arith.divf %338, %339 : vector<8x128xf32>
    %341 = arith.mulf %332, %313 : vector<8x128xf32>
    %342 = arith.mulf %326, %334 : vector<8x128xf32>
    %343 = arith.addf %341, %342 : vector<8x128xf32>
    %344 = math.tanh %343 : vector<8x128xf32>
    %345 = arith.mulf %340, %344 : vector<8x128xf32>
    %c40_101 = arith.constant 40 : index
    %c0_102 = arith.constant 0 : index
    %346 = vector.load %arg12[%c40_101, %c0_102] : memref<64x512xf32, #tpu.memory_space<vmem>>, vector<8x512xf32>
    %347 = arith.truncf %345 : vector<8x128xf32> to vector<8x128xbf16>
    %c0_103 = arith.constant 0 : index
    %c0_104 = arith.constant 0 : index
    %348 = vector.load %arg6[%c0_103, %c0_104] : memref<128x512xbf16, #tpu.memory_space<vmem>>, vector<128x512xbf16>
    %cst_105 = arith.constant dense<0.000000e+00> : vector<8x512xf32>
    %349 = tpu.matmul %347, %348, %cst_105 {dimension_numbers = #tpu.dot_dimension_numbers<[1], [0], [0], [1], [0, 0, 1, 1], [], []>} : vector<8x128xbf16>, vector<128x512xbf16>, vector<8x512xf32> -> vector<8x512xf32>
    %350 = arith.addf %346, %349 : vector<8x512xf32>
    %351 = vector.extract_strided_slice %350 {offsets = [0, 0], sizes = [8, 128], strides = [1, 1]} : vector<8x512xf32> to vector<8x128xf32>
    %352 = arith.negf %351 : vector<8x128xf32>
    %353 = math.exp %352 : vector<8x128xf32>
    %cst_106 = arith.constant 1.000000e+00 : f32
    %354 = vector.broadcast %cst_106 : f32 to vector<8x128xf32>
    %355 = arith.addf %354, %353 : vector<8x128xf32>
    %356 = arith.divf %354, %355 : vector<8x128xf32>
    %357 = vector.extract_strided_slice %350 {offsets = [0, 128], sizes = [8, 128], strides = [1, 1]} : vector<8x512xf32> to vector<8x128xf32>
    %358 = arith.negf %357 : vector<8x128xf32>
    %359 = math.exp %358 : vector<8x128xf32>
    %cst_107 = arith.constant 1.000000e+00 : f32
    %360 = vector.broadcast %cst_107 : f32 to vector<8x128xf32>
    %361 = arith.addf %360, %359 : vector<8x128xf32>
    %362 = arith.divf %360, %361 : vector<8x128xf32>
    %363 = vector.extract_strided_slice %350 {offsets = [0, 256], sizes = [8, 128], strides = [1, 1]} : vector<8x512xf32> to vector<8x128xf32>
    %364 = math.tanh %363 : vector<8x128xf32>
    %365 = vector.extract_strided_slice %350 {offsets = [0, 384], sizes = [8, 128], strides = [1, 1]} : vector<8x512xf32> to vector<8x128xf32>
    %366 = arith.negf %365 : vector<8x128xf32>
    %367 = math.exp %366 : vector<8x128xf32>
    %cst_108 = arith.constant 1.000000e+00 : f32
    %368 = vector.broadcast %cst_108 : f32 to vector<8x128xf32>
    %369 = arith.addf %368, %367 : vector<8x128xf32>
    %370 = arith.divf %368, %369 : vector<8x128xf32>
    %371 = arith.mulf %362, %343 : vector<8x128xf32>
    %372 = arith.mulf %356, %364 : vector<8x128xf32>
    %373 = arith.addf %371, %372 : vector<8x128xf32>
    %374 = math.tanh %373 : vector<8x128xf32>
    %375 = arith.mulf %370, %374 : vector<8x128xf32>
    %c48 = arith.constant 48 : index
    %c0_109 = arith.constant 0 : index
    %376 = vector.load %arg12[%c48, %c0_109] : memref<64x512xf32, #tpu.memory_space<vmem>>, vector<8x512xf32>
    %377 = arith.truncf %375 : vector<8x128xf32> to vector<8x128xbf16>
    %c0_110 = arith.constant 0 : index
    %c0_111 = arith.constant 0 : index
    %378 = vector.load %arg6[%c0_110, %c0_111] : memref<128x512xbf16, #tpu.memory_space<vmem>>, vector<128x512xbf16>
    %cst_112 = arith.constant dense<0.000000e+00> : vector<8x512xf32>
    %379 = tpu.matmul %377, %378, %cst_112 {dimension_numbers = #tpu.dot_dimension_numbers<[1], [0], [0], [1], [0, 0, 1, 1], [], []>} : vector<8x128xbf16>, vector<128x512xbf16>, vector<8x512xf32> -> vector<8x512xf32>
    %380 = arith.addf %376, %379 : vector<8x512xf32>
    %381 = vector.extract_strided_slice %380 {offsets = [0, 0], sizes = [8, 128], strides = [1, 1]} : vector<8x512xf32> to vector<8x128xf32>
    %382 = arith.negf %381 : vector<8x128xf32>
    %383 = math.exp %382 : vector<8x128xf32>
    %cst_113 = arith.constant 1.000000e+00 : f32
    %384 = vector.broadcast %cst_113 : f32 to vector<8x128xf32>
    %385 = arith.addf %384, %383 : vector<8x128xf32>
    %386 = arith.divf %384, %385 : vector<8x128xf32>
    %387 = vector.extract_strided_slice %380 {offsets = [0, 128], sizes = [8, 128], strides = [1, 1]} : vector<8x512xf32> to vector<8x128xf32>
    %388 = arith.negf %387 : vector<8x128xf32>
    %389 = math.exp %388 : vector<8x128xf32>
    %cst_114 = arith.constant 1.000000e+00 : f32
    %390 = vector.broadcast %cst_114 : f32 to vector<8x128xf32>
    %391 = arith.addf %390, %389 : vector<8x128xf32>
    %392 = arith.divf %390, %391 : vector<8x128xf32>
    %393 = vector.extract_strided_slice %380 {offsets = [0, 256], sizes = [8, 128], strides = [1, 1]} : vector<8x512xf32> to vector<8x128xf32>
    %394 = math.tanh %393 : vector<8x128xf32>
    %395 = vector.extract_strided_slice %380 {offsets = [0, 384], sizes = [8, 128], strides = [1, 1]} : vector<8x512xf32> to vector<8x128xf32>
    %396 = arith.negf %395 : vector<8x128xf32>
    %397 = math.exp %396 : vector<8x128xf32>
    %cst_115 = arith.constant 1.000000e+00 : f32
    %398 = vector.broadcast %cst_115 : f32 to vector<8x128xf32>
    %399 = arith.addf %398, %397 : vector<8x128xf32>
    %400 = arith.divf %398, %399 : vector<8x128xf32>
    %401 = arith.mulf %392, %373 : vector<8x128xf32>
    %402 = arith.mulf %386, %394 : vector<8x128xf32>
    %403 = arith.addf %401, %402 : vector<8x128xf32>
    %404 = math.tanh %403 : vector<8x128xf32>
    %405 = arith.mulf %400, %404 : vector<8x128xf32>
    %c56 = arith.constant 56 : index
    %c0_116 = arith.constant 0 : index
    %406 = vector.load %arg12[%c56, %c0_116] : memref<64x512xf32, #tpu.memory_space<vmem>>, vector<8x512xf32>
    %407 = arith.truncf %405 : vector<8x128xf32> to vector<8x128xbf16>
    %c0_117 = arith.constant 0 : index
    %c0_118 = arith.constant 0 : index
    %408 = vector.load %arg6[%c0_117, %c0_118] : memref<128x512xbf16, #tpu.memory_space<vmem>>, vector<128x512xbf16>
    %cst_119 = arith.constant dense<0.000000e+00> : vector<8x512xf32>
    %409 = tpu.matmul %407, %408, %cst_119 {dimension_numbers = #tpu.dot_dimension_numbers<[1], [0], [0], [1], [0, 0, 1, 1], [], []>} : vector<8x128xbf16>, vector<128x512xbf16>, vector<8x512xf32> -> vector<8x512xf32>
    %410 = arith.addf %406, %409 : vector<8x512xf32>
    %411 = vector.extract_strided_slice %410 {offsets = [0, 0], sizes = [8, 128], strides = [1, 1]} : vector<8x512xf32> to vector<8x128xf32>
    %412 = arith.negf %411 : vector<8x128xf32>
    %413 = math.exp %412 : vector<8x128xf32>
    %cst_120 = arith.constant 1.000000e+00 : f32
    %414 = vector.broadcast %cst_120 : f32 to vector<8x128xf32>
    %415 = arith.addf %414, %413 : vector<8x128xf32>
    %416 = arith.divf %414, %415 : vector<8x128xf32>
    %417 = vector.extract_strided_slice %410 {offsets = [0, 128], sizes = [8, 128], strides = [1, 1]} : vector<8x512xf32> to vector<8x128xf32>
    %418 = arith.negf %417 : vector<8x128xf32>
    %419 = math.exp %418 : vector<8x128xf32>
    %cst_121 = arith.constant 1.000000e+00 : f32
    %420 = vector.broadcast %cst_121 : f32 to vector<8x128xf32>
    %421 = arith.addf %420, %419 : vector<8x128xf32>
    %422 = arith.divf %420, %421 : vector<8x128xf32>
    %423 = vector.extract_strided_slice %410 {offsets = [0, 256], sizes = [8, 128], strides = [1, 1]} : vector<8x512xf32> to vector<8x128xf32>
    %424 = math.tanh %423 : vector<8x128xf32>
    %425 = vector.extract_strided_slice %410 {offsets = [0, 384], sizes = [8, 128], strides = [1, 1]} : vector<8x512xf32> to vector<8x128xf32>
    %426 = arith.negf %425 : vector<8x128xf32>
    %427 = math.exp %426 : vector<8x128xf32>
    %cst_122 = arith.constant 1.000000e+00 : f32
    %428 = vector.broadcast %cst_122 : f32 to vector<8x128xf32>
    %429 = arith.addf %428, %427 : vector<8x128xf32>
    %430 = arith.divf %428, %429 : vector<8x128xf32>
    %431 = arith.mulf %422, %403 : vector<8x128xf32>
    %432 = arith.mulf %416, %424 : vector<8x128xf32>
    %433 = arith.addf %431, %432 : vector<8x128xf32>
    %434 = math.tanh %433 : vector<8x128xf32>
    %435 = arith.mulf %430, %434 : vector<8x128xf32>
    %436 = arith.truncf %435 : vector<8x128xf32> to vector<8x128xbf16>
    %c0_123 = arith.constant 0 : index
    %c0_124 = arith.constant 0 : index
    %437 = vector.load %arg8[%c0_123, %c0_124] : memref<128x128xbf16, #tpu.memory_space<vmem>>, vector<128x128xbf16>
    %cst_125 = arith.constant dense<0.000000e+00> : vector<8x128xf32>
    %438 = tpu.matmul %436, %437, %cst_125 {dimension_numbers = #tpu.dot_dimension_numbers<[1], [0], [0], [1], [0, 0, 1, 1], [], []>} : vector<8x128xbf16>, vector<128x128xbf16>, vector<8x128xf32> -> vector<8x128xf32>
    %c0_126 = arith.constant 0 : index
    %c0_127 = arith.constant 0 : index
    %439 = vector.load %arg9[%c0_126, %c0_127] : memref<1x128xf32, #tpu.memory_space<vmem>>, vector<1x128xf32>
    %440 = vector.broadcast %439 : vector<1x128xf32> to vector<8x128xf32>
    %441 = arith.addf %438, %440 : vector<8x128xf32>
    %cst_128 = arith.constant dense<0xFF800000> : vector<8xf32>
    %442 = vector.multi_reduction <maximumf>, %441, %cst_128 [1] : vector<8x128xf32> to vector<8xf32>
    %443 = vector.shape_cast %442 : vector<8xf32> to vector<8x1xf32>
    %444 = vector.broadcast %443 : vector<8x1xf32> to vector<8x128xf32>
    %445 = arith.subf %441, %444 : vector<8x128xf32>
    %446 = math.exp %445 : vector<8x128xf32>
    %cst_129 = arith.constant dense<0.000000e+00> : vector<8xf32>
    %447 = vector.multi_reduction <add>, %446, %cst_129 [1] : vector<8x128xf32> to vector<8xf32>
    %448 = vector.shape_cast %447 : vector<8xf32> to vector<8x1xf32>
    %449 = math.log %448 : vector<8x1xf32>
    %450 = vector.broadcast %449 : vector<8x1xf32> to vector<8x128xf32>
    %451 = arith.subf %445, %450 : vector<8x128xf32>
    %c0_130 = arith.constant 0 : index
    %c0_131 = arith.constant 0 : index
    %452 = vector.load %arg10[%c0_130, %c0_131] : memref<8x128xf32, #tpu.memory_space<vmem>>, vector<8x128xf32>
    tpu.vector_store %arg10[%c0_130, %c0_131], %451 {strides = array<i32>} : memref<8x128xf32, #tpu.memory_space<vmem>>, vector<8x128xf32>,
    return
  }
}

</mosaic_0001>

<llo_original>
// kernel: conditional_lstm_forward.1
$region0: #{conditional_lstm_forward.1}
  #allocation0 [shape = 'u32[]', space=smem, size = 0x4, offset = 0x4, fixed_abs, tag = 'smem constant byte address 0x4 - core index']
  #allocation1 [shape = 'u32[144,128]{1,0:T(1,128)}', space=vmem, size = 0x12000, scoped, tag = 'internal scratch']
  #allocation2 [shape = 'f32[48,512]{1,0:T(8,128)}', space=vmem, size = 0x18000, scoped, tag = 'scratch operand']
  #allocation3 [shape = 'f32[64,512]{1,0:T(8,128)}', space=vmem, size = 0x20000, scoped, tag = 'scratch operand']
  %s0 = inlined_call_operand.vmem [shape: bf16[48,16], index: 0, kind: input, shape index: {}]
  %s1 = inlined_call_operand.vmem [shape: bf16[64,16], index: 1, kind: input, shape index: {}]
  %s2 = inlined_call_operand.vmem [shape: bf16[16,512], index: 2, kind: input, shape index: {}]
  %s3 = inlined_call_operand.hbm [shape: bf16[128,512], index: 3, kind: input, shape index: {}]
  %s4 = inlined_call_operand.hbm [shape: f32[1,512], index: 4, kind: input, shape index: {}]
  %s5 = inlined_call_operand.vmem [shape: bf16[16,512], index: 5, kind: input, shape index: {}]
  %s6 = inlined_call_operand.hbm [shape: bf16[128,512], index: 6, kind: input, shape index: {}]
  %s7 = inlined_call_operand.hbm [shape: f32[1,512], index: 7, kind: input, shape index: {}]
  %s8 = inlined_call_operand.vmem [shape: bf16[128,128], index: 8, kind: input, shape index: {}]
  %s9 = inlined_call_operand.vmem [shape: f32[1,128], index: 9, kind: input, shape index: {}]
  %s10 = inlined_call_operand.hbm [shape: f32[8,128], index: 10, kind: output, shape index: {}]
  %s11 = sld [smem:[#allocation0]]
  $region66: #{conditional_lstm_forward.1} parent=0
    _
  %s13 = ssub.s32 1, %s11
  %s14 = scalar_select 0, %s13, %s11
  $region1: #{conditional_lstm_forward.1} parent=0
    #allocation4 [shape = 'u8[131072]{0}', space=vmem, size = 0x20000, scoped, tag = 'input window, operand 3, single buffered']
    #allocation5 [shape = 's32[1]{0}', space=sflag, size = 0x4, scoped, tag = 'scoped memory for conditional_lstm_forward.1']
    #allocation6 [shape = 's32[1]{0}', space=sflag, size = 0x4, scoped, tag = 'scoped memory for conditional_lstm_forward.1']
    #allocation7 [shape = 'u8[2048]{0}', space=vmem, size = 0x800, scoped, tag = 'input window, operand 4, single buffered']
    #allocation8 [shape = 's32[1]{0}', space=sflag, size = 0x4, scoped, tag = 'scoped memory for conditional_lstm_forward.1']
    #allocation9 [shape = 'u8[131072]{0}', space=vmem, size = 0x20000, scoped, tag = 'input window, operand 6, single buffered']
    #allocation10 [shape = 'u8[2048]{0}', space=vmem, size = 0x800, scoped, tag = 'input window, operand 7, single buffered']
    #allocation11 [shape = 's32[1]{0}', space=sflag, size = 0x4, scoped, tag = 'scoped memory for conditional_lstm_forward.1']
    #allocation12 [shape = 'u8[4096]{0}', space=vmem, size = 0x1000, scoped, tag = 'output window, operand 0, single buffered']
    %15 = vsyncpa [#allocation5], 0
    %16 = vsyncpa [#allocation8], 0
    %17 = vsyncpa [#allocation11], 0
    %18 = vsyncpa [#allocation6], 0
    // Predicated region
    $region2: #{conditional_lstm_forward.1} parent=1 // pred_check
      _
    $region3: #{conditional_lstm_forward.1} parent=1 // pred_check_branch
      %20 = sbr.rel (0) target = $region5
    $region4: #{conditional_lstm_forward.1} parent=1 // pred_region
      _
    $region5: #{conditional_lstm_forward.1} parent=1 // pred_fallthru
      _
    // Predicated region
    $region6: #{conditional_lstm_forward.1} parent=1 // pred_check
      _
    $region7: #{conditional_lstm_forward.1} parent=1 // pred_check_branch
      %22 = sbr.rel (0) target = $region9
    $region8: #{conditional_lstm_forward.1} parent=1 // pred_region
      _
    $region9: #{conditional_lstm_forward.1} parent=1 // pred_fallthru
      _
    // Predicated region
    $region10: #{conditional_lstm_forward.1} parent=1 // pred_check
      _
    $region11: #{conditional_lstm_forward.1} parent=1 // pred_check_branch
      %24 = sbr.rel (0) target = $region13
    $region12: #{conditional_lstm_forward.1} parent=1 // pred_region
      _
    $region13: #{conditional_lstm_forward.1} parent=1 // pred_fallthru
      _
    // Predicated region
    $region14: #{conditional_lstm_forward.1} parent=1 // pred_check
      _
    $region15: #{conditional_lstm_forward.1} parent=1 // pred_check_branch
      %26 = sbr.rel (0) target = $region17
    $region16: #{conditional_lstm_forward.1} parent=1 // pred_region
      %s28 = ssub.s32 4096, 4096
      %29 = vsyncadd [#allocation5], %s28
      %s30 = sshll.u32 [#allocation4], 4
      %s31 = int_to_ptr.vmem [resolvable:$true] %s30
      %36 = dma.hbm_to_vmem [thread:$0]  %s3, 4096, %s31, [#allocation5], 256, 256, 16
    $region17: #{conditional_lstm_forward.1} parent=1 // pred_fallthru
      _
    // Predicated region
    $region18: #{conditional_lstm_forward.1} parent=1 // pred_check
      _
    $region19: #{conditional_lstm_forward.1} parent=1 // pred_check_branch
      %38 = sbr.rel (0) target = $region21
    $region20: #{conditional_lstm_forward.1} parent=1 // pred_region
      %s40 = ssub.s32 64, 64
      %41 = vsyncadd [#allocation8], %s40
      %s43 = sshll.u32 [#allocation7], 4
      %s44 = int_to_ptr.vmem [resolvable:$true] %s43
      %46 = dma.hbm_to_vmem [thread:$0]  %s4, 64, %s44, [#allocation8]
    $region21: #{conditional_lstm_forward.1} parent=1 // pred_fallthru
      _
    // Predicated region
    $region22: #{conditional_lstm_forward.1} parent=1 // pred_check
      _
    $region23: #{conditional_lstm_forward.1} parent=1 // pred_check_branch
      %48 = sbr.rel (0) target = $region25
    $region24: #{conditional_lstm_forward.1} parent=1 // pred_region
      _
    $region25: #{conditional_lstm_forward.1} parent=1 // pred_fallthru
      _
    // Predicated region
    $region26: #{conditional_lstm_forward.1} parent=1 // pred_check
      _
    $region27: #{conditional_lstm_forward.1} parent=1 // pred_check_branch
      %50 = sbr.rel (0) target = $region29
    $region28: #{conditional_lstm_forward.1} parent=1 // pred_region
      %s52 = ssub.s32 4096, 4096
      %53 = vsyncadd [#allocation8], %s52
      %s54 = sshll.u32 [#allocation9], 4
      %s55 = int_to_ptr.vmem [resolvable:$true] %s54
      %60 = dma.hbm_to_vmem [thread:$0]  %s6, 4096, %s55, [#allocation8], 256, 256, 16
    $region29: #{conditional_lstm_forward.1} parent=1 // pred_fallthru
      _
    // Predicated region
    $region30: #{conditional_lstm_forward.1} parent=1 // pred_check
      _
    $region31: #{conditional_lstm_forward.1} parent=1 // pred_check_branch
      %62 = sbr.rel (0) target = $region33
    $region32: #{conditional_lstm_forward.1} parent=1 // pred_region
      %s64 = ssub.s32 64, 64
      %65 = vsyncadd [#allocation11], %s64
      %s67 = sshll.u32 [#allocation10], 4
      %s68 = int_to_ptr.vmem [resolvable:$true] %s67
      %70 = dma.hbm_to_vmem [thread:$0]  %s7, 64, %s68, [#allocation11]
    $region33: #{conditional_lstm_forward.1} parent=1 // pred_fallthru
      _
    // Predicated region
    $region34: #{conditional_lstm_forward.1} parent=1 // pred_check
      _
    $region35: #{conditional_lstm_forward.1} parent=1 // pred_check_branch
      %72 = sbr.rel (0) target = $region37
    $region36: #{conditional_lstm_forward.1} parent=1 // pred_region
      _
    $region37: #{conditional_lstm_forward.1} parent=1 // pred_fallthru
      _
    // Predicated region
    $region38: #{conditional_lstm_forward.1} parent=1 // pred_check
      _
    $region39: #{conditional_lstm_forward.1} parent=1 // pred_check_branch
      %74 = sbr.rel (0) target = $region41
    $region40: #{conditional_lstm_forward.1} parent=1 // pred_region
      _
    $region41: #{conditional_lstm_forward.1} parent=1 // pred_fallthru
      _
    // Predicated region
    $region42: #{conditional_lstm_forward.1} parent=1 // pred_check
      _
    $region43: #{conditional_lstm_forward.1} parent=1 // pred_check_branch
      %76 = sbr.rel (0) target = $region45
    $region44: #{conditional_lstm_forward.1} parent=1 // pred_region
      %77 = dma.done [#allocation5], 4096
    $region45: #{conditional_lstm_forward.1} parent=1 // pred_fallthru
      _
    // Predicated region
    $region46: #{conditional_lstm_forward.1} parent=1 // pred_check
      _
    $region47: #{conditional_lstm_forward.1} parent=1 // pred_check_branch
      %79 = sbr.rel (0) target = $region49
    $region48: #{conditional_lstm_forward.1} parent=1 // pred_region
      %80 = dma.done [#allocation8], 64
    $region49: #{conditional_lstm_forward.1} parent=1 // pred_fallthru
      _
    // Predicated region
    $region50: #{conditional_lstm_forward.1} parent=1 // pred_check
      _
    $region51: #{conditional_lstm_forward.1} parent=1 // pred_check_branch
      %82 = sbr.rel (0) target = $region53
    $region52: #{conditional_lstm_forward.1} parent=1 // pred_region
      %83 = dma.done [#allocation8], 4096
    $region53: #{conditional_lstm_forward.1} parent=1 // pred_fallthru
      _
    // Predicated region
    $region54: #{conditional_lstm_forward.1} parent=1 // pred_check
      _
    $region55: #{conditional_lstm_forward.1} parent=1 // pred_check_branch
      %85 = sbr.rel (0) target = $region57
    $region56: #{conditional_lstm_forward.1} parent=1 // pred_region
      %86 = dma.done [#allocation11], 64
    $region57: #{conditional_lstm_forward.1} parent=1 // pred_fallthru
      _
    %v88 = vld [vmem:[%s0] sm:$0xf]
    %v89 = vld [vmem:[%s0 + $0x4] sm:$0xf]
    %v90 = vld [vmem:[%s0 + $0x8] sm:$0xf]
    %v91 = vld [vmem:[%s0 + $0xc] sm:$0xf]
    %v92 = vld [vmem:[%s0 + $0x10] sm:$0xf]
    %v93 = vld [vmem:[%s0 + $0x14] sm:$0xf]
    %v94 = vld [vmem:[%s2] sm:$0xff]
    %v95 = vld [vmem:[%s2 + $0x8] sm:$0xff]
    %v96 = vld [vmem:[%s2 + $0x10] sm:$0xff]
    %v97 = vld [vmem:[%s2 + $0x18] sm:$0xff]
    %v98 = vld [vmem:[#allocation7] sm:$0xf]
    %v100 = vlaneseq
    %v101 = vshrl.u32 %v100, 7
    %v102 = vsub.s32 0, %v101
    %v103 = vrot.slane %v98, %v102
    %v104 = vlaneseq
    %v105 = vshrl.u32 %v104, 7
    %v106 = vsub.s32 1, %v105
    %v107 = vrot.slane %v98, %v106
    %v108 = vlaneseq
    %v109 = vshrl.u32 %v108, 7
    %v110 = vsub.s32 2, %v109
    %v111 = vrot.slane %v98, %v110
    %v112 = vlaneseq
    %v113 = vshrl.u32 %v112, 7
    %v114 = vsub.s32 3, %v113
    %v115 = vrot.slane %v98, %v114
    %v126 = vunpack.c.l.b16 %v88
    %v127 = vunpack.c.l.b16 %v89
    %v128 = vunpack.c.l.b16 %v90
    %v129 = vunpack.c.l.b16 %v91
    %v130 = vunpack.c.l.b16 %v92
    %v131 = vunpack.c.l.b16 %v93
    %v132 = vpack.c.b16 %v127, %v126
    %v133 = vpack.c.b16 %v129, %v128
    %v134 = vpack.c.b16 %v131, %v130
    %v139 = vunpack.c.l.b16 %v94
    %v140 = vunpack.c.h.b16 %v94
    %v141 = vunpack.c.l.b16 %v95
    %v142 = vunpack.c.h.b16 %v95
    %v143 = vunpack.c.l.b16 %v96
    %v144 = vunpack.c.h.b16 %v96
    %v145 = vunpack.c.l.b16 %v97
    %v146 = vunpack.c.h.b16 %v97
    %v147 = vpack.c.b16 %v143, %v139
    %v148 = vpack.c.b16 %v144, %v140
    %v149 = vpack.c.b16 %v145, %v141
    %v150 = vpack.c.b16 %v146, %v142
    %vm155 = vcmask 130048
    %v157 = vsel %vm155, %v132, 0
    %v160 = vsel %vm155, %v133, 0
    %v163 = vsel %vm155, %v134, 0
    %165 = vmatprep.subr.bf16.mxu0 %v148
    %166 = vmatpush1.bf16.msra.mxu0 %v147
    %167 = vmatprep.subr.bf16.mxu0 0
    %168 = vmatpush1.bf16.msra.mxu0 0
    %169 = vmatprep.subr.bf16.mxu0 0
    %170 = vmatpush1.bf16.msra.mxu0 0
    %171 = vmatprep.subr.bf16.mxu0 0
    %172 = vmatpush1.bf16.msra.mxu0 0
    %173 = vmatprep.subr.bf16.mxu0 0
    %174 = vmatpush1.bf16.msra.mxu0 0
    %175 = vmatprep.subr.bf16.mxu0 0
    %176 = vmatpush1.bf16.msra.mxu0 0
    %177 = vmatprep.subr.bf16.mxu0 0
    %178 = vmatpush1.bf16.msra.mxu0 0
    %179 = vmatprep.subr.bf16.mxu0 0
    %180 = vmatpush1.bf16.msra.mxu0 0
    %181 = vmatprep.subr.bf16.mxu0 0
    %182 = vmatpush1.bf16.msra.mxu0 0
    %183 = vmatprep.subr.bf16.mxu0 0
    %184 = vmatpush1.bf16.msra.mxu0 0
    %185 = vmatprep.subr.bf16.mxu0 0
    %186 = vmatpush1.bf16.msra.mxu0 0
    %187 = vmatprep.subr.bf16.mxu0 0
    %188 = vmatpush1.bf16.msra.mxu0 0
    %189 = vmatprep.subr.bf16.mxu0 0
    %190 = vmatpush1.bf16.msra.mxu0 0
    %191 = vmatprep.subr.bf16.mxu0 0
    %192 = vmatpush1.bf16.msra.mxu0 0
    %193 = vmatprep.subr.bf16.mxu0 0
    %194 = vmatpush1.bf16.msra.mxu0 0
    %195 = vmatprep.subr.bf16.mxu0 0
    %196 = vmatpush1.bf16.msra.mxu0 0
    %197 = vmatprep.mubr.bf16.mxu0 0
    %198 = vmatmul.mubr.bf16.gmra.mrb[0].mxu0 %v157
    %v199 = vpop.f32.mrb[0].mxu0
    %v200 = vadd.f32 %v103, %v199
    %v201 = vpop.f32.mrb[0].mxu0
    %v202 = vadd.f32 %v107, %v201
    %v203 = vpop.f32.mrb[0].mxu0
    %v204 = vadd.f32 %v103, %v203
    %v205 = vpop.f32.mrb[0].mxu0
    %v206 = vadd.f32 %v107, %v205
    %207 = vmatprep.mubr.bf16.mxu0 0
    %208 = vmatmul.mubr.bf16.gmra.mrb[0].mxu0 %v160
    %v209 = vpop.f32.mrb[0].mxu0
    %v210 = vadd.f32 %v103, %v209
    %v211 = vpop.f32.mrb[0].mxu0
    %v212 = vadd.f32 %v107, %v211
    %v213 = vpop.f32.mrb[0].mxu0
    %v214 = vadd.f32 %v103, %v213
    %v215 = vpop.f32.mrb[0].mxu0
    %v216 = vadd.f32 %v107, %v215
    %217 = vmatprep.mubr.bf16.mxu0 0
    %218 = vmatmul.mubr.bf16.gmra.mrb[0].mxu0 %v163
    %v219 = vpop.f32.mrb[0].mxu0
    %v220 = vadd.f32 %v103, %v219
    %v221 = vpop.f32.mrb[0].mxu0
    %v222 = vadd.f32 %v107, %v221
    %v223 = vpop.f32.mrb[0].mxu0
    %v224 = vadd.f32 %v103, %v223
    %v225 = vpop.f32.mrb[0].mxu0
    %v226 = vadd.f32 %v107, %v225
    %227 = vdwg.mxu0
    %228 = vmatprep.subr.bf16.mxu0 %v150
    %229 = vmatpush1.bf16.msra.mxu0 %v149
    %230 = vmatprep.subr.bf16.mxu0 0
    %231 = vmatpush1.bf16.msra.mxu0 0
    %232 = vmatprep.subr.bf16.mxu0 0
    %233 = vmatpush1.bf16.msra.mxu0 0
    %234 = vmatprep.subr.bf16.mxu0 0
    %235 = vmatpush1.bf16.msra.mxu0 0
    %236 = vmatprep.subr.bf16.mxu0 0
    %237 = vmatpush1.bf16.msra.mxu0 0
    %238 = vmatprep.subr.bf16.mxu0 0
    %239 = vmatpush1.bf16.msra.mxu0 0
    %240 = vmatprep.subr.bf16.mxu0 0
    %241 = vmatpush1.bf16.msra.mxu0 0
    %242 = vmatprep.subr.bf16.mxu0 0
    %243 = vmatpush1.bf16.msra.mxu0 0
    %244 = vmatprep.subr.bf16.mxu0 0
    %245 = vmatpush1.bf16.msra.mxu0 0
    %246 = vmatprep.subr.bf16.mxu0 0
    %247 = vmatpush1.bf16.msra.mxu0 0
    %248 = vmatprep.subr.bf16.mxu0 0
    %249 = vmatpush1.bf16.msra.mxu0 0
    %250 = vmatprep.subr.bf16.mxu0 0
    %251 = vmatpush1.bf16.msra.mxu0 0
    %252 = vmatprep.subr.bf16.mxu0 0
    %253 = vmatpush1.bf16.msra.mxu0 0
    %254 = vmatprep.subr.bf16.mxu0 0
    %255 = vmatpush1.bf16.msra.mxu0 0
    %256 = vmatprep.subr.bf16.mxu0 0
    %257 = vmatpush1.bf16.msra.mxu0 0
    %258 = vmatprep.subr.bf16.mxu0 0
    %259 = vmatpush1.bf16.msra.mxu0 0
    %260 = vmatprep.mubr.bf16.mxu0 0
    %261 = vmatmul.mubr.bf16.gmra.mrb[0].mxu0 %v157
    %v262 = vpop.f32.mrb[0].mxu0
    %v263 = vadd.f32 %v111, %v262
    %v264 = vpop.f32.mrb[0].mxu0
    %v265 = vadd.f32 %v115, %v264
    %v266 = vpop.f32.mrb[0].mxu0
    %v267 = vadd.f32 %v111, %v266
    %v268 = vpop.f32.mrb[0].mxu0
    %v269 = vadd.f32 %v115, %v268
    %270 = vmatprep.mubr.bf16.mxu0 0
    %271 = vmatmul.mubr.bf16.gmra.mrb[0].mxu0 %v160
    %v272 = vpop.f32.mrb[0].mxu0
    %v273 = vadd.f32 %v111, %v272
    %v274 = vpop.f32.mrb[0].mxu0
    %v275 = vadd.f32 %v115, %v274
    %v276 = vpop.f32.mrb[0].mxu0
    %v277 = vadd.f32 %v111, %v276
    %v278 = vpop.f32.mrb[0].mxu0
    %v279 = vadd.f32 %v115, %v278
    %280 = vmatprep.mubr.bf16.mxu0 0
    %281 = vmatmul.mubr.bf16.gmra.mrb[0].mxu0 %v163
    %v282 = vpop.f32.mrb[0].mxu0
    %v283 = vadd.f32 %v111, %v282
    %v284 = vpop.f32.mrb[0].mxu0
    %v285 = vadd.f32 %v115, %v284
    %v286 = vpop.f32.mrb[0].mxu0
    %v287 = vadd.f32 %v111, %v286
    %v288 = vpop.f32.mrb[0].mxu0
    %v289 = vadd.f32 %v115, %v288
    %290 = vdwg.mxu0
    %291 = vst [vmem:[#allocation2] sm:$0xff] %v200
    %292 = vst [vmem:[#allocation2 + $0x8] sm:$0xff] %v202
    %293 = vst [vmem:[#allocation2 + $0x10] sm:$0xff] %v263
    %294 = vst [vmem:[#allocation2 + $0x18] sm:$0xff] %v265
    %295 = vst [vmem:[#allocation2 + $0x20] sm:$0xff] %v204
    %296 = vst [vmem:[#allocation2 + $0x28] sm:$0xff] %v206
    %297 = vst [vmem:[#allocation2 + $0x30] sm:$0xff] %v267
    %298 = vst [vmem:[#allocation2 + $0x38] sm:$0xff] %v269
    %299 = vst [vmem:[#allocation2 + $0x40] sm:$0xff] %v210
    %300 = vst [vmem:[#allocation2 + $0x48] sm:$0xff] %v212
    %301 = vst [vmem:[#allocation2 + $0x50] sm:$0xff] %v273
    %302 = vst [vmem:[#allocation2 + $0x58] sm:$0xff] %v275
    %303 = vst [vmem:[#allocation2 + $0x60] sm:$0xff] %v214
    %304 = vst [vmem:[#allocation2 + $0x68] sm:$0xff] %v216
    %305 = vst [vmem:[#allocation2 + $0x70] sm:$0xff] %v277
    %306 = vst [vmem:[#allocation2 + $0x78] sm:$0xff] %v279
    %307 = vst [vmem:[#allocation2 + $0x80] sm:$0xff] %v220
    %308 = vst [vmem:[#allocation2 + $0x88] sm:$0xff] %v222
    %309 = vst [vmem:[#allocation2 + $0x90] sm:$0xff] %v283
    %310 = vst [vmem:[#allocation2 + $0x98] sm:$0xff] %v285
    %311 = vst [vmem:[#allocation2 + $0xa0] sm:$0xff] %v224
    %312 = vst [vmem:[#allocation2 + $0xa8] sm:$0xff] %v226
    %313 = vst [vmem:[#allocation2 + $0xb0] sm:$0xff] %v287
    %314 = vst [vmem:[#allocation2 + $0xb8] sm:$0xff] %v289
    %v315 = vld [vmem:[#allocation2] sm:$0xff]
    %v316 = vld [vmem:[#allocation2 + $0x8] sm:$0xff]
    %v317 = vld [vmem:[#allocation2 + $0x10] sm:$0xff]
    %v318 = vld [vmem:[#allocation2 + $0x18] sm:$0xff]
    %v319 = vld [vmem:[#allocation4] sm:$0xff]
    %v320 = vld [vmem:[#allocation4 + $0x8] sm:$0xff]
    %v321 = vld [vmem:[#allocation4 + $0x10] sm:$0xff]
    %v322 = vld [vmem:[#allocation4 + $0x18] sm:$0xff]
    %v323 = vld [vmem:[#allocation4 + $0x20] sm:$0xff]
    %v324 = vld [vmem:[#allocation4 + $0x28] sm:$0xff]
    %v325 = vld [vmem:[#allocation4 + $0x30] sm:$0xff]
    %v326 = vld [vmem:[#allocation4 + $0x38] sm:$0xff]
    %v327 = vld [vmem:[#allocation4 + $0x40] sm:$0xff]
    %v328 = vld [vmem:[#allocation4 + $0x48] sm:$0xff]
    %v329 = vld [vmem:[#allocation4 + $0x50] sm:$0xff]
    %v330 = vld [vmem:[#allocation4 + $0x58] sm:$0xff]
    %v331 = vld [vmem:[#allocation4 + $0x60] sm:$0xff]
    %v332 = vld [vmem:[#allocation4 + $0x68] sm:$0xff]
    %v333 = vld [vmem:[#allocation4 + $0x70] sm:$0xff]
    %v334 = vld [vmem:[#allocation4 + $0x78] sm:$0xff]
    %v335 = vld [vmem:[#allocation4 + $0x80] sm:$0xff]
    %v336 = vld [vmem:[#allocation4 + $0x88] sm:$0xff]
    %v337 = vld [vmem:[#allocation4 + $0x90] sm:$0xff]
    %v338 = vld [vmem:[#allocation4 + $0x98] sm:$0xff]
    %v339 = vld [vmem:[#allocation4 + $0xa0] sm:$0xff]
    %v340 = vld [vmem:[#allocation4 + $0xa8] sm:$0xff]
    %v341 = vld [vmem:[#allocation4 + $0xb0] sm:$0xff]
    %v342 = vld [vmem:[#allocation4 + $0xb8] sm:$0xff]
    %v343 = vld [vmem:[#allocation4 + $0xc0] sm:$0xff]
    %v344 = vld [vmem:[#allocation4 + $0xc8] sm:$0xff]
    %v345 = vld [vmem:[#allocation4 + $0xd0] sm:$0xff]
    %v346 = vld [vmem:[#allocation4 + $0xd8] sm:$0xff]
    %v347 = vld [vmem:[#allocation4 + $0xe0] sm:$0xff]
    %v348 = vld [vmem:[#allocation4 + $0xe8] sm:$0xff]
    %v349 = vld [vmem:[#allocation4 + $0xf0] sm:$0xff]
    %v350 = vld [vmem:[#allocation4 + $0xf8] sm:$0xff]
    %v383 = vunpack.c.l.b16 %v319
    %v384 = vunpack.c.h.b16 %v319
    %v385 = vunpack.c.l.b16 %v320
    %v386 = vunpack.c.h.b16 %v320
    %v387 = vunpack.c.l.b16 %v321
    %v388 = vunpack.c.h.b16 %v321
    %v389 = vunpack.c.l.b16 %v322
    %v390 = vunpack.c.h.b16 %v322
    %v391 = vunpack.c.l.b16 %v323
    %v392 = vunpack.c.h.b16 %v323
    %v393 = vunpack.c.l.b16 %v324
    %v394 = vunpack.c.h.b16 %v324
    %v395 = vunpack.c.l.b16 %v325
    %v396 = vunpack.c.h.b16 %v325
    %v397 = vunpack.c.l.b16 %v326
    %v398 = vunpack.c.h.b16 %v326
    %v399 = vunpack.c.l.b16 %v327
    %v400 = vunpack.c.h.b16 %v327
    %v401 = vunpack.c.l.b16 %v328
    %v402 = vunpack.c.h.b16 %v328
    %v403 = vunpack.c.l.b16 %v329
    %v404 = vunpack.c.h.b16 %v329
    %v405 = vunpack.c.l.b16 %v330
    %v406 = vunpack.c.h.b16 %v330
    %v407 = vunpack.c.l.b16 %v331
    %v408 = vunpack.c.h.b16 %v331
    %v409 = vunpack.c.l.b16 %v332
    %v410 = vunpack.c.h.b16 %v332
    %v411 = vunpack.c.l.b16 %v333
    %v412 = vunpack.c.h.b16 %v333
    %v413 = vunpack.c.l.b16 %v334
    %v414 = vunpack.c.h.b16 %v334
    %v415 = vunpack.c.l.b16 %v335
    %v416 = vunpack.c.h.b16 %v335
    %v417 = vunpack.c.l.b16 %v336
    %v418 = vunpack.c.h.b16 %v336
    %v419 = vunpack.c.l.b16 %v337
    %v420 = vunpack.c.h.b16 %v337
    %v421 = vunpack.c.l.b16 %v338
    %v422 = vunpack.c.h.b16 %v338
    %v423 = vunpack.c.l.b16 %v339
    %v424 = vunpack.c.h.b16 %v339
    %v425 = vunpack.c.l.b16 %v340
    %v426 = vunpack.c.h.b16 %v340
    %v427 = vunpack.c.l.b16 %v341
    %v428 = vunpack.c.h.b16 %v341
    %v429 = vunpack.c.l.b16 %v342
    %v430 = vunpack.c.h.b16 %v342
    %v431 = vunpack.c.l.b16 %v343
    %v432 = vunpack.c.h.b16 %v343
    %v433 = vunpack.c.l.b16 %v344
    %v434 = vunpack.c.h.b16 %v344
    %v435 = vunpack.c.l.b16 %v345
    %v436 = vunpack.c.h.b16 %v345
    %v437 = vunpack.c.l.b16 %v346
    %v438 = vunpack.c.h.b16 %v346
    %v439 = vunpack.c.l.b16 %v347
    %v440 = vunpack.c.h.b16 %v347
    %v441 = vunpack.c.l.b16 %v348
    %v442 = vunpack.c.h.b16 %v348
    %v443 = vunpack.c.l.b16 %v349
    %v444 = vunpack.c.h.b16 %v349
    %v445 = vunpack.c.l.b16 %v350
    %v446 = vunpack.c.h.b16 %v350
    %v447 = vpack.c.b16 %v387, %v383
    %v448 = vpack.c.b16 %v388, %v384
    %v449 = vpack.c.b16 %v389, %v385
    %v450 = vpack.c.b16 %v390, %v386
    %v451 = vpack.c.b16 %v395, %v391
    %v452 = vpack.c.b16 %v396, %v392
    %v453 = vpack.c.b16 %v397, %v393
    %v454 = vpack.c.b16 %v398, %v394
    %v455 = vpack.c.b16 %v403, %v399
    %v456 = vpack.c.b16 %v404, %v400
    %v457 = vpack.c.b16 %v405, %v401
    %v458 = vpack.c.b16 %v406, %v402
    %v459 = vpack.c.b16 %v411, %v407
    %v460 = vpack.c.b16 %v412, %v408
    %v461 = vpack.c.b16 %v413, %v409
    %v462 = vpack.c.b16 %v414, %v410
    %v463 = vpack.c.b16 %v419, %v415
    %v464 = vpack.c.b16 %v420, %v416
    %v465 = vpack.c.b16 %v421, %v417
    %v466 = vpack.c.b16 %v422, %v418
    %v467 = vpack.c.b16 %v427, %v423
    %v468 = vpack.c.b16 %v428, %v424
    %v469 = vpack.c.b16 %v429, %v425
    %v470 = vpack.c.b16 %v430, %v426
    %v471 = vpack.c.b16 %v435, %v431
    %v472 = vpack.c.b16 %v436, %v432
    %v473 = vpack.c.b16 %v437, %v433
    %v474 = vpack.c.b16 %v438, %v434
    %v475 = vpack.c.b16 %v443, %v439
    %v476 = vpack.c.b16 %v444, %v440
    %v477 = vpack.c.b16 %v445, %v441
    %v478 = vpack.c.b16 %v446, %v442
    %511 = vmatprep.subr.bf16.mxu0 %v448
    %512 = vmatpush1.bf16.msra.mxu0 %v447
    %513 = vmatprep.subr.bf16.mxu0 %v452
    %514 = vmatpush1.bf16.msra.mxu0 %v451
    %515 = vmatprep.subr.bf16.mxu0 %v456
    %516 = vmatpush1.bf16.msra.mxu0 %v455
    %517 = vmatprep.subr.bf16.mxu0 %v460
    %518 = vmatpush1.bf16.msra.mxu0 %v459
    %519 = vmatprep.subr.bf16.mxu0 %v464
    %520 = vmatpush1.bf16.msra.mxu0 %v463
    %521 = vmatprep.subr.bf16.mxu0 %v468
    %522 = vmatpush1.bf16.msra.mxu0 %v467
    %523 = vmatprep.subr.bf16.mxu0 %v472
    %524 = vmatpush1.bf16.msra.mxu0 %v471
    %525 = vmatprep.subr.bf16.mxu0 %v476
    %526 = vmatpush1.bf16.msra.mxu0 %v475
    %527 = vmatprep.subr.bf16.mxu0 0
    %528 = vmatpush1.bf16.msra.mxu0 0
    %529 = vmatprep.subr.bf16.mxu0 0
    %530 = vmatpush1.bf16.msra.mxu0 0
    %531 = vmatprep.subr.bf16.mxu0 0
    %532 = vmatpush1.bf16.msra.mxu0 0
    %533 = vmatprep.subr.bf16.mxu0 0
    %534 = vmatpush1.bf16.msra.mxu0 0
    %535 = vmatprep.subr.bf16.mxu0 0
    %536 = vmatpush1.bf16.msra.mxu0 0
    %537 = vmatprep.subr.bf16.mxu0 0
    %538 = vmatpush1.bf16.msra.mxu0 0
    %539 = vmatprep.subr.bf16.mxu0 0
    %540 = vmatpush1.bf16.msra.mxu0 0
    %541 = vmatprep.subr.bf16.mxu0 0
    %542 = vmatpush1.bf16.msra.mxu0 0
    %543 = vmatprep.mubr.bf16.mxu0 0
    %544 = vmatmul.mubr.bf16.gmra.mrb[0].mxu0 0
    %v545 = vpop.f32.mrb[0].mxu0
    %v546 = vadd.f32 0.0, %v545
    %v547 = vpop.f32.mrb[0].mxu0
    %v548 = vadd.f32 0.0, %v547
    %v549 = vpop.f32.mrb[0].mxu0
    %v550 = vpop.f32.mrb[0].mxu0
    %551 = vdwg.mxu0
    %552 = vmatprep.subr.bf16.mxu0 %v450
    %553 = vmatpush1.bf16.msra.mxu0 %v449
    %554 = vmatprep.subr.bf16.mxu0 %v454
    %555 = vmatpush1.bf16.msra.mxu0 %v453
    %556 = vmatprep.subr.bf16.mxu0 %v458
    %557 = vmatpush1.bf16.msra.mxu0 %v457
    %558 = vmatprep.subr.bf16.mxu0 %v462
    %559 = vmatpush1.bf16.msra.mxu0 %v461
    %560 = vmatprep.subr.bf16.mxu0 %v466
    %561 = vmatpush1.bf16.msra.mxu0 %v465
    %562 = vmatprep.subr.bf16.mxu0 %v470
    %563 = vmatpush1.bf16.msra.mxu0 %v469
    %564 = vmatprep.subr.bf16.mxu0 %v474
    %565 = vmatpush1.bf16.msra.mxu0 %v473
    %566 = vmatprep.subr.bf16.mxu0 %v478
    %567 = vmatpush1.bf16.msra.mxu0 %v477
    %568 = vmatprep.subr.bf16.mxu0 0
    %569 = vmatpush1.bf16.msra.mxu0 0
    %570 = vmatprep.subr.bf16.mxu0 0
    %571 = vmatpush1.bf16.msra.mxu0 0
    %572 = vmatprep.subr.bf16.mxu0 0
    %573 = vmatpush1.bf16.msra.mxu0 0
    %574 = vmatprep.subr.bf16.mxu0 0
    %575 = vmatpush1.bf16.msra.mxu0 0
    %576 = vmatprep.subr.bf16.mxu0 0
    %577 = vmatpush1.bf16.msra.mxu0 0
    %578 = vmatprep.subr.bf16.mxu0 0
    %579 = vmatpush1.bf16.msra.mxu0 0
    %580 = vmatprep.subr.bf16.mxu0 0
    %581 = vmatpush1.bf16.msra.mxu0 0
    %582 = vmatprep.subr.bf16.mxu0 0
    %583 = vmatpush1.bf16.msra.mxu0 0
    %584 = vmatprep.mubr.bf16.mxu0 0
    %585 = vmatmul.mubr.bf16.gmra.mrb[0].mxu0 0
    %v586 = vpop.f32.mrb[0].mxu0
    %v587 = vadd.f32 0.0, %v586
    %v588 = vpop.f32.mrb[0].mxu0
    %v589 = vadd.f32 0.0, %v588
    %v590 = vpop.f32.mrb[0].mxu0
    %v591 = vpop.f32.mrb[0].mxu0
    %592 = vdwg.mxu0
    %v593 = vadd.f32 %v315, %v546
    %v594 = vadd.f32 %v316, %v548
    %v595 = vadd.f32 %v317, %v587
    %v596 = vadd.f32 %v318, %v589
    %v597 = vxor.u32 %v593, 2147483648
    %v598 = vmul.f32 %v597, 1.442695
    %v599 = vpow.pop %v598
    %v600 = vadd.f32 %v599, 1.0
    %v601 = vrcp.pop %v600
    %v602 = vmul.f32 1.0, %v601
    %v603 = vxor.u32 %v594, 2147483648
    %v604 = vmul.f32 %v603, 1.442695
    %v605 = vpow.pop %v604
    %v606 = vadd.f32 %v605, 1.0
    %v607 = vrcp.pop %v606
    %v608 = vmul.f32 1.0, %v607
    %v609 = vtanh.pop %v595
    %v610 = vxor.u32 %v596, 2147483648
    %v611 = vmul.f32 %v610, 1.442695
    %v612 = vpow.pop %v611
    %v613 = vadd.f32 %v612, 1.0
    %v614 = vrcp.pop %v613
    %v615 = vmul.f32 1.0, %v614
    %v616 = vmul.f32 %v608, 0.0
    %v617 = vmul.f32 %v602, %v609
    %v618 = vadd.f32 %v616, %v617
    %v619 = vtanh.pop %v618
    %v620 = vmul.f32 %v615, %v619
    %v621 = vld [vmem:[#allocation2 + $0x20] sm:$0xff]
    %v622 = vld [vmem:[#allocation2 + $0x28] sm:$0xff]
    %v623 = vld [vmem:[#allocation2 + $0x30] sm:$0xff]
    %v624 = vld [vmem:[#allocation2 + $0x38] sm:$0xff]
    %v625 = vpack.c.bf16 %v620, %v620
    %626 = vmatprep.subr.bf16.mxu0 %v448
    %627 = vmatpush1.bf16.msra.mxu0 %v447
    %628 = vmatprep.subr.bf16.mxu0 %v452
    %629 = vmatpush1.bf16.msra.mxu0 %v451
    %630 = vmatprep.subr.bf16.mxu0 %v456
    %631 = vmatpush1.bf16.msra.mxu0 %v455
    %632 = vmatprep.subr.bf16.mxu0 %v460
    %633 = vmatpush1.bf16.msra.mxu0 %v459
    %634 = vmatprep.subr.bf16.mxu0 %v464
    %635 = vmatpush1.bf16.msra.mxu0 %v463
    %636 = vmatprep.subr.bf16.mxu0 %v468
    %637 = vmatpush1.bf16.msra.mxu0 %v467
    %638 = vmatprep.subr.bf16.mxu0 %v472
    %639 = vmatpush1.bf16.msra.mxu0 %v471
    %640 = vmatprep.subr.bf16.mxu0 %v476
    %641 = vmatpush1.bf16.msra.mxu0 %v475
    %642 = vmatprep.subr.bf16.mxu0 0
    %643 = vmatpush1.bf16.msra.mxu0 0
    %644 = vmatprep.subr.bf16.mxu0 0
    %645 = vmatpush1.bf16.msra.mxu0 0
    %646 = vmatprep.subr.bf16.mxu0 0
    %647 = vmatpush1.bf16.msra.mxu0 0
    %648 = vmatprep.subr.bf16.mxu0 0
    %649 = vmatpush1.bf16.msra.mxu0 0
    %650 = vmatprep.subr.bf16.mxu0 0
    %651 = vmatpush1.bf16.msra.mxu0 0
    %652 = vmatprep.subr.bf16.mxu0 0
    %653 = vmatpush1.bf16.msra.mxu0 0
    %654 = vmatprep.subr.bf16.mxu0 0
    %655 = vmatpush1.bf16.msra.mxu0 0
    %656 = vmatprep.subr.bf16.mxu0 0
    %657 = vmatpush1.bf16.msra.mxu0 0
    %658 = vmatprep.mubr.bf16.mxu0 0
    %659 = vmatmul.mubr.bf16.gmra.mrb[0].mxu0 %v625
    %v660 = vpop.f32.mrb[0].mxu0
    %v661 = vadd.f32 0.0, %v660
    %v662 = vpop.f32.mrb[0].mxu0
    %v663 = vadd.f32 0.0, %v662
    %v664 = vpop.f32.mrb[0].mxu0
    %v665 = vpop.f32.mrb[0].mxu0
    %666 = vdwg.mxu0
    %667 = vmatprep.subr.bf16.mxu0 %v450
    %668 = vmatpush1.bf16.msra.mxu0 %v449
    %669 = vmatprep.subr.bf16.mxu0 %v454
    %670 = vmatpush1.bf16.msra.mxu0 %v453
    %671 = vmatprep.subr.bf16.mxu0 %v458
    %672 = vmatpush1.bf16.msra.mxu0 %v457
    %673 = vmatprep.subr.bf16.mxu0 %v462
    %674 = vmatpush1.bf16.msra.mxu0 %v461
    %675 = vmatprep.subr.bf16.mxu0 %v466
    %676 = vmatpush1.bf16.msra.mxu0 %v465
    %677 = vmatprep.subr.bf16.mxu0 %v470
    %678 = vmatpush1.bf16.msra.mxu0 %v469
    %679 = vmatprep.subr.bf16.mxu0 %v474
    %680 = vmatpush1.bf16.msra.mxu0 %v473
    %681 = vmatprep.subr.bf16.mxu0 %v478
    %682 = vmatpush1.bf16.msra.mxu0 %v477
    %683 = vmatprep.subr.bf16.mxu0 0
    %684 = vmatpush1.bf16.msra.mxu0 0
    %685 = vmatprep.subr.bf16.mxu0 0
    %686 = vmatpush1.bf16.msra.mxu0 0
    %687 = vmatprep.subr.bf16.mxu0 0
    %688 = vmatpush1.bf16.msra.mxu0 0
    %689 = vmatprep.subr.bf16.mxu0 0
    %690 = vmatpush1.bf16.msra.mxu0 0
    %691 = vmatprep.subr.bf16.mxu0 0
    %692 = vmatpush1.bf16.msra.mxu0 0
    %693 = vmatprep.subr.bf16.mxu0 0
    %694 = vmatpush1.bf16.msra.mxu0 0
    %695 = vmatprep.subr.bf16.mxu0 0
    %696 = vmatpush1.bf16.msra.mxu0 0
    %697 = vmatprep.subr.bf16.mxu0 0
    %698 = vmatpush1.bf16.msra.mxu0 0
    %699 = vmatprep.mubr.bf16.mxu0 0
    %700 = vmatmul.mubr.bf16.gmra.mrb[0].mxu0 %v625
    %v701 = vpop.f32.mrb[0].mxu0
    %v702 = vadd.f32 0.0, %v701
    %v703 = vpop.f32.mrb[0].mxu0
    %v704 = vadd.f32 0.0, %v703
    %v705 = vpop.f32.mrb[0].mxu0
    %v706 = vpop.f32.mrb[0].mxu0
    %707 = vdwg.mxu0
    %v708 = vadd.f32 %v621, %v661
    %v709 = vadd.f32 %v622, %v663
    %v710 = vadd.f32 %v623, %v702
    %v711 = vadd.f32 %v624, %v704
    %v712 = vxor.u32 %v708, 2147483648
    %v713 = vmul.f32 %v712, 1.442695
    %v714 = vpow.pop %v713
    %v715 = vadd.f32 %v714, 1.0
    %v716 = vrcp.pop %v715
    %v717 = vmul.f32 1.0, %v716
    %v718 = vxor.u32 %v709, 2147483648
    %v719 = vmul.f32 %v718, 1.442695
    %v720 = vpow.pop %v719
    %v721 = vadd.f32 %v720, 1.0
    %v722 = vrcp.pop %v721
    %v723 = vmul.f32 1.0, %v722
    %v724 = vtanh.pop %v710
    %v725 = vxor.u32 %v711, 2147483648
    %v726 = vmul.f32 %v725, 1.442695
    %v727 = vpow.pop %v726
    %v728 = vadd.f32 %v727, 1.0
    %v729 = vrcp.pop %v728
    %v730 = vmul.f32 1.0, %v729
    %v731 = vmul.f32 %v723, %v618
    %v732 = vmul.f32 %v717, %v724
    %v733 = vadd.f32 %v731, %v732
    %v734 = vtanh.pop %v733
    %v735 = vmul.f32 %v730, %v734
    %v736 = vld [vmem:[#allocation2 + $0x40] sm:$0xff]
    %v737 = vld [vmem:[#allocation2 + $0x48] sm:$0xff]
    %v738 = vld [vmem:[#allocation2 + $0x50] sm:$0xff]
    %v739 = vld [vmem:[#allocation2 + $0x58] sm:$0xff]
    %v740 = vpack.c.bf16 %v735, %v735
    %741 = vmatprep.subr.bf16.mxu0 %v448
    %742 = vmatpush1.bf16.msra.mxu0 %v447
    %743 = vmatprep.subr.bf16.mxu0 %v452
    %744 = vmatpush1.bf16.msra.mxu0 %v451
    %745 = vmatprep.subr.bf16.mxu0 %v456
    %746 = vmatpush1.bf16.msra.mxu0 %v455
    %747 = vmatprep.subr.bf16.mxu0 %v460
    %748 = vmatpush1.bf16.msra.mxu0 %v459
    %749 = vmatprep.subr.bf16.mxu0 %v464
    %750 = vmatpush1.bf16.msra.mxu0 %v463
    %751 = vmatprep.subr.bf16.mxu0 %v468
    %752 = vmatpush1.bf16.msra.mxu0 %v467
    %753 = vmatprep.subr.bf16.mxu0 %v472
    %754 = vmatpush1.bf16.msra.mxu0 %v471
    %755 = vmatprep.subr.bf16.mxu0 %v476
    %756 = vmatpush1.bf16.msra.mxu0 %v475
    %757 = vmatprep.subr.bf16.mxu0 0
    %758 = vmatpush1.bf16.msra.mxu0 0
    %759 = vmatprep.subr.bf16.mxu0 0
    %760 = vmatpush1.bf16.msra.mxu0 0
    %761 = vmatprep.subr.bf16.mxu0 0
    %762 = vmatpush1.bf16.msra.mxu0 0
    %763 = vmatprep.subr.bf16.mxu0 0
    %764 = vmatpush1.bf16.msra.mxu0 0
    %765 = vmatprep.subr.bf16.mxu0 0
    %766 = vmatpush1.bf16.msra.mxu0 0
    %767 = vmatprep.subr.bf16.mxu0 0
    %768 = vmatpush1.bf16.msra.mxu0 0
    %769 = vmatprep.subr.bf16.mxu0 0
    %770 = vmatpush1.bf16.msra.mxu0 0
    %771 = vmatprep.subr.bf16.mxu0 0
    %772 = vmatpush1.bf16.msra.mxu0 0
    %773 = vmatprep.mubr.bf16.mxu0 0
    %774 = vmatmul.mubr.bf16.gmra.mrb[0].mxu0 %v740
    %v775 = vpop.f32.mrb[0].mxu0
    %v776 = vadd.f32 0.0, %v775
    %v777 = vpop.f32.mrb[0].mxu0
    %v778 = vadd.f32 0.0, %v777
    %v779 = vpop.f32.mrb[0].mxu0
    %v780 = vpop.f32.mrb[0].mxu0
    %781 = vdwg.mxu0
    %782 = vmatprep.subr.bf16.mxu0 %v450
    %783 = vmatpush1.bf16.msra.mxu0 %v449
    %784 = vmatprep.subr.bf16.mxu0 %v454
    %785 = vmatpush1.bf16.msra.mxu0 %v453
    %786 = vmatprep.subr.bf16.mxu0 %v458
    %787 = vmatpush1.bf16.msra.mxu0 %v457
    %788 = vmatprep.subr.bf16.mxu0 %v462
    %789 = vmatpush1.bf16.msra.mxu0 %v461
    %790 = vmatprep.subr.bf16.mxu0 %v466
    %791 = vmatpush1.bf16.msra.mxu0 %v465
    %792 = vmatprep.subr.bf16.mxu0 %v470
    %793 = vmatpush1.bf16.msra.mxu0 %v469
    %794 = vmatprep.subr.bf16.mxu0 %v474
    %795 = vmatpush1.bf16.msra.mxu0 %v473
    %796 = vmatprep.subr.bf16.mxu0 %v478
    %797 = vmatpush1.bf16.msra.mxu0 %v477
    %798 = vmatprep.subr.bf16.mxu0 0
    %799 = vmatpush1.bf16.msra.mxu0 0
    %800 = vmatprep.subr.bf16.mxu0 0
    %801 = vmatpush1.bf16.msra.mxu0 0
    %802 = vmatprep.subr.bf16.mxu0 0
    %803 = vmatpush1.bf16.msra.mxu0 0
    %804 = vmatprep.subr.bf16.mxu0 0
    %805 = vmatpush1.bf16.msra.mxu0 0
    %806 = vmatprep.subr.bf16.mxu0 0
    %807 = vmatpush1.bf16.msra.mxu0 0
    %808 = vmatprep.subr.bf16.mxu0 0
    %809 = vmatpush1.bf16.msra.mxu0 0
    %810 = vmatprep.subr.bf16.mxu0 0
    %811 = vmatpush1.bf16.msra.mxu0 0
    %812 = vmatprep.subr.bf16.mxu0 0
    %813 = vmatpush1.bf16.msra.mxu0 0
    %814 = vmatprep.mubr.bf16.mxu0 0
    %815 = vmatmul.mubr.bf16.gmra.mrb[0].mxu0 %v740
    %v816 = vpop.f32.mrb[0].mxu0
    %v817 = vadd.f32 0.0, %v816
    %v818 = vpop.f32.mrb[0].mxu0
    %v819 = vadd.f32 0.0, %v818
    %v820 = vpop.f32.mrb[0].mxu0
    %v821 = vpop.f32.mrb[0].mxu0
    %822 = vdwg.mxu0
    %v823 = vadd.f32 %v736, %v776
    %v824 = vadd.f32 %v737, %v778
    %v825 = vadd.f32 %v738, %v817
    %v826 = vadd.f32 %v739, %v819
    %v827 = vxor.u32 %v823, 2147483648
    %v828 = vmul.f32 %v827, 1.442695
    %v829 = vpow.pop %v828
    %v830 = vadd.f32 %v829, 1.0
    %v831 = vrcp.pop %v830
    %v832 = vmul.f32 1.0, %v831
    %v833 = vxor.u32 %v824, 2147483648
    %v834 = vmul.f32 %v833, 1.442695
    %v835 = vpow.pop %v834
    %v836 = vadd.f32 %v835, 1.0
    %v837 = vrcp.pop %v836
    %v838 = vmul.f32 1.0, %v837
    %v839 = vtanh.pop %v825
    %v840 = vxor.u32 %v826, 2147483648
    %v841 = vmul.f32 %v840, 1.442695
    %v842 = vpow.pop %v841
    %v843 = vadd.f32 %v842, 1.0
    %v844 = vrcp.pop %v843
    %v845 = vmul.f32 1.0, %v844
    %v846 = vmul.f32 %v838, %v733
    %v847 = vmul.f32 %v832, %v839
    %v848 = vadd.f32 %v846, %v847
    %v849 = vtanh.pop %v848
    %v850 = vmul.f32 %v845, %v849
    %v851 = vld [vmem:[#allocation2 + $0x60] sm:$0xff]
    %v852 = vld [vmem:[#allocation2 + $0x68] sm:$0xff]
    %v853 = vld [vmem:[#allocation2 + $0x70] sm:$0xff]
    %v854 = vld [vmem:[#allocation2 + $0x78] sm:$0xff]
    %v855 = vpack.c.bf16 %v850, %v850
    %856 = vmatprep.subr.bf16.mxu0 %v448
    %857 = vmatpush1.bf16.msra.mxu0 %v447
    %858 = vmatprep.subr.bf16.mxu0 %v452
    %859 = vmatpush1.bf16.msra.mxu0 %v451
    %860 = vmatprep.subr.bf16.mxu0 %v456
    %861 = vmatpush1.bf16.msra.mxu0 %v455
    %862 = vmatprep.subr.bf16.mxu0 %v460
    %863 = vmatpush1.bf16.msra.mxu0 %v459
    %864 = vmatprep.subr.bf16.mxu0 %v464
    %865 = vmatpush1.bf16.msra.mxu0 %v463
    %866 = vmatprep.subr.bf16.mxu0 %v468
    %867 = vmatpush1.bf16.msra.mxu0 %v467
    %868 = vmatprep.subr.bf16.mxu0 %v472
    %869 = vmatpush1.bf16.msra.mxu0 %v471
    %870 = vmatprep.subr.bf16.mxu0 %v476
    %871 = vmatpush1.bf16.msra.mxu0 %v475
    %872 = vmatprep.subr.bf16.mxu0 0
    %873 = vmatpush1.bf16.msra.mxu0 0
    %874 = vmatprep.subr.bf16.mxu0 0
    %875 = vmatpush1.bf16.msra.mxu0 0
    %876 = vmatprep.subr.bf16.mxu0 0
    %877 = vmatpush1.bf16.msra.mxu0 0
    %878 = vmatprep.subr.bf16.mxu0 0
    %879 = vmatpush1.bf16.msra.mxu0 0
    %880 = vmatprep.subr.bf16.mxu0 0
    %881 = vmatpush1.bf16.msra.mxu0 0
    %882 = vmatprep.subr.bf16.mxu0 0
    %883 = vmatpush1.bf16.msra.mxu0 0
    %884 = vmatprep.subr.bf16.mxu0 0
    %885 = vmatpush1.bf16.msra.mxu0 0
    %886 = vmatprep.subr.bf16.mxu0 0
    %887 = vmatpush1.bf16.msra.mxu0 0
    %888 = vmatprep.mubr.bf16.mxu0 0
    %889 = vmatmul.mubr.bf16.gmra.mrb[0].mxu0 %v855
    %v890 = vpop.f32.mrb[0].mxu0
    %v891 = vadd.f32 0.0, %v890
    %v892 = vpop.f32.mrb[0].mxu0
    %v893 = vadd.f32 0.0, %v892
    %v894 = vpop.f32.mrb[0].mxu0
    %v895 = vpop.f32.mrb[0].mxu0
    %896 = vdwg.mxu0
    %897 = vmatprep.subr.bf16.mxu0 %v450
    %898 = vmatpush1.bf16.msra.mxu0 %v449
    %899 = vmatprep.subr.bf16.mxu0 %v454
    %900 = vmatpush1.bf16.msra.mxu0 %v453
    %901 = vmatprep.subr.bf16.mxu0 %v458
    %902 = vmatpush1.bf16.msra.mxu0 %v457
    %903 = vmatprep.subr.bf16.mxu0 %v462
    %904 = vmatpush1.bf16.msra.mxu0 %v461
    %905 = vmatprep.subr.bf16.mxu0 %v466
    %906 = vmatpush1.bf16.msra.mxu0 %v465
    %907 = vmatprep.subr.bf16.mxu0 %v470
    %908 = vmatpush1.bf16.msra.mxu0 %v469
    %909 = vmatprep.subr.bf16.mxu0 %v474
    %910 = vmatpush1.bf16.msra.mxu0 %v473
    %911 = vmatprep.subr.bf16.mxu0 %v478
    %912 = vmatpush1.bf16.msra.mxu0 %v477
    %913 = vmatprep.subr.bf16.mxu0 0
    %914 = vmatpush1.bf16.msra.mxu0 0
    %915 = vmatprep.subr.bf16.mxu0 0
    %916 = vmatpush1.bf16.msra.mxu0 0
    %917 = vmatprep.subr.bf16.mxu0 0
    %918 = vmatpush1.bf16.msra.mxu0 0
    %919 = vmatprep.subr.bf16.mxu0 0
    %920 = vmatpush1.bf16.msra.mxu0 0
    %921 = vmatprep.subr.bf16.mxu0 0
    %922 = vmatpush1.bf16.msra.mxu0 0
    %923 = vmatprep.subr.bf16.mxu0 0
    %924 = vmatpush1.bf16.msra.mxu0 0
    %925 = vmatprep.subr.bf16.mxu0 0
    %926 = vmatpush1.bf16.msra.mxu0 0
    %927 = vmatprep.subr.bf16.mxu0 0
    %928 = vmatpush1.bf16.msra.mxu0 0
    %929 = vmatprep.mubr.bf16.mxu0 0
    %930 = vmatmul.mubr.bf16.gmra.mrb[0].mxu0 %v855
    %v931 = vpop.f32.mrb[0].mxu0
    %v932 = vadd.f32 0.0, %v931
    %v933 = vpop.f32.mrb[0].mxu0
    %v934 = vadd.f32 0.0, %v933
    %v935 = vpop.f32.mrb[0].mxu0
    %v936 = vpop.f32.mrb[0].mxu0
    %937 = vdwg.mxu0
    %v938 = vadd.f32 %v851, %v891
    %v939 = vadd.f32 %v852, %v893
    %v940 = vadd.f32 %v853, %v932
    %v941 = vadd.f32 %v854, %v934
    %v942 = vxor.u32 %v938, 2147483648
    %v943 = vmul.f32 %v942, 1.442695
    %v944 = vpow.pop %v943
    %v945 = vadd.f32 %v944, 1.0
    %v946 = vrcp.pop %v945
    %v947 = vmul.f32 1.0, %v946
    %v948 = vxor.u32 %v939, 2147483648
    %v949 = vmul.f32 %v948, 1.442695
    %v950 = vpow.pop %v949
    %v951 = vadd.f32 %v950, 1.0
    %v952 = vrcp.pop %v951
    %v953 = vmul.f32 1.0, %v952
    %v954 = vtanh.pop %v940
    %v955 = vxor.u32 %v941, 2147483648
    %v956 = vmul.f32 %v955, 1.442695
    %v957 = vpow.pop %v956
    %v958 = vadd.f32 %v957, 1.0
    %v959 = vrcp.pop %v958
    %v960 = vmul.f32 1.0, %v959
    %v961 = vmul.f32 %v953, %v848
    %v962 = vmul.f32 %v947, %v954
    %v963 = vadd.f32 %v961, %v962
    %v964 = vtanh.pop %v963
    %v965 = vmul.f32 %v960, %v964
    %v966 = vld [vmem:[#allocation2 + $0x80] sm:$0xff]
    %v967 = vld [vmem:[#allocation2 + $0x88] sm:$0xff]
    %v968 = vld [vmem:[#allocation2 + $0x90] sm:$0xff]
    %v969 = vld [vmem:[#allocation2 + $0x98] sm:$0xff]
    %v970 = vpack.c.bf16 %v965, %v965
    %971 = vmatprep.subr.bf16.mxu0 %v448
    %972 = vmatpush1.bf16.msra.mxu0 %v447
    %973 = vmatprep.subr.bf16.mxu0 %v452
    %974 = vmatpush1.bf16.msra.mxu0 %v451
    %975 = vmatprep.subr.bf16.mxu0 %v456
    %976 = vmatpush1.bf16.msra.mxu0 %v455
    %977 = vmatprep.subr.bf16.mxu0 %v460
    %978 = vmatpush1.bf16.msra.mxu0 %v459
    %979 = vmatprep.subr.bf16.mxu0 %v464
    %980 = vmatpush1.bf16.msra.mxu0 %v463
    %981 = vmatprep.subr.bf16.mxu0 %v468
    %982 = vmatpush1.bf16.msra.mxu0 %v467
    %983 = vmatprep.subr.bf16.mxu0 %v472
    %984 = vmatpush1.bf16.msra.mxu0 %v471
    %985 = vmatprep.subr.bf16.mxu0 %v476
    %986 = vmatpush1.bf16.msra.mxu0 %v475
    %987 = vmatprep.subr.bf16.mxu0 0
    %988 = vmatpush1.bf16.msra.mxu0 0
    %989 = vmatprep.subr.bf16.mxu0 0
    %990 = vmatpush1.bf16.msra.mxu0 0
    %991 = vmatprep.subr.bf16.mxu0 0
    %992 = vmatpush1.bf16.msra.mxu0 0
    %993 = vmatprep.subr.bf16.mxu0 0
    %994 = vmatpush1.bf16.msra.mxu0 0
    %995 = vmatprep.subr.bf16.mxu0 0
    %996 = vmatpush1.bf16.msra.mxu0 0
    %997 = vmatprep.subr.bf16.mxu0 0
    %998 = vmatpush1.bf16.msra.mxu0 0
    %999 = vmatprep.subr.bf16.mxu0 0
    %1000 = vmatpush1.bf16.msra.mxu0 0
    %1001 = vmatprep.subr.bf16.mxu0 0
    %1002 = vmatpush1.bf16.msra.mxu0 0
    %1003 = vmatprep.mubr.bf16.mxu0 0
    %1004 = vmatmul.mubr.bf16.gmra.mrb[0].mxu0 %v970
    %v1005 = vpop.f32.mrb[0].mxu0
    %v1006 = vadd.f32 0.0, %v1005
    %v1007 = vpop.f32.mrb[0].mxu0
    %v1008 = vadd.f32 0.0, %v1007
    %v1009 = vpop.f32.mrb[0].mxu0
    %v1010 = vpop.f32.mrb[0].mxu0
    %1011 = vdwg.mxu0
    %1012 = vmatprep.subr.bf16.mxu0 %v450
    %1013 = vmatpush1.bf16.msra.mxu0 %v449
    %1014 = vmatprep.subr.bf16.mxu0 %v454
    %1015 = vmatpush1.bf16.msra.mxu0 %v453
    %1016 = vmatprep.subr.bf16.mxu0 %v458
    %1017 = vmatpush1.bf16.msra.mxu0 %v457
    %1018 = vmatprep.subr.bf16.mxu0 %v462
    %1019 = vmatpush1.bf16.msra.mxu0 %v461
    %1020 = vmatprep.subr.bf16.mxu0 %v466
    %1021 = vmatpush1.bf16.msra.mxu0 %v465
    %1022 = vmatprep.subr.bf16.mxu0 %v470
    %1023 = vmatpush1.bf16.msra.mxu0 %v469
    %1024 = vmatprep.subr.bf16.mxu0 %v474
    %1025 = vmatpush1.bf16.msra.mxu0 %v473
    %1026 = vmatprep.subr.bf16.mxu0 %v478
    %1027 = vmatpush1.bf16.msra.mxu0 %v477
    %1028 = vmatprep.subr.bf16.mxu0 0
    %1029 = vmatpush1.bf16.msra.mxu0 0
    %1030 = vmatprep.subr.bf16.mxu0 0
    %1031 = vmatpush1.bf16.msra.mxu0 0
    %1032 = vmatprep.subr.bf16.mxu0 0
    %1033 = vmatpush1.bf16.msra.mxu0 0
    %1034 = vmatprep.subr.bf16.mxu0 0
    %1035 = vmatpush1.bf16.msra.mxu0 0
    %1036 = vmatprep.subr.bf16.mxu0 0
    %1037 = vmatpush1.bf16.msra.mxu0 0
    %1038 = vmatprep.subr.bf16.mxu0 0
    %1039 = vmatpush1.bf16.msra.mxu0 0
    %1040 = vmatprep.subr.bf16.mxu0 0
    %1041 = vmatpush1.bf16.msra.mxu0 0
    %1042 = vmatprep.subr.bf16.mxu0 0
    %1043 = vmatpush1.bf16.msra.mxu0 0
    %1044 = vmatprep.mubr.bf16.mxu0 0
    %1045 = vmatmul.mubr.bf16.gmra.mrb[0].mxu0 %v970
    %v1046 = vpop.f32.mrb[0].mxu0
    %v1047 = vadd.f32 0.0, %v1046
    %v1048 = vpop.f32.mrb[0].mxu0
    %v1049 = vadd.f32 0.0, %v1048
    %v1050 = vpop.f32.mrb[0].mxu0
    %v1051 = vpop.f32.mrb[0].mxu0
    %1052 = vdwg.mxu0
    %v1053 = vadd.f32 %v966, %v1006
    %v1054 = vadd.f32 %v967, %v1008
    %v1055 = vadd.f32 %v968, %v1047
    %v1056 = vadd.f32 %v969, %v1049
    %v1057 = vxor.u32 %v1053, 2147483648
    %v1058 = vmul.f32 %v1057, 1.442695
    %v1059 = vpow.pop %v1058
    %v1060 = vadd.f32 %v1059, 1.0
    %v1061 = vrcp.pop %v1060
    %v1062 = vmul.f32 1.0, %v1061
    %v1063 = vxor.u32 %v1054, 2147483648
    %v1064 = vmul.f32 %v1063, 1.442695
    %v1065 = vpow.pop %v1064
    %v1066 = vadd.f32 %v1065, 1.0
    %v1067 = vrcp.pop %v1066
    %v1068 = vmul.f32 1.0, %v1067
    %v1069 = vtanh.pop %v1055
    %v1070 = vxor.u32 %v1056, 2147483648
    %v1071 = vmul.f32 %v1070, 1.442695
    %v1072 = vpow.pop %v1071
    %v1073 = vadd.f32 %v1072, 1.0
    %v1074 = vrcp.pop %v1073
    %v1075 = vmul.f32 1.0, %v1074
    %v1076 = vmul.f32 %v1068, %v963
    %v1077 = vmul.f32 %v1062, %v1069
    %v1078 = vadd.f32 %v1076, %v1077
    %v1079 = vtanh.pop %v1078
    %v1080 = vmul.f32 %v1075, %v1079
    %v1081 = vld [vmem:[#allocation2 + $0xa0] sm:$0xff]
    %v1082 = vld [vmem:[#allocation2 + $0xa8] sm:$0xff]
    %v1083 = vld [vmem:[#allocation2 + $0xb0] sm:$0xff]
    %v1084 = vld [vmem:[#allocation2 + $0xb8] sm:$0xff]
    %v1085 = vpack.c.bf16 %v1080, %v1080
    %1086 = vmatprep.subr.bf16.mxu0 %v448
    %1087 = vmatpush1.bf16.msra.mxu0 %v447
    %1088 = vmatprep.subr.bf16.mxu0 %v452
    %1089 = vmatpush1.bf16.msra.mxu0 %v451
    %1090 = vmatprep.subr.bf16.mxu0 %v456
    %1091 = vmatpush1.bf16.msra.mxu0 %v455
    %1092 = vmatprep.subr.bf16.mxu0 %v460
    %1093 = vmatpush1.bf16.msra.mxu0 %v459
    %1094 = vmatprep.subr.bf16.mxu0 %v464
    %1095 = vmatpush1.bf16.msra.mxu0 %v463
    %1096 = vmatprep.subr.bf16.mxu0 %v468
    %1097 = vmatpush1.bf16.msra.mxu0 %v467
    %1098 = vmatprep.subr.bf16.mxu0 %v472
    %1099 = vmatpush1.bf16.msra.mxu0 %v471
    %1100 = vmatprep.subr.bf16.mxu0 %v476
    %1101 = vmatpush1.bf16.msra.mxu0 %v475
    %1102 = vmatprep.subr.bf16.mxu0 0
    %1103 = vmatpush1.bf16.msra.mxu0 0
    %1104 = vmatprep.subr.bf16.mxu0 0
    %1105 = vmatpush1.bf16.msra.mxu0 0
    %1106 = vmatprep.subr.bf16.mxu0 0
    %1107 = vmatpush1.bf16.msra.mxu0 0
    %1108 = vmatprep.subr.bf16.mxu0 0
    %1109 = vmatpush1.bf16.msra.mxu0 0
    %1110 = vmatprep.subr.bf16.mxu0 0
    %1111 = vmatpush1.bf16.msra.mxu0 0
    %1112 = vmatprep.subr.bf16.mxu0 0
    %1113 = vmatpush1.bf16.msra.mxu0 0
    %1114 = vmatprep.subr.bf16.mxu0 0
    %1115 = vmatpush1.bf16.msra.mxu0 0
    %1116 = vmatprep.subr.bf16.mxu0 0
    %1117 = vmatpush1.bf16.msra.mxu0 0
    %1118 = vmatprep.mubr.bf16.mxu0 0
    %1119 = vmatmul.mubr.bf16.gmra.mrb[0].mxu0 %v1085
    %v1120 = vpop.f32.mrb[0].mxu0
    %v1121 = vadd.f32 0.0, %v1120
    %v1122 = vpop.f32.mrb[0].mxu0
    %v1123 = vadd.f32 0.0, %v1122
    %v1124 = vpop.f32.mrb[0].mxu0
    %v1125 = vpop.f32.mrb[0].mxu0
    %1126 = vdwg.mxu0
    %1127 = vmatprep.subr.bf16.mxu0 %v450
    %1128 = vmatpush1.bf16.msra.mxu0 %v449
    %1129 = vmatprep.subr.bf16.mxu0 %v454
    %1130 = vmatpush1.bf16.msra.mxu0 %v453
    %1131 = vmatprep.subr.bf16.mxu0 %v458
    %1132 = vmatpush1.bf16.msra.mxu0 %v457
    %1133 = vmatprep.subr.bf16.mxu0 %v462
    %1134 = vmatpush1.bf16.msra.mxu0 %v461
    %1135 = vmatprep.subr.bf16.mxu0 %v466
    %1136 = vmatpush1.bf16.msra.mxu0 %v465
    %1137 = vmatprep.subr.bf16.mxu0 %v470
    %1138 = vmatpush1.bf16.msra.mxu0 %v469
    %1139 = vmatprep.subr.bf16.mxu0 %v474
    %1140 = vmatpush1.bf16.msra.mxu0 %v473
    %1141 = vmatprep.subr.bf16.mxu0 %v478
    %1142 = vmatpush1.bf16.msra.mxu0 %v477
    %1143 = vmatprep.subr.bf16.mxu0 0
    %1144 = vmatpush1.bf16.msra.mxu0 0
    %1145 = vmatprep.subr.bf16.mxu0 0
    %1146 = vmatpush1.bf16.msra.mxu0 0
    %1147 = vmatprep.subr.bf16.mxu0 0
    %1148 = vmatpush1.bf16.msra.mxu0 0
    %1149 = vmatprep.subr.bf16.mxu0 0
    %1150 = vmatpush1.bf16.msra.mxu0 0
    %1151 = vmatprep.subr.bf16.mxu0 0
    %1152 = vmatpush1.bf16.msra.mxu0 0
    %1153 = vmatprep.subr.bf16.mxu0 0
    %1154 = vmatpush1.bf16.msra.mxu0 0
    %1155 = vmatprep.subr.bf16.mxu0 0
    %1156 = vmatpush1.bf16.msra.mxu0 0
    %1157 = vmatprep.subr.bf16.mxu0 0
    %1158 = vmatpush1.bf16.msra.mxu0 0
    %1159 = vmatprep.mubr.bf16.mxu0 0
    %1160 = vmatmul.mubr.bf16.gmra.mrb[0].mxu0 %v1085
    %v1161 = vpop.f32.mrb[0].mxu0
    %v1162 = vadd.f32 0.0, %v1161
    %v1163 = vpop.f32.mrb[0].mxu0
    %v1164 = vadd.f32 0.0, %v1163
    %v1165 = vpop.f32.mrb[0].mxu0
    %v1166 = vpop.f32.mrb[0].mxu0
    %1167 = vdwg.mxu0
    %v1168 = vadd.f32 %v1081, %v1121
    %v1169 = vadd.f32 %v1082, %v1123
    %v1170 = vadd.f32 %v1083, %v1162
    %v1171 = vadd.f32 %v1084, %v1164
    %v1172 = vxor.u32 %v1168, 2147483648
    %v1173 = vmul.f32 %v1172, 1.442695
    %v1174 = vpow.pop %v1173
    %v1175 = vadd.f32 %v1174, 1.0
    %v1176 = vrcp.pop %v1175
    %v1177 = vmul.f32 1.0, %v1176
    %v1178 = vxor.u32 %v1169, 2147483648
    %v1179 = vmul.f32 %v1178, 1.442695
    %v1180 = vpow.pop %v1179
    %v1181 = vadd.f32 %v1180, 1.0
    %v1182 = vrcp.pop %v1181
    %v1183 = vmul.f32 1.0, %v1182
    %v1184 = vtanh.pop %v1170
    %v1185 = vxor.u32 %v1171, 2147483648
    %v1186 = vmul.f32 %v1185, 1.442695
    %v1187 = vpow.pop %v1186
    %v1188 = vadd.f32 %v1187, 1.0
    %v1189 = vrcp.pop %v1188
    %v1190 = vmul.f32 1.0, %v1189
    %v1191 = vmul.f32 %v1183, %v1078
    %v1192 = vmul.f32 %v1177, %v1184
    %v1193 = vadd.f32 %v1191, %v1192
    %v1194 = vtanh.pop %v1193
    %v1195 = vmul.f32 %v1190, %v1194
    %v1196 = vld [vmem:[%s1] sm:$0xf]
    %v1197 = vld [vmem:[%s1 + $0x4] sm:$0xf]
    %v1198 = vld [vmem:[%s1 + $0x8] sm:$0xf]
    %v1199 = vld [vmem:[%s1 + $0xc] sm:$0xf]
    %v1200 = vld [vmem:[%s1 + $0x10] sm:$0xf]
    %v1201 = vld [vmem:[%s1 + $0x14] sm:$0xf]
    %v1202 = vld [vmem:[%s1 + $0x18] sm:$0xf]
    %v1203 = vld [vmem:[%s1 + $0x1c] sm:$0xf]
    %v1204 = vld [vmem:[%s5] sm:$0xff]
    %v1205 = vld [vmem:[%s5 + $0x8] sm:$0xff]
    %v1206 = vld [vmem:[%s5 + $0x10] sm:$0xff]
    %v1207 = vld [vmem:[%s5 + $0x18] sm:$0xff]
    %v1208 = vld [vmem:[#allocation10] sm:$0xf]
    %v1210 = vlaneseq
    %v1211 = vshrl.u32 %v1210, 7
    %v1212 = vsub.s32 0, %v1211
    %v1213 = vrot.slane %v1208, %v1212
    %v1214 = vlaneseq
    %v1215 = vshrl.u32 %v1214, 7
    %v1216 = vsub.s32 1, %v1215
    %v1217 = vrot.slane %v1208, %v1216
    %v1218 = vlaneseq
    %v1219 = vshrl.u32 %v1218, 7
    %v1220 = vsub.s32 2, %v1219
    %v1221 = vrot.slane %v1208, %v1220
    %v1222 = vlaneseq
    %v1223 = vshrl.u32 %v1222, 7
    %v1224 = vsub.s32 3, %v1223
    %v1225 = vrot.slane %v1208, %v1224
    %v1238 = vunpack.c.l.b16 %v1196
    %v1239 = vunpack.c.l.b16 %v1197
    %v1240 = vunpack.c.l.b16 %v1198
    %v1241 = vunpack.c.l.b16 %v1199
    %v1242 = vunpack.c.l.b16 %v1200
    %v1243 = vunpack.c.l.b16 %v1201
    %v1244 = vunpack.c.l.b16 %v1202
    %v1245 = vunpack.c.l.b16 %v1203
    %v1246 = vpack.c.b16 %v1239, %v1238
    %v1247 = vpack.c.b16 %v1241, %v1240
    %v1248 = vpack.c.b16 %v1243, %v1242
    %v1249 = vpack.c.b16 %v1245, %v1244
    %v1254 = vunpack.c.l.b16 %v1204
    %v1255 = vunpack.c.h.b16 %v1204
    %v1256 = vunpack.c.l.b16 %v1205
    %v1257 = vunpack.c.h.b16 %v1205
    %v1258 = vunpack.c.l.b16 %v1206
    %v1259 = vunpack.c.h.b16 %v1206
    %v1260 = vunpack.c.l.b16 %v1207
    %v1261 = vunpack.c.h.b16 %v1207
    %v1262 = vpack.c.b16 %v1258, %v1254
    %v1263 = vpack.c.b16 %v1259, %v1255
    %v1264 = vpack.c.b16 %v1260, %v1256
    %v1265 = vpack.c.b16 %v1261, %v1257
    %v1271 = vsel %vm155, %v1246, 0
    %v1274 = vsel %vm155, %v1247, 0
    %v1277 = vsel %vm155, %v1248, 0
    %v1280 = vsel %vm155, %v1249, 0
    %1282 = vmatprep.subr.bf16.mxu0 %v1263
    %1283 = vmatpush1.bf16.msra.mxu0 %v1262
    %1284 = vmatprep.subr.bf16.mxu0 0
    %1285 = vmatpush1.bf16.msra.mxu0 0
    %1286 = vmatprep.subr.bf16.mxu0 0
    %1287 = vmatpush1.bf16.msra.mxu0 0
    %1288 = vmatprep.subr.bf16.mxu0 0
    %1289 = vmatpush1.bf16.msra.mxu0 0
    %1290 = vmatprep.subr.bf16.mxu0 0
    %1291 = vmatpush1.bf16.msra.mxu0 0
    %1292 = vmatprep.subr.bf16.mxu0 0
    %1293 = vmatpush1.bf16.msra.mxu0 0
    %1294 = vmatprep.subr.bf16.mxu0 0
    %1295 = vmatpush1.bf16.msra.mxu0 0
    %1296 = vmatprep.subr.bf16.mxu0 0
    %1297 = vmatpush1.bf16.msra.mxu0 0
    %1298 = vmatprep.subr.bf16.mxu0 0
    %1299 = vmatpush1.bf16.msra.mxu0 0
    %1300 = vmatprep.subr.bf16.mxu0 0
    %1301 = vmatpush1.bf16.msra.mxu0 0
    %1302 = vmatprep.subr.bf16.mxu0 0
    %1303 = vmatpush1.bf16.msra.mxu0 0
    %1304 = vmatprep.subr.bf16.mxu0 0
    %1305 = vmatpush1.bf16.msra.mxu0 0
    %1306 = vmatprep.subr.bf16.mxu0 0
    %1307 = vmatpush1.bf16.msra.mxu0 0
    %1308 = vmatprep.subr.bf16.mxu0 0
    %1309 = vmatpush1.bf16.msra.mxu0 0
    %1310 = vmatprep.subr.bf16.mxu0 0
    %1311 = vmatpush1.bf16.msra.mxu0 0
    %1312 = vmatprep.subr.bf16.mxu0 0
    %1313 = vmatpush1.bf16.msra.mxu0 0
    %1314 = vmatprep.mubr.bf16.mxu0 0
    %1315 = vmatmul.mubr.bf16.gmra.mrb[0].mxu0 %v1271
    %v1316 = vpop.f32.mrb[0].mxu0
    %v1317 = vadd.f32 %v1213, %v1316
    %v1318 = vpop.f32.mrb[0].mxu0
    %v1319 = vadd.f32 %v1217, %v1318
    %v1320 = vpop.f32.mrb[0].mxu0
    %v1321 = vadd.f32 %v1213, %v1320
    %v1322 = vpop.f32.mrb[0].mxu0
    %v1323 = vadd.f32 %v1217, %v1322
    %1324 = vmatprep.mubr.bf16.mxu0 0
    %1325 = vmatmul.mubr.bf16.gmra.mrb[0].mxu0 %v1274
    %v1326 = vpop.f32.mrb[0].mxu0
    %v1327 = vadd.f32 %v1213, %v1326
    %v1328 = vpop.f32.mrb[0].mxu0
    %v1329 = vadd.f32 %v1217, %v1328
    %v1330 = vpop.f32.mrb[0].mxu0
    %v1331 = vadd.f32 %v1213, %v1330
    %v1332 = vpop.f32.mrb[0].mxu0
    %v1333 = vadd.f32 %v1217, %v1332
    %1334 = vmatprep.mubr.bf16.mxu0 0
    %1335 = vmatmul.mubr.bf16.gmra.mrb[0].mxu0 %v1277
    %v1336 = vpop.f32.mrb[0].mxu0
    %v1337 = vadd.f32 %v1213, %v1336
    %v1338 = vpop.f32.mrb[0].mxu0
    %v1339 = vadd.f32 %v1217, %v1338
    %v1340 = vpop.f32.mrb[0].mxu0
    %v1341 = vadd.f32 %v1213, %v1340
    %v1342 = vpop.f32.mrb[0].mxu0
    %v1343 = vadd.f32 %v1217, %v1342
    %1344 = vmatprep.mubr.bf16.mxu0 0
    %1345 = vmatmul.mubr.bf16.gmra.mrb[0].mxu0 %v1280
    %v1346 = vpop.f32.mrb[0].mxu0
    %v1347 = vadd.f32 %v1213, %v1346
    %v1348 = vpop.f32.mrb[0].mxu0
    %v1349 = vadd.f32 %v1217, %v1348
    %v1350 = vpop.f32.mrb[0].mxu0
    %v1351 = vadd.f32 %v1213, %v1350
    %v1352 = vpop.f32.mrb[0].mxu0
    %v1353 = vadd.f32 %v1217, %v1352
    %1354 = vdwg.mxu0
    %1355 = vmatprep.subr.bf16.mxu0 %v1265
    %1356 = vmatpush1.bf16.msra.mxu0 %v1264
    %1357 = vmatprep.subr.bf16.mxu0 0
    %1358 = vmatpush1.bf16.msra.mxu0 0
    %1359 = vmatprep.subr.bf16.mxu0 0
    %1360 = vmatpush1.bf16.msra.mxu0 0
    %1361 = vmatprep.subr.bf16.mxu0 0
    %1362 = vmatpush1.bf16.msra.mxu0 0
    %1363 = vmatprep.subr.bf16.mxu0 0
    %1364 = vmatpush1.bf16.msra.mxu0 0
    %1365 = vmatprep.subr.bf16.mxu0 0
    %1366 = vmatpush1.bf16.msra.mxu0 0
    %1367 = vmatprep.subr.bf16.mxu0 0
    %1368 = vmatpush1.bf16.msra.mxu0 0
    %1369 = vmatprep.subr.bf16.mxu0 0
    %1370 = vmatpush1.bf16.msra.mxu0 0
    %1371 = vmatprep.subr.bf16.mxu0 0
    %1372 = vmatpush1.bf16.msra.mxu0 0
    %1373 = vmatprep.subr.bf16.mxu0 0
    %1374 = vmatpush1.bf16.msra.mxu0 0
    %1375 = vmatprep.subr.bf16.mxu0 0
    %1376 = vmatpush1.bf16.msra.mxu0 0
    %1377 = vmatprep.subr.bf16.mxu0 0
    %1378 = vmatpush1.bf16.msra.mxu0 0
    %1379 = vmatprep.subr.bf16.mxu0 0
    %1380 = vmatpush1.bf16.msra.mxu0 0
    %1381 = vmatprep.subr.bf16.mxu0 0
    %1382 = vmatpush1.bf16.msra.mxu0 0
    %1383 = vmatprep.subr.bf16.mxu0 0
    %1384 = vmatpush1.bf16.msra.mxu0 0
    %1385 = vmatprep.subr.bf16.mxu0 0
    %1386 = vmatpush1.bf16.msra.mxu0 0
    %1387 = vmatprep.mubr.bf16.mxu0 0
    %1388 = vmatmul.mubr.bf16.gmra.mrb[0].mxu0 %v1271
    %v1389 = vpop.f32.mrb[0].mxu0
    %v1390 = vadd.f32 %v1221, %v1389
    %v1391 = vpop.f32.mrb[0].mxu0
    %v1392 = vadd.f32 %v1225, %v1391
    %v1393 = vpop.f32.mrb[0].mxu0
    %v1394 = vadd.f32 %v1221, %v1393
    %v1395 = vpop.f32.mrb[0].mxu0
    %v1396 = vadd.f32 %v1225, %v1395
    %1397 = vmatprep.mubr.bf16.mxu0 0
    %1398 = vmatmul.mubr.bf16.gmra.mrb[0].mxu0 %v1274
    %v1399 = vpop.f32.mrb[0].mxu0
    %v1400 = vadd.f32 %v1221, %v1399
    %v1401 = vpop.f32.mrb[0].mxu0
    %v1402 = vadd.f32 %v1225, %v1401
    %v1403 = vpop.f32.mrb[0].mxu0
    %v1404 = vadd.f32 %v1221, %v1403
    %v1405 = vpop.f32.mrb[0].mxu0
    %v1406 = vadd.f32 %v1225, %v1405
    %1407 = vmatprep.mubr.bf16.mxu0 0
    %1408 = vmatmul.mubr.bf16.gmra.mrb[0].mxu0 %v1277
    %v1409 = vpop.f32.mrb[0].mxu0
    %v1410 = vadd.f32 %v1221, %v1409
    %v1411 = vpop.f32.mrb[0].mxu0
    %v1412 = vadd.f32 %v1225, %v1411
    %v1413 = vpop.f32.mrb[0].mxu0
    %v1414 = vadd.f32 %v1221, %v1413
    %v1415 = vpop.f32.mrb[0].mxu0
    %v1416 = vadd.f32 %v1225, %v1415
    %1417 = vmatprep.mubr.bf16.mxu0 0
    %1418 = vmatmul.mubr.bf16.gmra.mrb[0].mxu0 %v1280
    %v1419 = vpop.f32.mrb[0].mxu0
    %v1420 = vadd.f32 %v1221, %v1419
    %v1421 = vpop.f32.mrb[0].mxu0
    %v1422 = vadd.f32 %v1225, %v1421
    %v1423 = vpop.f32.mrb[0].mxu0
    %v1424 = vadd.f32 %v1221, %v1423
    %v1425 = vpop.f32.mrb[0].mxu0
    %v1426 = vadd.f32 %v1225, %v1425
    %1427 = vdwg.mxu0
    %1428 = vst [vmem:[#allocation3] sm:$0xff] %v1317
    %1429 = vst [vmem:[#allocation3 + $0x8] sm:$0xff] %v1319
    %1430 = vst [vmem:[#allocation3 + $0x10] sm:$0xff] %v1390
    %1431 = vst [vmem:[#allocation3 + $0x18] sm:$0xff] %v1392
    %1432 = vst [vmem:[#allocation3 + $0x20] sm:$0xff] %v1321
    %1433 = vst [vmem:[#allocation3 + $0x28] sm:$0xff] %v1323
    %1434 = vst [vmem:[#allocation3 + $0x30] sm:$0xff] %v1394
    %1435 = vst [vmem:[#allocation3 + $0x38] sm:$0xff] %v1396
    %1436 = vst [vmem:[#allocation3 + $0x40] sm:$0xff] %v1327
    %1437 = vst [vmem:[#allocation3 + $0x48] sm:$0xff] %v1329
    %1438 = vst [vmem:[#allocation3 + $0x50] sm:$0xff] %v1400
    %1439 = vst [vmem:[#allocation3 + $0x58] sm:$0xff] %v1402
    %1440 = vst [vmem:[#allocation3 + $0x60] sm:$0xff] %v1331
    %1441 = vst [vmem:[#allocation3 + $0x68] sm:$0xff] %v1333
    %1442 = vst [vmem:[#allocation3 + $0x70] sm:$0xff] %v1404
    %1443 = vst [vmem:[#allocation3 + $0x78] sm:$0xff] %v1406
    %1444 = vst [vmem:[#allocation3 + $0x80] sm:$0xff] %v1337
    %1445 = vst [vmem:[#allocation3 + $0x88] sm:$0xff] %v1339
    %1446 = vst [vmem:[#allocation3 + $0x90] sm:$0xff] %v1410
    %1447 = vst [vmem:[#allocation3 + $0x98] sm:$0xff] %v1412
    %1448 = vst [vmem:[#allocation3 + $0xa0] sm:$0xff] %v1341
    %1449 = vst [vmem:[#allocation3 + $0xa8] sm:$0xff] %v1343
    %1450 = vst [vmem:[#allocation3 + $0xb0] sm:$0xff] %v1414
    %1451 = vst [vmem:[#allocation3 + $0xb8] sm:$0xff] %v1416
    %1452 = vst [vmem:[#allocation3 + $0xc0] sm:$0xff] %v1347
    %1453 = vst [vmem:[#allocation3 + $0xc8] sm:$0xff] %v1349
    %1454 = vst [vmem:[#allocation3 + $0xd0] sm:$0xff] %v1420
    %1455 = vst [vmem:[#allocation3 + $0xd8] sm:$0xff] %v1422
    %1456 = vst [vmem:[#allocation3 + $0xe0] sm:$0xff] %v1351
    %1457 = vst [vmem:[#allocation3 + $0xe8] sm:$0xff] %v1353
    %1458 = vst [vmem:[#allocation3 + $0xf0] sm:$0xff] %v1424
    %1459 = vst [vmem:[#allocation3 + $0xf8] sm:$0xff] %v1426
    %v1460 = vld [vmem:[#allocation3] sm:$0xff]
    %v1461 = vld [vmem:[#allocation3 + $0x8] sm:$0xff]
    %v1462 = vld [vmem:[#allocation3 + $0x10] sm:$0xff]
    %v1463 = vld [vmem:[#allocation3 + $0x18] sm:$0xff]
    %v1464 = vpack.c.bf16 %v1195, %v1195
    %v1465 = vld [vmem:[#allocation9] sm:$0xff]
    %v1466 = vld [vmem:[#allocation9 + $0x8] sm:$0xff]
    %v1467 = vld [vmem:[#allocation9 + $0x10] sm:$0xff]
    %v1468 = vld [vmem:[#allocation9 + $0x18] sm:$0xff]
    %v1469 = vld [vmem:[#allocation9 + $0x20] sm:$0xff]
    %v1470 = vld [vmem:[#allocation9 + $0x28] sm:$0xff]
    %v1471 = vld [vmem:[#allocation9 + $0x30] sm:$0xff]
    %v1472 = vld [vmem:[#allocation9 + $0x38] sm:$0xff]
    %v1473 = vld [vmem:[#allocation9 + $0x40] sm:$0xff]
    %v1474 = vld [vmem:[#allocation9 + $0x48] sm:$0xff]
    %v1475 = vld [vmem:[#allocation9 + $0x50] sm:$0xff]
    %v1476 = vld [vmem:[#allocation9 + $0x58] sm:$0xff]
    %v1477 = vld [vmem:[#allocation9 + $0x60] sm:$0xff]
    %v1478 = vld [vmem:[#allocation9 + $0x68] sm:$0xff]
    %v1479 = vld [vmem:[#allocation9 + $0x70] sm:$0xff]
    %v1480 = vld [vmem:[#allocation9 + $0x78] sm:$0xff]
    %v1481 = vld [vmem:[#allocation9 + $0x80] sm:$0xff]
    %v1482 = vld [vmem:[#allocation9 + $0x88] sm:$0xff]
    %v1483 = vld [vmem:[#allocation9 + $0x90] sm:$0xff]
    %v1484 = vld [vmem:[#allocation9 + $0x98] sm:$0xff]
    %v1485 = vld [vmem:[#allocation9 + $0xa0] sm:$0xff]
    %v1486 = vld [vmem:[#allocation9 + $0xa8] sm:$0xff]
    %v1487 = vld [vmem:[#allocation9 + $0xb0] sm:$0xff]
    %v1488 = vld [vmem:[#allocation9 + $0xb8] sm:$0xff]
    %v1489 = vld [vmem:[#allocation9 + $0xc0] sm:$0xff]
    %v1490 = vld [vmem:[#allocation9 + $0xc8] sm:$0xff]
    %v1491 = vld [vmem:[#allocation9 + $0xd0] sm:$0xff]
    %v1492 = vld [vmem:[#allocation9 + $0xd8] sm:$0xff]
    %v1493 = vld [vmem:[#allocation9 + $0xe0] sm:$0xff]
    %v1494 = vld [vmem:[#allocation9 + $0xe8] sm:$0xff]
    %v1495 = vld [vmem:[#allocation9 + $0xf0] sm:$0xff]
    %v1496 = vld [vmem:[#allocation9 + $0xf8] sm:$0xff]
    %v1529 = vunpack.c.l.b16 %v1465
    %v1530 = vunpack.c.h.b16 %v1465
    %v1531 = vunpack.c.l.b16 %v1466
    %v1532 = vunpack.c.h.b16 %v1466
    %v1533 = vunpack.c.l.b16 %v1467
    %v1534 = vunpack.c.h.b16 %v1467
    %v1535 = vunpack.c.l.b16 %v1468
    %v1536 = vunpack.c.h.b16 %v1468
    %v1537 = vunpack.c.l.b16 %v1469
    %v1538 = vunpack.c.h.b16 %v1469
    %v1539 = vunpack.c.l.b16 %v1470
    %v1540 = vunpack.c.h.b16 %v1470
    %v1541 = vunpack.c.l.b16 %v1471
    %v1542 = vunpack.c.h.b16 %v1471
    %v1543 = vunpack.c.l.b16 %v1472
    %v1544 = vunpack.c.h.b16 %v1472
    %v1545 = vunpack.c.l.b16 %v1473
    %v1546 = vunpack.c.h.b16 %v1473
    %v1547 = vunpack.c.l.b16 %v1474
    %v1548 = vunpack.c.h.b16 %v1474
    %v1549 = vunpack.c.l.b16 %v1475
    %v1550 = vunpack.c.h.b16 %v1475
    %v1551 = vunpack.c.l.b16 %v1476
    %v1552 = vunpack.c.h.b16 %v1476
    %v1553 = vunpack.c.l.b16 %v1477
    %v1554 = vunpack.c.h.b16 %v1477
    %v1555 = vunpack.c.l.b16 %v1478
    %v1556 = vunpack.c.h.b16 %v1478
    %v1557 = vunpack.c.l.b16 %v1479
    %v1558 = vunpack.c.h.b16 %v1479
    %v1559 = vunpack.c.l.b16 %v1480
    %v1560 = vunpack.c.h.b16 %v1480
    %v1561 = vunpack.c.l.b16 %v1481
    %v1562 = vunpack.c.h.b16 %v1481
    %v1563 = vunpack.c.l.b16 %v1482
    %v1564 = vunpack.c.h.b16 %v1482
    %v1565 = vunpack.c.l.b16 %v1483
    %v1566 = vunpack.c.h.b16 %v1483
    %v1567 = vunpack.c.l.b16 %v1484
    %v1568 = vunpack.c.h.b16 %v1484
    %v1569 = vunpack.c.l.b16 %v1485
    %v1570 = vunpack.c.h.b16 %v1485
    %v1571 = vunpack.c.l.b16 %v1486
    %v1572 = vunpack.c.h.b16 %v1486
    %v1573 = vunpack.c.l.b16 %v1487
    %v1574 = vunpack.c.h.b16 %v1487
    %v1575 = vunpack.c.l.b16 %v1488
    %v1576 = vunpack.c.h.b16 %v1488
    %v1577 = vunpack.c.l.b16 %v1489
    %v1578 = vunpack.c.h.b16 %v1489
    %v1579 = vunpack.c.l.b16 %v1490
    %v1580 = vunpack.c.h.b16 %v1490
    %v1581 = vunpack.c.l.b16 %v1491
    %v1582 = vunpack.c.h.b16 %v1491
    %v1583 = vunpack.c.l.b16 %v1492
    %v1584 = vunpack.c.h.b16 %v1492
    %v1585 = vunpack.c.l.b16 %v1493
    %v1586 = vunpack.c.h.b16 %v1493
    %v1587 = vunpack.c.l.b16 %v1494
    %v1588 = vunpack.c.h.b16 %v1494
    %v1589 = vunpack.c.l.b16 %v1495
    %v1590 = vunpack.c.h.b16 %v1495
    %v1591 = vunpack.c.l.b16 %v1496
    %v1592 = vunpack.c.h.b16 %v1496
    %v1593 = vpack.c.b16 %v1533, %v1529
    %v1594 = vpack.c.b16 %v1534, %v1530
    %v1595 = vpack.c.b16 %v1535, %v1531
    %v1596 = vpack.c.b16 %v1536, %v1532
    %v1597 = vpack.c.b16 %v1541, %v1537
    %v1598 = vpack.c.b16 %v1542, %v1538
    %v1599 = vpack.c.b16 %v1543, %v1539
    %v1600 = vpack.c.b16 %v1544, %v1540
    %v1601 = vpack.c.b16 %v1549, %v1545
    %v1602 = vpack.c.b16 %v1550, %v1546
    %v1603 = vpack.c.b16 %v1551, %v1547
    %v1604 = vpack.c.b16 %v1552, %v1548
    %v1605 = vpack.c.b16 %v1557, %v1553
    %v1606 = vpack.c.b16 %v1558, %v1554
    %v1607 = vpack.c.b16 %v1559, %v1555
    %v1608 = vpack.c.b16 %v1560, %v1556
    %v1609 = vpack.c.b16 %v1565, %v1561
    %v1610 = vpack.c.b16 %v1566, %v1562
    %v1611 = vpack.c.b16 %v1567, %v1563
    %v1612 = vpack.c.b16 %v1568, %v1564
    %v1613 = vpack.c.b16 %v1573, %v1569
    %v1614 = vpack.c.b16 %v1574, %v1570
    %v1615 = vpack.c.b16 %v1575, %v1571
    %v1616 = vpack.c.b16 %v1576, %v1572
    %v1617 = vpack.c.b16 %v1581, %v1577
    %v1618 = vpack.c.b16 %v1582, %v1578
    %v1619 = vpack.c.b16 %v1583, %v1579
    %v1620 = vpack.c.b16 %v1584, %v1580
    %v1621 = vpack.c.b16 %v1589, %v1585
    %v1622 = vpack.c.b16 %v1590, %v1586
    %v1623 = vpack.c.b16 %v1591, %v1587
    %v1624 = vpack.c.b16 %v1592, %v1588
    %1657 = vmatprep.subr.bf16.mxu0 %v1594
    %1658 = vmatpush1.bf16.msra.mxu0 %v1593
    %1659 = vmatprep.subr.bf16.mxu0 %v1598
    %1660 = vmatpush1.bf16.msra.mxu0 %v1597
    %1661 = vmatprep.subr.bf16.mxu0 %v1602
    %1662 = vmatpush1.bf16.msra.mxu0 %v1601
    %1663 = vmatprep.subr.bf16.mxu0 %v1606
    %1664 = vmatpush1.bf16.msra.mxu0 %v1605
    %1665 = vmatprep.subr.bf16.mxu0 %v1610
    %1666 = vmatpush1.bf16.msra.mxu0 %v1609
    %1667 = vmatprep.subr.bf16.mxu0 %v1614
    %1668 = vmatpush1.bf16.msra.mxu0 %v1613
    %1669 = vmatprep.subr.bf16.mxu0 %v1618
    %1670 = vmatpush1.bf16.msra.mxu0 %v1617
    %1671 = vmatprep.subr.bf16.mxu0 %v1622
    %1672 = vmatpush1.bf16.msra.mxu0 %v1621
    %1673 = vmatprep.subr.bf16.mxu0 0
    %1674 = vmatpush1.bf16.msra.mxu0 0
    %1675 = vmatprep.subr.bf16.mxu0 0
    %1676 = vmatpush1.bf16.msra.mxu0 0
    %1677 = vmatprep.subr.bf16.mxu0 0
    %1678 = vmatpush1.bf16.msra.mxu0 0
    %1679 = vmatprep.subr.bf16.mxu0 0
    %1680 = vmatpush1.bf16.msra.mxu0 0
    %1681 = vmatprep.subr.bf16.mxu0 0
    %1682 = vmatpush1.bf16.msra.mxu0 0
    %1683 = vmatprep.subr.bf16.mxu0 0
    %1684 = vmatpush1.bf16.msra.mxu0 0
    %1685 = vmatprep.subr.bf16.mxu0 0
    %1686 = vmatpush1.bf16.msra.mxu0 0
    %1687 = vmatprep.subr.bf16.mxu0 0
    %1688 = vmatpush1.bf16.msra.mxu0 0
    %1689 = vmatprep.mubr.bf16.mxu0 0
    %1690 = vmatmul.mubr.bf16.gmra.mrb[0].mxu0 %v1464
    %v1691 = vpop.f32.mrb[0].mxu0
    %v1692 = vadd.f32 0.0, %v1691
    %v1693 = vpop.f32.mrb[0].mxu0
    %v1694 = vadd.f32 0.0, %v1693
    %v1695 = vpop.f32.mrb[0].mxu0
    %v1696 = vpop.f32.mrb[0].mxu0
    %1697 = vdwg.mxu0
    %1698 = vmatprep.subr.bf16.mxu0 %v1596
    %1699 = vmatpush1.bf16.msra.mxu0 %v1595
    %1700 = vmatprep.subr.bf16.mxu0 %v1600
    %1701 = vmatpush1.bf16.msra.mxu0 %v1599
    %1702 = vmatprep.subr.bf16.mxu0 %v1604
    %1703 = vmatpush1.bf16.msra.mxu0 %v1603
    %1704 = vmatprep.subr.bf16.mxu0 %v1608
    %1705 = vmatpush1.bf16.msra.mxu0 %v1607
    %1706 = vmatprep.subr.bf16.mxu0 %v1612
    %1707 = vmatpush1.bf16.msra.mxu0 %v1611
    %1708 = vmatprep.subr.bf16.mxu0 %v1616
    %1709 = vmatpush1.bf16.msra.mxu0 %v1615
    %1710 = vmatprep.subr.bf16.mxu0 %v1620
    %1711 = vmatpush1.bf16.msra.mxu0 %v1619
    %1712 = vmatprep.subr.bf16.mxu0 %v1624
    %1713 = vmatpush1.bf16.msra.mxu0 %v1623
    %1714 = vmatprep.subr.bf16.mxu0 0
    %1715 = vmatpush1.bf16.msra.mxu0 0
    %1716 = vmatprep.subr.bf16.mxu0 0
    %1717 = vmatpush1.bf16.msra.mxu0 0
    %1718 = vmatprep.subr.bf16.mxu0 0
    %1719 = vmatpush1.bf16.msra.mxu0 0
    %1720 = vmatprep.subr.bf16.mxu0 0
    %1721 = vmatpush1.bf16.msra.mxu0 0
    %1722 = vmatprep.subr.bf16.mxu0 0
    %1723 = vmatpush1.bf16.msra.mxu0 0
    %1724 = vmatprep.subr.bf16.mxu0 0
    %1725 = vmatpush1.bf16.msra.mxu0 0
    %1726 = vmatprep.subr.bf16.mxu0 0
    %1727 = vmatpush1.bf16.msra.mxu0 0
    %1728 = vmatprep.subr.bf16.mxu0 0
    %1729 = vmatpush1.bf16.msra.mxu0 0
    %1730 = vmatprep.mubr.bf16.mxu0 0
    %1731 = vmatmul.mubr.bf16.gmra.mrb[0].mxu0 %v1464
    %v1732 = vpop.f32.mrb[0].mxu0
    %v1733 = vadd.f32 0.0, %v1732
    %v1734 = vpop.f32.mrb[0].mxu0
    %v1735 = vadd.f32 0.0, %v1734
    %v1736 = vpop.f32.mrb[0].mxu0
    %v1737 = vpop.f32.mrb[0].mxu0
    %1738 = vdwg.mxu0
    %v1739 = vadd.f32 %v1460, %v1692
    %v1740 = vadd.f32 %v1461, %v1694
    %v1741 = vadd.f32 %v1462, %v1733
    %v1742 = vadd.f32 %v1463, %v1735
    %v1743 = vxor.u32 %v1739, 2147483648
    %v1744 = vmul.f32 %v1743, 1.442695
    %v1745 = vpow.pop %v1744
    %v1746 = vadd.f32 %v1745, 1.0
    %v1747 = vrcp.pop %v1746
    %v1748 = vmul.f32 1.0, %v1747
    %v1749 = vxor.u32 %v1740, 2147483648
    %v1750 = vmul.f32 %v1749, 1.442695
    %v1751 = vpow.pop %v1750
    %v1752 = vadd.f32 %v1751, 1.0
    %v1753 = vrcp.pop %v1752
    %v1754 = vmul.f32 1.0, %v1753
    %v1755 = vtanh.pop %v1741
    %v1756 = vxor.u32 %v1742, 2147483648
    %v1757 = vmul.f32 %v1756, 1.442695
    %v1758 = vpow.pop %v1757
    %v1759 = vadd.f32 %v1758, 1.0
    %v1760 = vrcp.pop %v1759
    %v1761 = vmul.f32 1.0, %v1760
    %v1762 = vmul.f32 %v1754, %v1193
    %v1763 = vmul.f32 %v1748, %v1755
    %v1764 = vadd.f32 %v1762, %v1763
    %v1765 = vtanh.pop %v1764
    %v1766 = vmul.f32 %v1761, %v1765
    %v1767 = vld [vmem:[#allocation3 + $0x20] sm:$0xff]
    %v1768 = vld [vmem:[#allocation3 + $0x28] sm:$0xff]
    %v1769 = vld [vmem:[#allocation3 + $0x30] sm:$0xff]
    %v1770 = vld [vmem:[#allocation3 + $0x38] sm:$0xff]
    %v1771 = vpack.c.bf16 %v1766, %v1766
    %1772 = vmatprep.subr.bf16.mxu0 %v1594
    %1773 = vmatpush1.bf16.msra.mxu0 %v1593
    %1774 = vmatprep.subr.bf16.mxu0 %v1598
    %1775 = vmatpush1.bf16.msra.mxu0 %v1597
    %1776 = vmatprep.subr.bf16.mxu0 %v1602
    %1777 = vmatpush1.bf16.msra.mxu0 %v1601
    %1778 = vmatprep.subr.bf16.mxu0 %v1606
    %1779 = vmatpush1.bf16.msra.mxu0 %v1605
    %1780 = vmatprep.subr.bf16.mxu0 %v1610
    %1781 = vmatpush1.bf16.msra.mxu0 %v1609
    %1782 = vmatprep.subr.bf16.mxu0 %v1614
    %1783 = vmatpush1.bf16.msra.mxu0 %v1613
    %1784 = vmatprep.subr.bf16.mxu0 %v1618
    %1785 = vmatpush1.bf16.msra.mxu0 %v1617
    %1786 = vmatprep.subr.bf16.mxu0 %v1622
    %1787 = vmatpush1.bf16.msra.mxu0 %v1621
    %1788 = vmatprep.subr.bf16.mxu0 0
    %1789 = vmatpush1.bf16.msra.mxu0 0
    %1790 = vmatprep.subr.bf16.mxu0 0
    %1791 = vmatpush1.bf16.msra.mxu0 0
    %1792 = vmatprep.subr.bf16.mxu0 0
    %1793 = vmatpush1.bf16.msra.mxu0 0
    %1794 = vmatprep.subr.bf16.mxu0 0
    %1795 = vmatpush1.bf16.msra.mxu0 0
    %1796 = vmatprep.subr.bf16.mxu0 0
    %1797 = vmatpush1.bf16.msra.mxu0 0
    %1798 = vmatprep.subr.bf16.mxu0 0
    %1799 = vmatpush1.bf16.msra.mxu0 0
    %1800 = vmatprep.subr.bf16.mxu0 0
    %1801 = vmatpush1.bf16.msra.mxu0 0
    %1802 = vmatprep.subr.bf16.mxu0 0
    %1803 = vmatpush1.bf16.msra.mxu0 0
    %1804 = vmatprep.mubr.bf16.mxu0 0
    %1805 = vmatmul.mubr.bf16.gmra.mrb[0].mxu0 %v1771
    %v1806 = vpop.f32.mrb[0].mxu0
    %v1807 = vadd.f32 0.0, %v1806
    %v1808 = vpop.f32.mrb[0].mxu0
    %v1809 = vadd.f32 0.0, %v1808
    %v1810 = vpop.f32.mrb[0].mxu0
    %v1811 = vpop.f32.mrb[0].mxu0
    %1812 = vdwg.mxu0
    %1813 = vmatprep.subr.bf16.mxu0 %v1596
    %1814 = vmatpush1.bf16.msra.mxu0 %v1595
    %1815 = vmatprep.subr.bf16.mxu0 %v1600
    %1816 = vmatpush1.bf16.msra.mxu0 %v1599
    %1817 = vmatprep.subr.bf16.mxu0 %v1604
    %1818 = vmatpush1.bf16.msra.mxu0 %v1603
    %1819 = vmatprep.subr.bf16.mxu0 %v1608
    %1820 = vmatpush1.bf16.msra.mxu0 %v1607
    %1821 = vmatprep.subr.bf16.mxu0 %v1612
    %1822 = vmatpush1.bf16.msra.mxu0 %v1611
    %1823 = vmatprep.subr.bf16.mxu0 %v1616
    %1824 = vmatpush1.bf16.msra.mxu0 %v1615
    %1825 = vmatprep.subr.bf16.mxu0 %v1620
    %1826 = vmatpush1.bf16.msra.mxu0 %v1619
    %1827 = vmatprep.subr.bf16.mxu0 %v1624
    %1828 = vmatpush1.bf16.msra.mxu0 %v1623
    %1829 = vmatprep.subr.bf16.mxu0 0
    %1830 = vmatpush1.bf16.msra.mxu0 0
    %1831 = vmatprep.subr.bf16.mxu0 0
    %1832 = vmatpush1.bf16.msra.mxu0 0
    %1833 = vmatprep.subr.bf16.mxu0 0
    %1834 = vmatpush1.bf16.msra.mxu0 0
    %1835 = vmatprep.subr.bf16.mxu0 0
    %1836 = vmatpush1.bf16.msra.mxu0 0
    %1837 = vmatprep.subr.bf16.mxu0 0
    %1838 = vmatpush1.bf16.msra.mxu0 0
    %1839 = vmatprep.subr.bf16.mxu0 0
    %1840 = vmatpush1.bf16.msra.mxu0 0
    %1841 = vmatprep.subr.bf16.mxu0 0
    %1842 = vmatpush1.bf16.msra.mxu0 0
    %1843 = vmatprep.subr.bf16.mxu0 0
    %1844 = vmatpush1.bf16.msra.mxu0 0
    %1845 = vmatprep.mubr.bf16.mxu0 0
    %1846 = vmatmul.mubr.bf16.gmra.mrb[0].mxu0 %v1771
    %v1847 = vpop.f32.mrb[0].mxu0
    %v1848 = vadd.f32 0.0, %v1847
    %v1849 = vpop.f32.mrb[0].mxu0
    %v1850 = vadd.f32 0.0, %v1849
    %v1851 = vpop.f32.mrb[0].mxu0
    %v1852 = vpop.f32.mrb[0].mxu0
    %1853 = vdwg.mxu0
    %v1854 = vadd.f32 %v1767, %v1807
    %v1855 = vadd.f32 %v1768, %v1809
    %v1856 = vadd.f32 %v1769, %v1848
    %v1857 = vadd.f32 %v1770, %v1850
    %v1858 = vxor.u32 %v1854, 2147483648
    %v1859 = vmul.f32 %v1858, 1.442695
    %v1860 = vpow.pop %v1859
    %v1861 = vadd.f32 %v1860, 1.0
    %v1862 = vrcp.pop %v1861
    %v1863 = vmul.f32 1.0, %v1862
    %v1864 = vxor.u32 %v1855, 2147483648
    %v1865 = vmul.f32 %v1864, 1.442695
    %v1866 = vpow.pop %v1865
    %v1867 = vadd.f32 %v1866, 1.0
    %v1868 = vrcp.pop %v1867
    %v1869 = vmul.f32 1.0, %v1868
    %v1870 = vtanh.pop %v1856
    %v1871 = vxor.u32 %v1857, 2147483648
    %v1872 = vmul.f32 %v1871, 1.442695
    %v1873 = vpow.pop %v1872
    %v1874 = vadd.f32 %v1873, 1.0
    %v1875 = vrcp.pop %v1874
    %v1876 = vmul.f32 1.0, %v1875
    %v1877 = vmul.f32 %v1869, %v1764
    %v1878 = vmul.f32 %v1863, %v1870
    %v1879 = vadd.f32 %v1877, %v1878
    %v1880 = vtanh.pop %v1879
    %v1881 = vmul.f32 %v1876, %v1880
    %v1882 = vld [vmem:[#allocation3 + $0x40] sm:$0xff]
    %v1883 = vld [vmem:[#allocation3 + $0x48] sm:$0xff]
    %v1884 = vld [vmem:[#allocation3 + $0x50] sm:$0xff]
    %v1885 = vld [vmem:[#allocation3 + $0x58] sm:$0xff]
    %v1886 = vpack.c.bf16 %v1881, %v1881
    %1887 = vmatprep.subr.bf16.mxu0 %v1594
    %1888 = vmatpush1.bf16.msra.mxu0 %v1593
    %1889 = vmatprep.subr.bf16.mxu0 %v1598
    %1890 = vmatpush1.bf16.msra.mxu0 %v1597
    %1891 = vmatprep.subr.bf16.mxu0 %v1602
    %1892 = vmatpush1.bf16.msra.mxu0 %v1601
    %1893 = vmatprep.subr.bf16.mxu0 %v1606
    %1894 = vmatpush1.bf16.msra.mxu0 %v1605
    %1895 = vmatprep.subr.bf16.mxu0 %v1610
    %1896 = vmatpush1.bf16.msra.mxu0 %v1609
    %1897 = vmatprep.subr.bf16.mxu0 %v1614
    %1898 = vmatpush1.bf16.msra.mxu0 %v1613
    %1899 = vmatprep.subr.bf16.mxu0 %v1618
    %1900 = vmatpush1.bf16.msra.mxu0 %v1617
    %1901 = vmatprep.subr.bf16.mxu0 %v1622
    %1902 = vmatpush1.bf16.msra.mxu0 %v1621
    %1903 = vmatprep.subr.bf16.mxu0 0
    %1904 = vmatpush1.bf16.msra.mxu0 0
    %1905 = vmatprep.subr.bf16.mxu0 0
    %1906 = vmatpush1.bf16.msra.mxu0 0
    %1907 = vmatprep.subr.bf16.mxu0 0
    %1908 = vmatpush1.bf16.msra.mxu0 0
    %1909 = vmatprep.subr.bf16.mxu0 0
    %1910 = vmatpush1.bf16.msra.mxu0 0
    %1911 = vmatprep.subr.bf16.mxu0 0
    %1912 = vmatpush1.bf16.msra.mxu0 0
    %1913 = vmatprep.subr.bf16.mxu0 0
    %1914 = vmatpush1.bf16.msra.mxu0 0
    %1915 = vmatprep.subr.bf16.mxu0 0
    %1916 = vmatpush1.bf16.msra.mxu0 0
    %1917 = vmatprep.subr.bf16.mxu0 0
    %1918 = vmatpush1.bf16.msra.mxu0 0
    %1919 = vmatprep.mubr.bf16.mxu0 0
    %1920 = vmatmul.mubr.bf16.gmra.mrb[0].mxu0 %v1886
    %v1921 = vpop.f32.mrb[0].mxu0
    %v1922 = vadd.f32 0.0, %v1921
    %v1923 = vpop.f32.mrb[0].mxu0
    %v1924 = vadd.f32 0.0, %v1923
    %v1925 = vpop.f32.mrb[0].mxu0
    %v1926 = vpop.f32.mrb[0].mxu0
    %1927 = vdwg.mxu0
    %1928 = vmatprep.subr.bf16.mxu0 %v1596
    %1929 = vmatpush1.bf16.msra.mxu0 %v1595
    %1930 = vmatprep.subr.bf16.mxu0 %v1600
    %1931 = vmatpush1.bf16.msra.mxu0 %v1599
    %1932 = vmatprep.subr.bf16.mxu0 %v1604
    %1933 = vmatpush1.bf16.msra.mxu0 %v1603
    %1934 = vmatprep.subr.bf16.mxu0 %v1608
    %1935 = vmatpush1.bf16.msra.mxu0 %v1607
    %1936 = vmatprep.subr.bf16.mxu0 %v1612
    %1937 = vmatpush1.bf16.msra.mxu0 %v1611
    %1938 = vmatprep.subr.bf16.mxu0 %v1616
    %1939 = vmatpush1.bf16.msra.mxu0 %v1615
    %1940 = vmatprep.subr.bf16.mxu0 %v1620
    %1941 = vmatpush1.bf16.msra.mxu0 %v1619
    %1942 = vmatprep.subr.bf16.mxu0 %v1624
    %1943 = vmatpush1.bf16.msra.mxu0 %v1623
    %1944 = vmatprep.subr.bf16.mxu0 0
    %1945 = vmatpush1.bf16.msra.mxu0 0
    %1946 = vmatprep.subr.bf16.mxu0 0
    %1947 = vmatpush1.bf16.msra.mxu0 0
    %1948 = vmatprep.subr.bf16.mxu0 0
    %1949 = vmatpush1.bf16.msra.mxu0 0
    %1950 = vmatprep.subr.bf16.mxu0 0
    %1951 = vmatpush1.bf16.msra.mxu0 0
    %1952 = vmatprep.subr.bf16.mxu0 0
    %1953 = vmatpush1.bf16.msra.mxu0 0
    %1954 = vmatprep.subr.bf16.mxu0 0
    %1955 = vmatpush1.bf16.msra.mxu0 0
    %1956 = vmatprep.subr.bf16.mxu0 0
    %1957 = vmatpush1.bf16.msra.mxu0 0
    %1958 = vmatprep.subr.bf16.mxu0 0
    %1959 = vmatpush1.bf16.msra.mxu0 0
    %1960 = vmatprep.mubr.bf16.mxu0 0
    %1961 = vmatmul.mubr.bf16.gmra.mrb[0].mxu0 %v1886
    %v1962 = vpop.f32.mrb[0].mxu0
    %v1963 = vadd.f32 0.0, %v1962
    %v1964 = vpop.f32.mrb[0].mxu0
    %v1965 = vadd.f32 0.0, %v1964
    %v1966 = vpop.f32.mrb[0].mxu0
    %v1967 = vpop.f32.mrb[0].mxu0
    %1968 = vdwg.mxu0
    %v1969 = vadd.f32 %v1882, %v1922
    %v1970 = vadd.f32 %v1883, %v1924
    %v1971 = vadd.f32 %v1884, %v1963
    %v1972 = vadd.f32 %v1885, %v1965
    %v1973 = vxor.u32 %v1969, 2147483648
    %v1974 = vmul.f32 %v1973, 1.442695
    %v1975 = vpow.pop %v1974
    %v1976 = vadd.f32 %v1975, 1.0
    %v1977 = vrcp.pop %v1976
    %v1978 = vmul.f32 1.0, %v1977
    %v1979 = vxor.u32 %v1970, 2147483648
    %v1980 = vmul.f32 %v1979, 1.442695
    %v1981 = vpow.pop %v1980
    %v1982 = vadd.f32 %v1981, 1.0
    %v1983 = vrcp.pop %v1982
    %v1984 = vmul.f32 1.0, %v1983
    %v1985 = vtanh.pop %v1971
    %v1986 = vxor.u32 %v1972, 2147483648
    %v1987 = vmul.f32 %v1986, 1.442695
    %v1988 = vpow.pop %v1987
    %v1989 = vadd.f32 %v1988, 1.0
    %v1990 = vrcp.pop %v1989
    %v1991 = vmul.f32 1.0, %v1990
    %v1992 = vmul.f32 %v1984, %v1879
    %v1993 = vmul.f32 %v1978, %v1985
    %v1994 = vadd.f32 %v1992, %v1993
    %v1995 = vtanh.pop %v1994
    %v1996 = vmul.f32 %v1991, %v1995
    %v1997 = vld [vmem:[#allocation3 + $0x60] sm:$0xff]
    %v1998 = vld [vmem:[#allocation3 + $0x68] sm:$0xff]
    %v1999 = vld [vmem:[#allocation3 + $0x70] sm:$0xff]
    %v2000 = vld [vmem:[#allocation3 + $0x78] sm:$0xff]
    %v2001 = vpack.c.bf16 %v1996, %v1996
    %2002 = vmatprep.subr.bf16.mxu0 %v1594
    %2003 = vmatpush1.bf16.msra.mxu0 %v1593
    %2004 = vmatprep.subr.bf16.mxu0 %v1598
    %2005 = vmatpush1.bf16.msra.mxu0 %v1597
    %2006 = vmatprep.subr.bf16.mxu0 %v1602
    %2007 = vmatpush1.bf16.msra.mxu0 %v1601
    %2008 = vmatprep.subr.bf16.mxu0 %v1606
    %2009 = vmatpush1.bf16.msra.mxu0 %v1605
    %2010 = vmatprep.subr.bf16.mxu0 %v1610
    %2011 = vmatpush1.bf16.msra.mxu0 %v1609
    %2012 = vmatprep.subr.bf16.mxu0 %v1614
    %2013 = vmatpush1.bf16.msra.mxu0 %v1613
    %2014 = vmatprep.subr.bf16.mxu0 %v1618
    %2015 = vmatpush1.bf16.msra.mxu0 %v1617
    %2016 = vmatprep.subr.bf16.mxu0 %v1622
    %2017 = vmatpush1.bf16.msra.mxu0 %v1621
    %2018 = vmatprep.subr.bf16.mxu0 0
    %2019 = vmatpush1.bf16.msra.mxu0 0
    %2020 = vmatprep.subr.bf16.mxu0 0
    %2021 = vmatpush1.bf16.msra.mxu0 0
    %2022 = vmatprep.subr.bf16.mxu0 0
    %2023 = vmatpush1.bf16.msra.mxu0 0
    %2024 = vmatprep.subr.bf16.mxu0 0
    %2025 = vmatpush1.bf16.msra.mxu0 0
    %2026 = vmatprep.subr.bf16.mxu0 0
    %2027 = vmatpush1.bf16.msra.mxu0 0
    %2028 = vmatprep.subr.bf16.mxu0 0
    %2029 = vmatpush1.bf16.msra.mxu0 0
    %2030 = vmatprep.subr.bf16.mxu0 0
    %2031 = vmatpush1.bf16.msra.mxu0 0
    %2032 = vmatprep.subr.bf16.mxu0 0
    %2033 = vmatpush1.bf16.msra.mxu0 0
    %2034 = vmatprep.mubr.bf16.mxu0 0
    %2035 = vmatmul.mubr.bf16.gmra.mrb[0].mxu0 %v2001
    %v2036 = vpop.f32.mrb[0].mxu0
    %v2037 = vadd.f32 0.0, %v2036
    %v2038 = vpop.f32.mrb[0].mxu0
    %v2039 = vadd.f32 0.0, %v2038
    %v2040 = vpop.f32.mrb[0].mxu0
    %v2041 = vpop.f32.mrb[0].mxu0
    %2042 = vdwg.mxu0
    %2043 = vmatprep.subr.bf16.mxu0 %v1596
    %2044 = vmatpush1.bf16.msra.mxu0 %v1595
    %2045 = vmatprep.subr.bf16.mxu0 %v1600
    %2046 = vmatpush1.bf16.msra.mxu0 %v1599
    %2047 = vmatprep.subr.bf16.mxu0 %v1604
    %2048 = vmatpush1.bf16.msra.mxu0 %v1603
    %2049 = vmatprep.subr.bf16.mxu0 %v1608
    %2050 = vmatpush1.bf16.msra.mxu0 %v1607
    %2051 = vmatprep.subr.bf16.mxu0 %v1612
    %2052 = vmatpush1.bf16.msra.mxu0 %v1611
    %2053 = vmatprep.subr.bf16.mxu0 %v1616
    %2054 = vmatpush1.bf16.msra.mxu0 %v1615
    %2055 = vmatprep.subr.bf16.mxu0 %v1620
    %2056 = vmatpush1.bf16.msra.mxu0 %v1619
    %2057 = vmatprep.subr.bf16.mxu0 %v1624
    %2058 = vmatpush1.bf16.msra.mxu0 %v1623
    %2059 = vmatprep.subr.bf16.mxu0 0
    %2060 = vmatpush1.bf16.msra.mxu0 0
    %2061 = vmatprep.subr.bf16.mxu0 0
    %2062 = vmatpush1.bf16.msra.mxu0 0
    %2063 = vmatprep.subr.bf16.mxu0 0
    %2064 = vmatpush1.bf16.msra.mxu0 0
    %2065 = vmatprep.subr.bf16.mxu0 0
    %2066 = vmatpush1.bf16.msra.mxu0 0
    %2067 = vmatprep.subr.bf16.mxu0 0
    %2068 = vmatpush1.bf16.msra.mxu0 0
    %2069 = vmatprep.subr.bf16.mxu0 0
    %2070 = vmatpush1.bf16.msra.mxu0 0
    %2071 = vmatprep.subr.bf16.mxu0 0
    %2072 = vmatpush1.bf16.msra.mxu0 0
    %2073 = vmatprep.subr.bf16.mxu0 0
    %2074 = vmatpush1.bf16.msra.mxu0 0
    %2075 = vmatprep.mubr.bf16.mxu0 0
    %2076 = vmatmul.mubr.bf16.gmra.mrb[0].mxu0 %v2001
    %v2077 = vpop.f32.mrb[0].mxu0
    %v2078 = vadd.f32 0.0, %v2077
    %v2079 = vpop.f32.mrb[0].mxu0
    %v2080 = vadd.f32 0.0, %v2079
    %v2081 = vpop.f32.mrb[0].mxu0
    %v2082 = vpop.f32.mrb[0].mxu0
    %2083 = vdwg.mxu0
    %v2084 = vadd.f32 %v1997, %v2037
    %v2085 = vadd.f32 %v1998, %v2039
    %v2086 = vadd.f32 %v1999, %v2078
    %v2087 = vadd.f32 %v2000, %v2080
    %v2088 = vxor.u32 %v2084, 2147483648
    %v2089 = vmul.f32 %v2088, 1.442695
    %v2090 = vpow.pop %v2089
    %v2091 = vadd.f32 %v2090, 1.0
    %v2092 = vrcp.pop %v2091
    %v2093 = vmul.f32 1.0, %v2092
    %v2094 = vxor.u32 %v2085, 2147483648
    %v2095 = vmul.f32 %v2094, 1.442695
    %v2096 = vpow.pop %v2095
    %v2097 = vadd.f32 %v2096, 1.0
    %v2098 = vrcp.pop %v2097
    %v2099 = vmul.f32 1.0, %v2098
    %v2100 = vtanh.pop %v2086
    %v2101 = vxor.u32 %v2087, 2147483648
    %v2102 = vmul.f32 %v2101, 1.442695
    %v2103 = vpow.pop %v2102
    %v2104 = vadd.f32 %v2103, 1.0
    %v2105 = vrcp.pop %v2104
    %v2106 = vmul.f32 1.0, %v2105
    %v2107 = vmul.f32 %v2099, %v1994
    %v2108 = vmul.f32 %v2093, %v2100
    %v2109 = vadd.f32 %v2107, %v2108
    %v2110 = vtanh.pop %v2109
    %v2111 = vmul.f32 %v2106, %v2110
    %v2112 = vld [vmem:[#allocation3 + $0x80] sm:$0xff]
    %v2113 = vld [vmem:[#allocation3 + $0x88] sm:$0xff]
    %v2114 = vld [vmem:[#allocation3 + $0x90] sm:$0xff]
    %v2115 = vld [vmem:[#allocation3 + $0x98] sm:$0xff]
    %v2116 = vpack.c.bf16 %v2111, %v2111
    %2117 = vmatprep.subr.bf16.mxu0 %v1594
    %2118 = vmatpush1.bf16.msra.mxu0 %v1593
    %2119 = vmatprep.subr.bf16.mxu0 %v1598
    %2120 = vmatpush1.bf16.msra.mxu0 %v1597
    %2121 = vmatprep.subr.bf16.mxu0 %v1602
    %2122 = vmatpush1.bf16.msra.mxu0 %v1601
    %2123 = vmatprep.subr.bf16.mxu0 %v1606
    %2124 = vmatpush1.bf16.msra.mxu0 %v1605
    %2125 = vmatprep.subr.bf16.mxu0 %v1610
    %2126 = vmatpush1.bf16.msra.mxu0 %v1609
    %2127 = vmatprep.subr.bf16.mxu0 %v1614
    %2128 = vmatpush1.bf16.msra.mxu0 %v1613
    %2129 = vmatprep.subr.bf16.mxu0 %v1618
    %2130 = vmatpush1.bf16.msra.mxu0 %v1617
    %2131 = vmatprep.subr.bf16.mxu0 %v1622
    %2132 = vmatpush1.bf16.msra.mxu0 %v1621
    %2133 = vmatprep.subr.bf16.mxu0 0
    %2134 = vmatpush1.bf16.msra.mxu0 0
    %2135 = vmatprep.subr.bf16.mxu0 0
    %2136 = vmatpush1.bf16.msra.mxu0 0
    %2137 = vmatprep.subr.bf16.mxu0 0
    %2138 = vmatpush1.bf16.msra.mxu0 0
    %2139 = vmatprep.subr.bf16.mxu0 0
    %2140 = vmatpush1.bf16.msra.mxu0 0
    %2141 = vmatprep.subr.bf16.mxu0 0
    %2142 = vmatpush1.bf16.msra.mxu0 0
    %2143 = vmatprep.subr.bf16.mxu0 0
    %2144 = vmatpush1.bf16.msra.mxu0 0
    %2145 = vmatprep.subr.bf16.mxu0 0
    %2146 = vmatpush1.bf16.msra.mxu0 0
    %2147 = vmatprep.subr.bf16.mxu0 0
    %2148 = vmatpush1.bf16.msra.mxu0 0
    %2149 = vmatprep.mubr.bf16.mxu0 0
    %2150 = vmatmul.mubr.bf16.gmra.mrb[0].mxu0 %v2116
    %v2151 = vpop.f32.mrb[0].mxu0
    %v2152 = vadd.f32 0.0, %v2151
    %v2153 = vpop.f32.mrb[0].mxu0
    %v2154 = vadd.f32 0.0, %v2153
    %v2155 = vpop.f32.mrb[0].mxu0
    %v2156 = vpop.f32.mrb[0].mxu0
    %2157 = vdwg.mxu0
    %2158 = vmatprep.subr.bf16.mxu0 %v1596
    %2159 = vmatpush1.bf16.msra.mxu0 %v1595
    %2160 = vmatprep.subr.bf16.mxu0 %v1600
    %2161 = vmatpush1.bf16.msra.mxu0 %v1599
    %2162 = vmatprep.subr.bf16.mxu0 %v1604
    %2163 = vmatpush1.bf16.msra.mxu0 %v1603
    %2164 = vmatprep.subr.bf16.mxu0 %v1608
    %2165 = vmatpush1.bf16.msra.mxu0 %v1607
    %2166 = vmatprep.subr.bf16.mxu0 %v1612
    %2167 = vmatpush1.bf16.msra.mxu0 %v1611
    %2168 = vmatprep.subr.bf16.mxu0 %v1616
    %2169 = vmatpush1.bf16.msra.mxu0 %v1615
    %2170 = vmatprep.subr.bf16.mxu0 %v1620
    %2171 = vmatpush1.bf16.msra.mxu0 %v1619
    %2172 = vmatprep.subr.bf16.mxu0 %v1624
    %2173 = vmatpush1.bf16.msra.mxu0 %v1623
    %2174 = vmatprep.subr.bf16.mxu0 0
    %2175 = vmatpush1.bf16.msra.mxu0 0
    %2176 = vmatprep.subr.bf16.mxu0 0
    %2177 = vmatpush1.bf16.msra.mxu0 0
    %2178 = vmatprep.subr.bf16.mxu0 0
    %2179 = vmatpush1.bf16.msra.mxu0 0
    %2180 = vmatprep.subr.bf16.mxu0 0
    %2181 = vmatpush1.bf16.msra.mxu0 0
    %2182 = vmatprep.subr.bf16.mxu0 0
    %2183 = vmatpush1.bf16.msra.mxu0 0
    %2184 = vmatprep.subr.bf16.mxu0 0
    %2185 = vmatpush1.bf16.msra.mxu0 0
    %2186 = vmatprep.subr.bf16.mxu0 0
    %2187 = vmatpush1.bf16.msra.mxu0 0
    %2188 = vmatprep.subr.bf16.mxu0 0
    %2189 = vmatpush1.bf16.msra.mxu0 0
    %2190 = vmatprep.mubr.bf16.mxu0 0
    %2191 = vmatmul.mubr.bf16.gmra.mrb[0].mxu0 %v2116
    %v2192 = vpop.f32.mrb[0].mxu0
    %v2193 = vadd.f32 0.0, %v2192
    %v2194 = vpop.f32.mrb[0].mxu0
    %v2195 = vadd.f32 0.0, %v2194
    %v2196 = vpop.f32.mrb[0].mxu0
    %v2197 = vpop.f32.mrb[0].mxu0
    %2198 = vdwg.mxu0
    %v2199 = vadd.f32 %v2112, %v2152
    %v2200 = vadd.f32 %v2113, %v2154
    %v2201 = vadd.f32 %v2114, %v2193
    %v2202 = vadd.f32 %v2115, %v2195
    %v2203 = vxor.u32 %v2199, 2147483648
    %v2204 = vmul.f32 %v2203, 1.442695
    %v2205 = vpow.pop %v2204
    %v2206 = vadd.f32 %v2205, 1.0
    %v2207 = vrcp.pop %v2206
    %v2208 = vmul.f32 1.0, %v2207
    %v2209 = vxor.u32 %v2200, 2147483648
    %v2210 = vmul.f32 %v2209, 1.442695
    %v2211 = vpow.pop %v2210
    %v2212 = vadd.f32 %v2211, 1.0
    %v2213 = vrcp.pop %v2212
    %v2214 = vmul.f32 1.0, %v2213
    %v2215 = vtanh.pop %v2201
    %v2216 = vxor.u32 %v2202, 2147483648
    %v2217 = vmul.f32 %v2216, 1.442695
    %v2218 = vpow.pop %v2217
    %v2219 = vadd.f32 %v2218, 1.0
    %v2220 = vrcp.pop %v2219
    %v2221 = vmul.f32 1.0, %v2220
    %v2222 = vmul.f32 %v2214, %v2109
    %v2223 = vmul.f32 %v2208, %v2215
    %v2224 = vadd.f32 %v2222, %v2223
    %v2225 = vtanh.pop %v2224
    %v2226 = vmul.f32 %v2221, %v2225
    %v2227 = vld [vmem:[#allocation3 + $0xa0] sm:$0xff]
    %v2228 = vld [vmem:[#allocation3 + $0xa8] sm:$0xff]
    %v2229 = vld [vmem:[#allocation3 + $0xb0] sm:$0xff]
    %v2230 = vld [vmem:[#allocation3 + $0xb8] sm:$0xff]
    %v2231 = vpack.c.bf16 %v2226, %v2226
    %2232 = vmatprep.subr.bf16.mxu0 %v1594
    %2233 = vmatpush1.bf16.msra.mxu0 %v1593
    %2234 = vmatprep.subr.bf16.mxu0 %v1598
    %2235 = vmatpush1.bf16.msra.mxu0 %v1597
    %2236 = vmatprep.subr.bf16.mxu0 %v1602
    %2237 = vmatpush1.bf16.msra.mxu0 %v1601
    %2238 = vmatprep.subr.bf16.mxu0 %v1606
    %2239 = vmatpush1.bf16.msra.mxu0 %v1605
    %2240 = vmatprep.subr.bf16.mxu0 %v1610
    %2241 = vmatpush1.bf16.msra.mxu0 %v1609
    %2242 = vmatprep.subr.bf16.mxu0 %v1614
    %2243 = vmatpush1.bf16.msra.mxu0 %v1613
    %2244 = vmatprep.subr.bf16.mxu0 %v1618
    %2245 = vmatpush1.bf16.msra.mxu0 %v1617
    %2246 = vmatprep.subr.bf16.mxu0 %v1622
    %2247 = vmatpush1.bf16.msra.mxu0 %v1621
    %2248 = vmatprep.subr.bf16.mxu0 0
    %2249 = vmatpush1.bf16.msra.mxu0 0
    %2250 = vmatprep.subr.bf16.mxu0 0
    %2251 = vmatpush1.bf16.msra.mxu0 0
    %2252 = vmatprep.subr.bf16.mxu0 0
    %2253 = vmatpush1.bf16.msra.mxu0 0
    %2254 = vmatprep.subr.bf16.mxu0 0
    %2255 = vmatpush1.bf16.msra.mxu0 0
    %2256 = vmatprep.subr.bf16.mxu0 0
    %2257 = vmatpush1.bf16.msra.mxu0 0
    %2258 = vmatprep.subr.bf16.mxu0 0
    %2259 = vmatpush1.bf16.msra.mxu0 0
    %2260 = vmatprep.subr.bf16.mxu0 0
    %2261 = vmatpush1.bf16.msra.mxu0 0
    %2262 = vmatprep.subr.bf16.mxu0 0
    %2263 = vmatpush1.bf16.msra.mxu0 0
    %2264 = vmatprep.mubr.bf16.mxu0 0
    %2265 = vmatmul.mubr.bf16.gmra.mrb[0].mxu0 %v2231
    %v2266 = vpop.f32.mrb[0].mxu0
    %v2267 = vadd.f32 0.0, %v2266
    %v2268 = vpop.f32.mrb[0].mxu0
    %v2269 = vadd.f32 0.0, %v2268
    %v2270 = vpop.f32.mrb[0].mxu0
    %v2271 = vpop.f32.mrb[0].mxu0
    %2272 = vdwg.mxu0
    %2273 = vmatprep.subr.bf16.mxu0 %v1596
    %2274 = vmatpush1.bf16.msra.mxu0 %v1595
    %2275 = vmatprep.subr.bf16.mxu0 %v1600
    %2276 = vmatpush1.bf16.msra.mxu0 %v1599
    %2277 = vmatprep.subr.bf16.mxu0 %v1604
    %2278 = vmatpush1.bf16.msra.mxu0 %v1603
    %2279 = vmatprep.subr.bf16.mxu0 %v1608
    %2280 = vmatpush1.bf16.msra.mxu0 %v1607
    %2281 = vmatprep.subr.bf16.mxu0 %v1612
    %2282 = vmatpush1.bf16.msra.mxu0 %v1611
    %2283 = vmatprep.subr.bf16.mxu0 %v1616
    %2284 = vmatpush1.bf16.msra.mxu0 %v1615
    %2285 = vmatprep.subr.bf16.mxu0 %v1620
    %2286 = vmatpush1.bf16.msra.mxu0 %v1619
    %2287 = vmatprep.subr.bf16.mxu0 %v1624
    %2288 = vmatpush1.bf16.msra.mxu0 %v1623
    %2289 = vmatprep.subr.bf16.mxu0 0
    %2290 = vmatpush1.bf16.msra.mxu0 0
    %2291 = vmatprep.subr.bf16.mxu0 0
    %2292 = vmatpush1.bf16.msra.mxu0 0
    %2293 = vmatprep.subr.bf16.mxu0 0
    %2294 = vmatpush1.bf16.msra.mxu0 0
    %2295 = vmatprep.subr.bf16.mxu0 0
    %2296 = vmatpush1.bf16.msra.mxu0 0
    %2297 = vmatprep.subr.bf16.mxu0 0
    %2298 = vmatpush1.bf16.msra.mxu0 0
    %2299 = vmatprep.subr.bf16.mxu0 0
    %2300 = vmatpush1.bf16.msra.mxu0 0
    %2301 = vmatprep.subr.bf16.mxu0 0
    %2302 = vmatpush1.bf16.msra.mxu0 0
    %2303 = vmatprep.subr.bf16.mxu0 0
    %2304 = vmatpush1.bf16.msra.mxu0 0
    %2305 = vmatprep.mubr.bf16.mxu0 0
    %2306 = vmatmul.mubr.bf16.gmra.mrb[0].mxu0 %v2231
    %v2307 = vpop.f32.mrb[0].mxu0
    %v2308 = vadd.f32 0.0, %v2307
    %v2309 = vpop.f32.mrb[0].mxu0
    %v2310 = vadd.f32 0.0, %v2309
    %v2311 = vpop.f32.mrb[0].mxu0
    %v2312 = vpop.f32.mrb[0].mxu0
    %2313 = vdwg.mxu0
    %v2314 = vadd.f32 %v2227, %v2267
    %v2315 = vadd.f32 %v2228, %v2269
    %v2316 = vadd.f32 %v2229, %v2308
    %v2317 = vadd.f32 %v2230, %v2310
    %v2318 = vxor.u32 %v2314, 2147483648
    %v2319 = vmul.f32 %v2318, 1.442695
    %v2320 = vpow.pop %v2319
    %v2321 = vadd.f32 %v2320, 1.0
    %v2322 = vrcp.pop %v2321
    %v2323 = vmul.f32 1.0, %v2322
    %v2324 = vxor.u32 %v2315, 2147483648
    %v2325 = vmul.f32 %v2324, 1.442695
    %v2326 = vpow.pop %v2325
    %v2327 = vadd.f32 %v2326, 1.0
    %v2328 = vrcp.pop %v2327
    %v2329 = vmul.f32 1.0, %v2328
    %v2330 = vtanh.pop %v2316
    %v2331 = vxor.u32 %v2317, 2147483648
    %v2332 = vmul.f32 %v2331, 1.442695
    %v2333 = vpow.pop %v2332
    %v2334 = vadd.f32 %v2333, 1.0
    %v2335 = vrcp.pop %v2334
    %v2336 = vmul.f32 1.0, %v2335
    %v2337 = vmul.f32 %v2329, %v2224
    %v2338 = vmul.f32 %v2323, %v2330
    %v2339 = vadd.f32 %v2337, %v2338
    %v2340 = vtanh.pop %v2339
    %v2341 = vmul.f32 %v2336, %v2340
    %v2342 = vld [vmem:[#allocation3 + $0xc0] sm:$0xff]
    %v2343 = vld [vmem:[#allocation3 + $0xc8] sm:$0xff]
    %v2344 = vld [vmem:[#allocation3 + $0xd0] sm:$0xff]
    %v2345 = vld [vmem:[#allocation3 + $0xd8] sm:$0xff]
    %v2346 = vpack.c.bf16 %v2341, %v2341
    %2347 = vmatprep.subr.bf16.mxu0 %v1594
    %2348 = vmatpush1.bf16.msra.mxu0 %v1593
    %2349 = vmatprep.subr.bf16.mxu0 %v1598
    %2350 = vmatpush1.bf16.msra.mxu0 %v1597
    %2351 = vmatprep.subr.bf16.mxu0 %v1602
    %2352 = vmatpush1.bf16.msra.mxu0 %v1601
    %2353 = vmatprep.subr.bf16.mxu0 %v1606
    %2354 = vmatpush1.bf16.msra.mxu0 %v1605
    %2355 = vmatprep.subr.bf16.mxu0 %v1610
    %2356 = vmatpush1.bf16.msra.mxu0 %v1609
    %2357 = vmatprep.subr.bf16.mxu0 %v1614
    %2358 = vmatpush1.bf16.msra.mxu0 %v1613
    %2359 = vmatprep.subr.bf16.mxu0 %v1618
    %2360 = vmatpush1.bf16.msra.mxu0 %v1617
    %2361 = vmatprep.subr.bf16.mxu0 %v1622
    %2362 = vmatpush1.bf16.msra.mxu0 %v1621
    %2363 = vmatprep.subr.bf16.mxu0 0
    %2364 = vmatpush1.bf16.msra.mxu0 0
    %2365 = vmatprep.subr.bf16.mxu0 0
    %2366 = vmatpush1.bf16.msra.mxu0 0
    %2367 = vmatprep.subr.bf16.mxu0 0
    %2368 = vmatpush1.bf16.msra.mxu0 0
    %2369 = vmatprep.subr.bf16.mxu0 0
    %2370 = vmatpush1.bf16.msra.mxu0 0
    %2371 = vmatprep.subr.bf16.mxu0 0
    %2372 = vmatpush1.bf16.msra.mxu0 0
    %2373 = vmatprep.subr.bf16.mxu0 0
    %2374 = vmatpush1.bf16.msra.mxu0 0
    %2375 = vmatprep.subr.bf16.mxu0 0
    %2376 = vmatpush1.bf16.msra.mxu0 0
    %2377 = vmatprep.subr.bf16.mxu0 0
    %2378 = vmatpush1.bf16.msra.mxu0 0
    %2379 = vmatprep.mubr.bf16.mxu0 0
    %2380 = vmatmul.mubr.bf16.gmra.mrb[0].mxu0 %v2346
    %v2381 = vpop.f32.mrb[0].mxu0
    %v2382 = vadd.f32 0.0, %v2381
    %v2383 = vpop.f32.mrb[0].mxu0
    %v2384 = vadd.f32 0.0, %v2383
    %v2385 = vpop.f32.mrb[0].mxu0
    %v2386 = vpop.f32.mrb[0].mxu0
    %2387 = vdwg.mxu0
    %2388 = vmatprep.subr.bf16.mxu0 %v1596
    %2389 = vmatpush1.bf16.msra.mxu0 %v1595
    %2390 = vmatprep.subr.bf16.mxu0 %v1600
    %2391 = vmatpush1.bf16.msra.mxu0 %v1599
    %2392 = vmatprep.subr.bf16.mxu0 %v1604
    %2393 = vmatpush1.bf16.msra.mxu0 %v1603
    %2394 = vmatprep.subr.bf16.mxu0 %v1608
    %2395 = vmatpush1.bf16.msra.mxu0 %v1607
    %2396 = vmatprep.subr.bf16.mxu0 %v1612
    %2397 = vmatpush1.bf16.msra.mxu0 %v1611
    %2398 = vmatprep.subr.bf16.mxu0 %v1616
    %2399 = vmatpush1.bf16.msra.mxu0 %v1615
    %2400 = vmatprep.subr.bf16.mxu0 %v1620
    %2401 = vmatpush1.bf16.msra.mxu0 %v1619
    %2402 = vmatprep.subr.bf16.mxu0 %v1624
    %2403 = vmatpush1.bf16.msra.mxu0 %v1623
    %2404 = vmatprep.subr.bf16.mxu0 0
    %2405 = vmatpush1.bf16.msra.mxu0 0
    %2406 = vmatprep.subr.bf16.mxu0 0
    %2407 = vmatpush1.bf16.msra.mxu0 0
    %2408 = vmatprep.subr.bf16.mxu0 0
    %2409 = vmatpush1.bf16.msra.mxu0 0
    %2410 = vmatprep.subr.bf16.mxu0 0
    %2411 = vmatpush1.bf16.msra.mxu0 0
    %2412 = vmatprep.subr.bf16.mxu0 0
    %2413 = vmatpush1.bf16.msra.mxu0 0
    %2414 = vmatprep.subr.bf16.mxu0 0
    %2415 = vmatpush1.bf16.msra.mxu0 0
    %2416 = vmatprep.subr.bf16.mxu0 0
    %2417 = vmatpush1.bf16.msra.mxu0 0
    %2418 = vmatprep.subr.bf16.mxu0 0
    %2419 = vmatpush1.bf16.msra.mxu0 0
    %2420 = vmatprep.mubr.bf16.mxu0 0
    %2421 = vmatmul.mubr.bf16.gmra.mrb[0].mxu0 %v2346
    %v2422 = vpop.f32.mrb[0].mxu0
    %v2423 = vadd.f32 0.0, %v2422
    %v2424 = vpop.f32.mrb[0].mxu0
    %v2425 = vadd.f32 0.0, %v2424
    %v2426 = vpop.f32.mrb[0].mxu0
    %v2427 = vpop.f32.mrb[0].mxu0
    %2428 = vdwg.mxu0
    %v2429 = vadd.f32 %v2342, %v2382
    %v2430 = vadd.f32 %v2343, %v2384
    %v2431 = vadd.f32 %v2344, %v2423
    %v2432 = vadd.f32 %v2345, %v2425
    %v2433 = vxor.u32 %v2429, 2147483648
    %v2434 = vmul.f32 %v2433, 1.442695
    %v2435 = vpow.pop %v2434
    %v2436 = vadd.f32 %v2435, 1.0
    %v2437 = vrcp.pop %v2436
    %v2438 = vmul.f32 1.0, %v2437
    %v2439 = vxor.u32 %v2430, 2147483648
    %v2440 = vmul.f32 %v2439, 1.442695
    %v2441 = vpow.pop %v2440
    %v2442 = vadd.f32 %v2441, 1.0
    %v2443 = vrcp.pop %v2442
    %v2444 = vmul.f32 1.0, %v2443
    %v2445 = vtanh.pop %v2431
    %v2446 = vxor.u32 %v2432, 2147483648
    %v2447 = vmul.f32 %v2446, 1.442695
    %v2448 = vpow.pop %v2447
    %v2449 = vadd.f32 %v2448, 1.0
    %v2450 = vrcp.pop %v2449
    %v2451 = vmul.f32 1.0, %v2450
    %v2452 = vmul.f32 %v2444, %v2339
    %v2453 = vmul.f32 %v2438, %v2445
    %v2454 = vadd.f32 %v2452, %v2453
    %v2455 = vtanh.pop %v2454
    %v2456 = vmul.f32 %v2451, %v2455
    %v2457 = vld [vmem:[#allocation3 + $0xe0] sm:$0xff]
    %v2458 = vld [vmem:[#allocation3 + $0xe8] sm:$0xff]
    %v2459 = vld [vmem:[#allocation3 + $0xf0] sm:$0xff]
    %v2460 = vld [vmem:[#allocation3 + $0xf8] sm:$0xff]
    %v2461 = vpack.c.bf16 %v2456, %v2456
    %2462 = vmatprep.subr.bf16.mxu0 %v1594
    %2463 = vmatpush1.bf16.msra.mxu0 %v1593
    %2464 = vmatprep.subr.bf16.mxu0 %v1598
    %2465 = vmatpush1.bf16.msra.mxu0 %v1597
    %2466 = vmatprep.subr.bf16.mxu0 %v1602
    %2467 = vmatpush1.bf16.msra.mxu0 %v1601
    %2468 = vmatprep.subr.bf16.mxu0 %v1606
    %2469 = vmatpush1.bf16.msra.mxu0 %v1605
    %2470 = vmatprep.subr.bf16.mxu0 %v1610
    %2471 = vmatpush1.bf16.msra.mxu0 %v1609
    %2472 = vmatprep.subr.bf16.mxu0 %v1614
    %2473 = vmatpush1.bf16.msra.mxu0 %v1613
    %2474 = vmatprep.subr.bf16.mxu0 %v1618
    %2475 = vmatpush1.bf16.msra.mxu0 %v1617
    %2476 = vmatprep.subr.bf16.mxu0 %v1622
    %2477 = vmatpush1.bf16.msra.mxu0 %v1621
    %2478 = vmatprep.subr.bf16.mxu0 0
    %2479 = vmatpush1.bf16.msra.mxu0 0
    %2480 = vmatprep.subr.bf16.mxu0 0
    %2481 = vmatpush1.bf16.msra.mxu0 0
    %2482 = vmatprep.subr.bf16.mxu0 0
    %2483 = vmatpush1.bf16.msra.mxu0 0
    %2484 = vmatprep.subr.bf16.mxu0 0
    %2485 = vmatpush1.bf16.msra.mxu0 0
    %2486 = vmatprep.subr.bf16.mxu0 0
    %2487 = vmatpush1.bf16.msra.mxu0 0
    %2488 = vmatprep.subr.bf16.mxu0 0
    %2489 = vmatpush1.bf16.msra.mxu0 0
    %2490 = vmatprep.subr.bf16.mxu0 0
    %2491 = vmatpush1.bf16.msra.mxu0 0
    %2492 = vmatprep.subr.bf16.mxu0 0
    %2493 = vmatpush1.bf16.msra.mxu0 0
    %2494 = vmatprep.mubr.bf16.mxu0 0
    %2495 = vmatmul.mubr.bf16.gmra.mrb[0].mxu0 %v2461
    %v2496 = vpop.f32.mrb[0].mxu0
    %v2497 = vadd.f32 0.0, %v2496
    %v2498 = vpop.f32.mrb[0].mxu0
    %v2499 = vadd.f32 0.0, %v2498
    %v2500 = vpop.f32.mrb[0].mxu0
    %v2501 = vpop.f32.mrb[0].mxu0
    %2502 = vdwg.mxu0
    %2503 = vmatprep.subr.bf16.mxu0 %v1596
    %2504 = vmatpush1.bf16.msra.mxu0 %v1595
    %2505 = vmatprep.subr.bf16.mxu0 %v1600
    %2506 = vmatpush1.bf16.msra.mxu0 %v1599
    %2507 = vmatprep.subr.bf16.mxu0 %v1604
    %2508 = vmatpush1.bf16.msra.mxu0 %v1603
    %2509 = vmatprep.subr.bf16.mxu0 %v1608
    %2510 = vmatpush1.bf16.msra.mxu0 %v1607
    %2511 = vmatprep.subr.bf16.mxu0 %v1612
    %2512 = vmatpush1.bf16.msra.mxu0 %v1611
    %2513 = vmatprep.subr.bf16.mxu0 %v1616
    %2514 = vmatpush1.bf16.msra.mxu0 %v1615
    %2515 = vmatprep.subr.bf16.mxu0 %v1620
    %2516 = vmatpush1.bf16.msra.mxu0 %v1619
    %2517 = vmatprep.subr.bf16.mxu0 %v1624
    %2518 = vmatpush1.bf16.msra.mxu0 %v1623
    %2519 = vmatprep.subr.bf16.mxu0 0
    %2520 = vmatpush1.bf16.msra.mxu0 0
    %2521 = vmatprep.subr.bf16.mxu0 0
    %2522 = vmatpush1.bf16.msra.mxu0 0
    %2523 = vmatprep.subr.bf16.mxu0 0
    %2524 = vmatpush1.bf16.msra.mxu0 0
    %2525 = vmatprep.subr.bf16.mxu0 0
    %2526 = vmatpush1.bf16.msra.mxu0 0
    %2527 = vmatprep.subr.bf16.mxu0 0
    %2528 = vmatpush1.bf16.msra.mxu0 0
    %2529 = vmatprep.subr.bf16.mxu0 0
    %2530 = vmatpush1.bf16.msra.mxu0 0
    %2531 = vmatprep.subr.bf16.mxu0 0
    %2532 = vmatpush1.bf16.msra.mxu0 0
    %2533 = vmatprep.subr.bf16.mxu0 0
    %2534 = vmatpush1.bf16.msra.mxu0 0
    %2535 = vmatprep.mubr.bf16.mxu0 0
    %2536 = vmatmul.mubr.bf16.gmra.mrb[0].mxu0 %v2461
    %v2537 = vpop.f32.mrb[0].mxu0
    %v2538 = vadd.f32 0.0, %v2537
    %v2539 = vpop.f32.mrb[0].mxu0
    %v2540 = vadd.f32 0.0, %v2539
    %v2541 = vpop.f32.mrb[0].mxu0
    %v2542 = vpop.f32.mrb[0].mxu0
    %2543 = vdwg.mxu0
    %v2544 = vadd.f32 %v2457, %v2497
    %v2545 = vadd.f32 %v2458, %v2499
    %v2546 = vadd.f32 %v2459, %v2538
    %v2547 = vadd.f32 %v2460, %v2540
    %v2548 = vxor.u32 %v2544, 2147483648
    %v2549 = vmul.f32 %v2548, 1.442695
    %v2550 = vpow.pop %v2549
    %v2551 = vadd.f32 %v2550, 1.0
    %v2552 = vrcp.pop %v2551
    %v2553 = vmul.f32 1.0, %v2552
    %v2554 = vxor.u32 %v2545, 2147483648
    %v2555 = vmul.f32 %v2554, 1.442695
    %v2556 = vpow.pop %v2555
    %v2557 = vadd.f32 %v2556, 1.0
    %v2558 = vrcp.pop %v2557
    %v2559 = vmul.f32 1.0, %v2558
    %v2560 = vtanh.pop %v2546
    %v2561 = vxor.u32 %v2547, 2147483648
    %v2562 = vmul.f32 %v2561, 1.442695
    %v2563 = vpow.pop %v2562
    %v2564 = vadd.f32 %v2563, 1.0
    %v2565 = vrcp.pop %v2564
    %v2566 = vmul.f32 1.0, %v2565
    %v2567 = vmul.f32 %v2559, %v2454
    %v2568 = vmul.f32 %v2553, %v2560
    %v2569 = vadd.f32 %v2567, %v2568
    %v2570 = vtanh.pop %v2569
    %v2571 = vmul.f32 %v2566, %v2570
    %v2572 = vpack.c.bf16 %v2571, %v2571
    %v2573 = vld [vmem:[%s8] sm:$0xf]
    %v2574 = vld [vmem:[%s8 + $0x4] sm:$0xf]
    %v2575 = vld [vmem:[%s8 + $0x8] sm:$0xf]
    %v2576 = vld [vmem:[%s8 + $0xc] sm:$0xf]
    %v2577 = vld [vmem:[%s8 + $0x10] sm:$0xf]
    %v2578 = vld [vmem:[%s8 + $0x14] sm:$0xf]
    %v2579 = vld [vmem:[%s8 + $0x18] sm:$0xf]
    %v2580 = vld [vmem:[%s8 + $0x1c] sm:$0xf]
    %v2581 = vld [vmem:[%s8 + $0x20] sm:$0xf]
    %v2582 = vld [vmem:[%s8 + $0x24] sm:$0xf]
    %v2583 = vld [vmem:[%s8 + $0x28] sm:$0xf]
    %v2584 = vld [vmem:[%s8 + $0x2c] sm:$0xf]
    %v2585 = vld [vmem:[%s8 + $0x30] sm:$0xf]
    %v2586 = vld [vmem:[%s8 + $0x34] sm:$0xf]
    %v2587 = vld [vmem:[%s8 + $0x38] sm:$0xf]
    %v2588 = vld [vmem:[%s8 + $0x3c] sm:$0xf]
    %v2589 = vld [vmem:[%s9] sm:$0x1]
    %v2591 = vlaneseq
    %v2592 = vshrl.u32 %v2591, 7
    %v2593 = vsub.s32 0, %v2592
    %v2594 = vrot.slane %v2589, %v2593
    %v2612 = vunpack.c.l.b16 %v2573
    %v2613 = vunpack.c.l.b16 %v2574
    %v2614 = vunpack.c.l.b16 %v2575
    %v2615 = vunpack.c.l.b16 %v2576
    %v2616 = vunpack.c.l.b16 %v2577
    %v2617 = vunpack.c.l.b16 %v2578
    %v2618 = vunpack.c.l.b16 %v2579
    %v2619 = vunpack.c.l.b16 %v2580
    %v2620 = vunpack.c.l.b16 %v2581
    %v2621 = vunpack.c.l.b16 %v2582
    %v2622 = vunpack.c.l.b16 %v2583
    %v2623 = vunpack.c.l.b16 %v2584
    %v2624 = vunpack.c.l.b16 %v2585
    %v2625 = vunpack.c.l.b16 %v2586
    %v2626 = vunpack.c.l.b16 %v2587
    %v2627 = vunpack.c.l.b16 %v2588
    %v2628 = vpack.c.b16 %v2613, %v2612
    %v2629 = vpack.c.b16 %v2615, %v2614
    %v2630 = vpack.c.b16 %v2617, %v2616
    %v2631 = vpack.c.b16 %v2619, %v2618
    %v2632 = vpack.c.b16 %v2621, %v2620
    %v2633 = vpack.c.b16 %v2623, %v2622
    %v2634 = vpack.c.b16 %v2625, %v2624
    %v2635 = vpack.c.b16 %v2627, %v2626
    %2644 = vmatprep.subr.bf16.mxu0 0
    %2645 = vmatpush1.bf16.msra.mxu0 %v2628
    %2646 = vmatprep.subr.bf16.mxu0 0
    %2647 = vmatpush1.bf16.msra.mxu0 %v2629
    %2648 = vmatprep.subr.bf16.mxu0 0
    %2649 = vmatpush1.bf16.msra.mxu0 %v2630
    %2650 = vmatprep.subr.bf16.mxu0 0
    %2651 = vmatpush1.bf16.msra.mxu0 %v2631
    %2652 = vmatprep.subr.bf16.mxu0 0
    %2653 = vmatpush1.bf16.msra.mxu0 %v2632
    %2654 = vmatprep.subr.bf16.mxu0 0
    %2655 = vmatpush1.bf16.msra.mxu0 %v2633
    %2656 = vmatprep.subr.bf16.mxu0 0
    %2657 = vmatpush1.bf16.msra.mxu0 %v2634
    %2658 = vmatprep.subr.bf16.mxu0 0
    %2659 = vmatpush1.bf16.msra.mxu0 %v2635
    %2660 = vmatprep.subr.bf16.mxu0 0
    %2661 = vmatpush1.bf16.msra.mxu0 0
    %2662 = vmatprep.subr.bf16.mxu0 0
    %2663 = vmatpush1.bf16.msra.mxu0 0
    %2664 = vmatprep.subr.bf16.mxu0 0
    %2665 = vmatpush1.bf16.msra.mxu0 0
    %2666 = vmatprep.subr.bf16.mxu0 0
    %2667 = vmatpush1.bf16.msra.mxu0 0
    %2668 = vmatprep.subr.bf16.mxu0 0
    %2669 = vmatpush1.bf16.msra.mxu0 0
    %2670 = vmatprep.subr.bf16.mxu0 0
    %2671 = vmatpush1.bf16.msra.mxu0 0
    %2672 = vmatprep.subr.bf16.mxu0 0
    %2673 = vmatpush1.bf16.msra.mxu0 0
    %2674 = vmatprep.subr.bf16.mxu0 0
    %2675 = vmatpush1.bf16.msra.mxu0 0
    %2676 = vmatprep.mubr.bf16.mxu0 0
    %2677 = vmatmul.mubr.bf16.gmra.mrb[0].mxu0 %v2572
    %v2678 = vpop.f32.mrb[0].mxu0
    %v2679 = vadd.f32 %v2594, %v2678
    %v2680 = vpop.f32.mrb[0].mxu0
    %v2681 = vpop.f32.mrb[0].mxu0
    %v2682 = vpop.f32.mrb[0].mxu0
    %2683 = vdwg.mxu0
    %2684 = vmax.xlane.f32.xlu0 %v2679
    %v2685 = vpop.xlane.xlu0 %2684
    %v2686 = vsub.f32 %v2679, %v2685
    %v2687 = vmul.f32 %v2686, 1.442695
    %v2688 = vpow.pop %v2687
    %2689 = vadd.xlane.f32.xlu0 %v2688
    %v2690 = vpop.xlane.xlu0 %2689
    %v2691 = vlog2.pop %v2690
    %v2692 = vmul.f32 %v2691, 0.6931472
    %v2693 = vsub.f32 %v2686, %v2692
    %2694 = vst [vmem:[#allocation12] sm:$0xff] %v2693
    // Predicated region
    $region58: #{conditional_lstm_forward.1} parent=1 // pred_check
      _
    $region59: #{conditional_lstm_forward.1} parent=1 // pred_check_branch
      %2696 = sbr.rel (0) target = $region61
    $region60: #{conditional_lstm_forward.1} parent=1 // pred_region
      %s2698 = ssub.s32 128, 128
      %2699 = vsyncadd [#allocation6], %s2698
      %s2701 = sshll.u32 [#allocation12], 4
      %s2702 = int_to_ptr.vmem [resolvable:$true] %s2701
      %2704 = dma.vmem_to_hbm [thread:$0]  %s2702, 128, %s10, [#allocation6]
    $region61: #{conditional_lstm_forward.1} parent=1 // pred_fallthru
      _
    // Predicated region
    $region62: #{conditional_lstm_forward.1} parent=1 // pred_check
      _
    $region63: #{conditional_lstm_forward.1} parent=1 // pred_check_branch
      %2706 = sbr.rel (0) target = $region65
    $region64: #{conditional_lstm_forward.1} parent=1 // pred_region
      %2707 = dma.done [#allocation6], 128
    $region65: #{conditional_lstm_forward.1} parent=1 // pred_fallthru
      _
    %2708 = vsyncpa [#allocation5], 1
    %2709 = vsyncpa [#allocation8], 1
    %2710 = vsyncpa [#allocation11], 1
    %2711 = vsyncpa [#allocation6], 1

</llo_original>
